<compile_context>
chip_gen: v6e
topology: v6e:2x2x1
jax: 0.10.0
libtpu: 0.0.40
codegen_flags: <defaults>
</compile_context>

<pallas_src>
import jax
import jax.numpy as jnp
from jax.experimental import pallas as pl
from jax.experimental.pallas import tpu as pltpu

NEG_SLOPE = (1.0 / 8.0 + 1.0 / 3.0) / 2.0   # F.rrelu(training=False) slope
BN_EPS = 1e-5


# ----------------------------------------------------------------------------
# Fused kernel
# ----------------------------------------------------------------------------
def _res_up_kernel(x_ref, a1_ref, aup_ref, g1w_ref, m2_ref, m3_ref,
                   b1_ref, b2_ref, b3_ref,
                   gam1_ref, bet1_ref, gam2_ref, bet2_ref,
                   o_ref):
    f32 = jnp.float32

    def conv(inp, a_ref, w_ref, b_lane):
        # 3x3 conv (optionally with fused nearest-upsample + zero padding),
        # expressed as   bias + sum_dy (A[dy] @ inp) @ W[dy]   on the MXU.
        out = b_lane
        for dy in range(3):
            rows = jnp.dot(a_ref[dy], inp, preferred_element_type=f32)
            out = out + jnp.dot(rows, w_ref[dy], preferred_element_type=f32)
        return out

    def chan_selectors(n_lanes, n_ch):
        # S[l, c] = 1 iff lane l (layout w*C + c) holds channel c.
        lane = jax.lax.broadcasted_iota(jnp.int32, (n_lanes, n_ch), 0)
        ch = jax.lax.broadcasted_iota(jnp.int32, (n_lanes, n_ch), 1)
        s = (lane % n_ch == ch).astype(f32)                   # (L, C)
        lane_t = jax.lax.broadcasted_iota(jnp.int32, (n_ch, n_lanes), 1)
        ch_t = jax.lax.broadcasted_iota(jnp.int32, (n_ch, n_lanes), 0)
        st = (lane_t % n_ch == ch_t).astype(f32)              # (C, L)
        return s, st

    def batchnorm(h, gamma, beta):
        # Training-mode BN: per-channel stats over (N, H, W), biased variance.
        rows, n_lanes = h.shape
        n_ch = gamma.shape[-1]
        count = rows * (n_lanes // n_ch)
        s, st = chan_selectors(n_lanes, n_ch)
        col_sum = jnp.sum(h, axis=0, keepdims=True)                     # (1, L)
        mean = jnp.dot(col_sum, s, preferred_element_type=f32) / count  # (1, C)
        mean_lane = jnp.dot(mean, st, preferred_element_type=f32)       # (1, L)
        centered = h - mean_lane
        sq_sum = jnp.sum(centered * centered, axis=0, keepdims=True)    # (1, L)
        var = jnp.dot(sq_sum, s, preferred_element_type=f32) / count    # (1, C)
        scale = gamma * jax.lax.rsqrt(var + BN_EPS)                     # (1, C)
        shift = beta - mean * scale                                     # (1, C)
        scale_lane = jnp.dot(scale, st, preferred_element_type=f32)     # (1, L)
        shift_lane = jnp.dot(shift, st, preferred_element_type=f32)     # (1, L)
        return h * scale_lane + shift_lane

    def rrelu(v):
        return jnp.where(v >= 0, v, NEG_SLOPE * v)

    xr = x_ref[...]                                          # (N*H, W*Cin)

    # Main branch: conv1 -> BN1 -> rrelu -> (upsample + conv2) -> BN2
    h1 = conv(xr, a1_ref, g1w_ref, b1_ref[...])              # (N*H,  W*cm)
    h1 = rrelu(batchnorm(h1, gam1_ref[...], bet1_ref[...]))
    h2 = conv(h1, aup_ref, m2_ref, b2_ref[...])              # (N*Hu, Wu*Cout)
    h2 = batchnorm(h2, gam2_ref[...], bet2_ref[...])

    # Skip branch: (upsample + conv3)(x)
    skip = conv(xr, aup_ref, m3_ref, b3_ref[...])            # (N*Hu, Wu*Cout)

    o_ref[...] = rrelu(h2 + skip)                            # lane-dense store


# ----------------------------------------------------------------------------
# Wrapper: build selector / Toeplitz matrices once, one pallas_call
# ----------------------------------------------------------------------------
def _row_selectors(N, H, Hu, scale):
    """A1[dy]: (N*H, N*H) per-image row shift (zero outside the image).
       Aup[dy]: (N*Hu, N*H) nearest row-upsample fused with the dy shift."""
    f32 = jnp.float32
    eye_n = jnp.eye(N, dtype=f32)

    def block(rows_out, dy, upsample):
        r = jnp.arange(rows_out)[:, None]
        src = r + dy - 1
        valid = (src >= 0) & (src < rows_out)
        src_row = src // scale if upsample else src
        s = jnp.arange(H)[None, :]
        return (valid & (s == src_row)).astype(f32)

    a1 = jnp.stack([jnp.kron(eye_n, block(H, dy, False)) for dy in range(3)])
    aup = jnp.stack([jnp.kron(eye_n, block(Hu, dy, True)) for dy in range(3)])
    return a1, aup


def _w_toeplitz(w_hwio, w_in, w_out, upsample, scale):
    """Per-dy banded matrices folding the dx taps, SAME zero padding and
    (optionally) nearest W-upsampling.
    w_hwio: (3, 3, C_in, C_out)  ->  (3, w_in*C_in, w_out*C_out)."""
    f32 = jnp.float32
    c_in, c_out = w_hwio.shape[2], w_hwio.shape[3]
    x = jnp.arange(w_out)[None, :]
    dx = jnp.arange(3)[:, None]
    src = x + dx - 1                                    # (3, w_out)
    hi = w_out if upsample else w_in
    valid = (src >= 0) & (src < hi)
    src_w = src // scale if upsample else src
    wi = jnp.arange(w_in)[:, None, None]
    sel = (valid[None] & (src_w[None] == wi)).astype(f32)     # (w_in, 3, w_out)
    m = jnp.einsum('wdx,ydio->ywixo', sel, w_hwio.astype(f32))
    return m.reshape(3, w_in * c_in, w_out * c_out)


def res_up_forward(x_nchw, params, scale=2):
    N, Cin, H, W = x_nchw.shape
    cm = params['w1'].shape[-1]
    Cout = params['w2'].shape[-1]
    Hu, Wu = H * scale, W * scale

    # NCHW -> lane-dense "row" layout (N*H, W*Cin)
    x_rows = jnp.transpose(x_nchw, (0, 2, 3, 1)).reshape(N * H, W * Cin)

    a1, aup = _row_selectors(N, H, Hu, scale)
    g1w = _w_toeplitz(params['w1'], W, W, False, scale)    # (3, W*Cin, W*cm)
    m2 = _w_toeplitz(params['w2'], W, Wu, True, scale)     # (3, W*cm,  Wu*Cout)
    m3 = _w_toeplitz(params['w3'], W, Wu, True, scale)     # (3, W*Cin, Wu*Cout)

    b1_lane = jnp.tile(params['b1'], W).reshape(1, W * cm)
    b2_lane = jnp.tile(params['b2'], Wu).reshape(1, Wu * Cout)
    b3_lane = jnp.tile(params['b3'], Wu).reshape(1, Wu * Cout)

    gam1 = params['g1'].reshape(1, cm)
    bet1 = params['be1'].reshape(1, cm)
    gam2 = params['g2'].reshape(1, Cout)
    bet2 = params['be2'].reshape(1, Cout)

    vmem = pl.BlockSpec(memory_space=pltpu.MemorySpace.VMEM)
    out_rows = pl.pallas_call(
        _res_up_kernel,
        out_shape=jax.ShapeDtypeStruct((N * Hu, Wu * Cout), jnp.float32),
        in_specs=[vmem] * 13,
        out_specs=vmem,
    )(x_rows, a1, aup, g1w, m2, m3, b1_lane, b2_lane, b3_lane,
      gam1, bet1, gam2, bet2)

    out = out_rows.reshape(N, Hu, Wu, Cout)
    return jnp.transpose(out, (0, 3, 1, 2))                  # NHWC -> NCHW


# ----------------------------------------------------------------------------
# Pure-JAX reference (for correctness check)
# ----------------------------------------------------------------------------
def _ref_forward(x_nchw, p, scale=2):
    x = jnp.transpose(x_nchw, (0, 2, 3, 1))

    def conv(z, w, b):
        y = jax.lax.conv_general_dilated(
            z, w, window_strides=(1, 1), padding="SAME",
            dimension_numbers=("NHWC", "HWIO", "NHWC"))
        return y + b.reshape(1, 1, 1, -1)

    def bn(z, g, b):
        mean = jnp.mean(z, axis=(0, 1, 2), keepdims=True)
        var = jnp.mean((z - mean) ** 2, axis=(0, 1, 2), keepdims=True)
        return (z - mean) * jax.lax.rsqrt(var + BN_EPS) * g + b

    def rrelu(z):
        return jnp.where(z >= 0, z, NEG_SLOPE * z)

    def up(z):
        return jnp.repeat(jnp.repeat(z, scale, axis=1), scale, axis=2)

    skip = conv(up(x), p["w3"], p["b3"])
    h = rrelu(bn(conv(x, p["w1"], p["b1"]), p["g1"], p["be1"]))
    h = up(h)
    h = bn(conv(h, p["w2"], p["b2"]), p["g2"], p["be2"])
    out = rrelu(h + skip)
    return jnp.transpose(out, (0, 3, 1, 2))


# ----------------------------------------------------------------------------
# Deterministic param init (shapes from Res_up.__init__)
# ----------------------------------------------------------------------------
def make_params(key, channel_in, channel_out):
    cm = channel_out // 2
    ks = jax.random.split(key, 10)
    return {
        # conv weights stored HWIO: (3, 3, Cin, Cout)
        "w1": 0.1 * jax.random.normal(ks[0], (3, 3, channel_in, cm), jnp.float32),
        "b1": 0.1 * jax.random.normal(ks[1], (cm,), jnp.float32),
        "w2": 0.1 * jax.random.normal(ks[2], (3, 3, cm, channel_out), jnp.float32),
        "b2": 0.1 * jax.random.normal(ks[3], (channel_out,), jnp.float32),
        "w3": 0.1 * jax.random.normal(ks[4], (3, 3, channel_in, channel_out), jnp.float32),
        "b3": 0.1 * jax.random.normal(ks[5], (channel_out,), jnp.float32),
        # BatchNorm affine params (non-trivial for a stronger test)
        "g1": 1.0 + 0.1 * jax.random.normal(ks[6], (cm,), jnp.float32),
        "be1": 0.1 * jax.random.normal(ks[7], (cm,), jnp.float32),
        "g2": 1.0 + 0.1 * jax.random.normal(ks[8], (channel_out,), jnp.float32),
        "be2": 0.1 * jax.random.normal(ks[9], (channel_out,), jnp.float32),
    }


if __name__ == "__main__":
    key = jax.random.PRNGKey(0)
    k_x, k_p = jax.random.split(key)

    N, C_IN, H, W = 2, 4, 16, 16
    C_OUT, SCALE = 8, 2

    x = jax.random.normal(k_x, (N, C_IN, H, W), jnp.float32)   # NCHW like PyTorch
    params = make_params(k_p, C_IN, C_OUT)

    fwd = jax.jit(lambda xx: res_up_forward(xx, params, scale=SCALE))
    out = jax.block_until_ready(fwd(x))

    assert out.shape == (N, C_OUT, H * SCALE, W * SCALE), out.shape

    ref = jax.block_until_ready(_ref_forward(x, params, scale=SCALE))
    err = float(jnp.max(jnp.abs(out - ref)))
    assert jnp.allclose(out, ref, atol=1e-4, rtol=1e-4), err

    print("KERNEL_OK")
</pallas_src>

<mosaic_0001>
module attributes {stable_mosaic.version = 11 : i64} {
  func.func @_res_up_kernel(%arg0: memref<32x64xf32, #tpu.memory_space<vmem>>, %arg1: memref<3x32x32xf32, #tpu.memory_space<vmem>>, %arg2: memref<3x64x32xf32, #tpu.memory_space<vmem>>, %arg3: memref<3x64x64xf32, #tpu.memory_space<vmem>>, %arg4: memref<3x64x256xf32, #tpu.memory_space<vmem>>, %arg5: memref<3x64x256xf32, #tpu.memory_space<vmem>>, %arg6: memref<1x64xf32, #tpu.memory_space<vmem>>, %arg7: memref<1x256xf32, #tpu.memory_space<vmem>>, %arg8: memref<1x256xf32, #tpu.memory_space<vmem>>, %arg9: memref<1x4xf32, #tpu.memory_space<vmem>>, %arg10: memref<1x4xf32, #tpu.memory_space<vmem>>, %arg11: memref<1x8xf32, #tpu.memory_space<vmem>>, %arg12: memref<1x8xf32, #tpu.memory_space<vmem>>, %arg13: memref<64x256xf32, #tpu.memory_space<vmem>>) attributes {dimension_semantics = [], scalar_prefetch = 0 : i64, scratch_operands = 0 : i64, tpu.core_type = #tpu.core_type<tc>} {
    %c0 = arith.constant 0 : index
    %c0_0 = arith.constant 0 : index
    %0 = vector.load %arg0[%c0, %c0_0] : memref<32x64xf32, #tpu.memory_space<vmem>>, vector<32x64xf32>
    %c0_1 = arith.constant 0 : index
    %c0_2 = arith.constant 0 : index
    %1 = vector.load %arg6[%c0_1, %c0_2] : memref<1x64xf32, #tpu.memory_space<vmem>>, vector<1x64xf32>
    %c0_3 = arith.constant 0 : index
    %c0_4 = arith.constant 0 : index
    %c0_5 = arith.constant 0 : index
    %2 = vector.load %arg1[%c0_3, %c0_4, %c0_5] : memref<3x32x32xf32, #tpu.memory_space<vmem>>, vector<1x32x32xf32>
    %3 = vector.shape_cast %2 : vector<1x32x32xf32> to vector<32x32xf32>
    %cst = arith.constant dense<0.000000e+00> : vector<32x64xf32>
    %4 = tpu.matmul %3, %0, %cst {dimension_numbers = #tpu.dot_dimension_numbers<[1], [0], [0], [1], [0, 0, 1, 1], [], []>} : vector<32x32xf32>, vector<32x64xf32>, vector<32x64xf32> -> vector<32x64xf32>
    %c0_6 = arith.constant 0 : index
    %c0_7 = arith.constant 0 : index
    %c0_8 = arith.constant 0 : index
    %5 = vector.load %arg3[%c0_6, %c0_7, %c0_8] : memref<3x64x64xf32, #tpu.memory_space<vmem>>, vector<1x64x64xf32>
    %6 = vector.shape_cast %5 : vector<1x64x64xf32> to vector<64x64xf32>
    %cst_9 = arith.constant dense<0.000000e+00> : vector<32x64xf32>
    %7 = tpu.matmul %4, %6, %cst_9 {dimension_numbers = #tpu.dot_dimension_numbers<[1], [0], [0], [1], [0, 0, 1, 1], [], []>} : vector<32x64xf32>, vector<64x64xf32>, vector<32x64xf32> -> vector<32x64xf32>
    %8 = vector.broadcast %1 : vector<1x64xf32> to vector<32x64xf32>
    %9 = arith.addf %8, %7 : vector<32x64xf32>
    %c1 = arith.constant 1 : index
    %c0_10 = arith.constant 0 : index
    %c0_11 = arith.constant 0 : index
    %10 = vector.load %arg1[%c1, %c0_10, %c0_11] : memref<3x32x32xf32, #tpu.memory_space<vmem>>, vector<1x32x32xf32>
    %11 = vector.shape_cast %10 : vector<1x32x32xf32> to vector<32x32xf32>
    %cst_12 = arith.constant dense<0.000000e+00> : vector<32x64xf32>
    %12 = tpu.matmul %11, %0, %cst_12 {dimension_numbers = #tpu.dot_dimension_numbers<[1], [0], [0], [1], [0, 0, 1, 1], [], []>} : vector<32x32xf32>, vector<32x64xf32>, vector<32x64xf32> -> vector<32x64xf32>
    %c1_13 = arith.constant 1 : index
    %c0_14 = arith.constant 0 : index
    %c0_15 = arith.constant 0 : index
    %13 = vector.load %arg3[%c1_13, %c0_14, %c0_15] : memref<3x64x64xf32, #tpu.memory_space<vmem>>, vector<1x64x64xf32>
    %14 = vector.shape_cast %13 : vector<1x64x64xf32> to vector<64x64xf32>
    %cst_16 = arith.constant dense<0.000000e+00> : vector<32x64xf32>
    %15 = tpu.matmul %12, %14, %cst_16 {dimension_numbers = #tpu.dot_dimension_numbers<[1], [0], [0], [1], [0, 0, 1, 1], [], []>} : vector<32x64xf32>, vector<64x64xf32>, vector<32x64xf32> -> vector<32x64xf32>
    %16 = arith.addf %9, %15 : vector<32x64xf32>
    %c2 = arith.constant 2 : index
    %c0_17 = arith.constant 0 : index
    %c0_18 = arith.constant 0 : index
    %17 = vector.load %arg1[%c2, %c0_17, %c0_18] : memref<3x32x32xf32, #tpu.memory_space<vmem>>, vector<1x32x32xf32>
    %18 = vector.shape_cast %17 : vector<1x32x32xf32> to vector<32x32xf32>
    %cst_19 = arith.constant dense<0.000000e+00> : vector<32x64xf32>
    %19 = tpu.matmul %18, %0, %cst_19 {dimension_numbers = #tpu.dot_dimension_numbers<[1], [0], [0], [1], [0, 0, 1, 1], [], []>} : vector<32x32xf32>, vector<32x64xf32>, vector<32x64xf32> -> vector<32x64xf32>
    %c2_20 = arith.constant 2 : index
    %c0_21 = arith.constant 0 : index
    %c0_22 = arith.constant 0 : index
    %20 = vector.load %arg3[%c2_20, %c0_21, %c0_22] : memref<3x64x64xf32, #tpu.memory_space<vmem>>, vector<1x64x64xf32>
    %21 = vector.shape_cast %20 : vector<1x64x64xf32> to vector<64x64xf32>
    %cst_23 = arith.constant dense<0.000000e+00> : vector<32x64xf32>
    %22 = tpu.matmul %19, %21, %cst_23 {dimension_numbers = #tpu.dot_dimension_numbers<[1], [0], [0], [1], [0, 0, 1, 1], [], []>} : vector<32x64xf32>, vector<64x64xf32>, vector<32x64xf32> -> vector<32x64xf32>
    %23 = arith.addf %16, %22 : vector<32x64xf32>
    %c0_24 = arith.constant 0 : index
    %c0_25 = arith.constant 0 : index
    %24 = vector.load %arg9[%c0_24, %c0_25] : memref<1x4xf32, #tpu.memory_space<vmem>>, vector<1x4xf32>
    %c0_26 = arith.constant 0 : index
    %c0_27 = arith.constant 0 : index
    %25 = vector.load %arg10[%c0_26, %c0_27] : memref<1x4xf32, #tpu.memory_space<vmem>>, vector<1x4xf32>
    %26 = tpu.iota {dimensions = array<i32: 0>} : vector<64x4xi32>
    %27 = tpu.iota {dimensions = array<i32: 1>} : vector<64x4xi32>
    %c4_i32 = arith.constant 4 : i32
    %c0_i32 = arith.constant 0 : i32
    %28 = arith.cmpi eq, %c4_i32, %c0_i32 : i32
    %c1_i32 = arith.constant 1 : i32
    %29 = arith.select %28, %c1_i32, %c4_i32 : i32
    %30 = vector.broadcast %29 : i32 to vector<64x4xi32>
    %31 = arith.remsi %26, %30 : vector<64x4xi32>
    %c0_i32_28 = arith.constant 0 : i32
    %32 = vector.broadcast %c0_i32_28 : i32 to vector<64x4xi32>
    %33 = arith.cmpi ne, %31, %32 : vector<64x4xi32>
    %c0_i32_29 = arith.constant 0 : i32
    %34 = vector.broadcast %c0_i32_29 : i32 to vector<64x4xi32>
    %35 = arith.cmpi slt, %31, %34 : vector<64x4xi32>
    %c0_i32_30 = arith.constant 0 : i32
    %36 = arith.cmpi slt, %29, %c0_i32_30 : i32
    %37 = vector.broadcast %36 : i1 to vector<64x4xi1>
    %38 = vector.broadcast %37 : vector<64x4xi1> to vector<64x4xi1>
    %39 = arith.xori %35, %38 : vector<64x4xi1>
    %40 = arith.andi %39, %33 : vector<64x4xi1>
    %41 = vector.broadcast %29 : i32 to vector<64x4xi32>
    %42 = arith.addi %31, %41 : vector<64x4xi32>
    %43 = arith.select %40, %42, %31 : vector<64x4xi1>, vector<64x4xi32>
    %44 = arith.cmpi eq, %43, %27 : vector<64x4xi32>
    %45 = arith.extui %44 : vector<64x4xi1> to vector<64x4xi32>
    %46 = arith.sitofp %45 : vector<64x4xi32> to vector<64x4xf32>
    %47 = tpu.iota {dimensions = array<i32: 1>} : vector<4x64xi32>
    %48 = tpu.iota {dimensions = array<i32: 0>} : vector<4x64xi32>
    %c4_i32_31 = arith.constant 4 : i32
    %c0_i32_32 = arith.constant 0 : i32
    %49 = arith.cmpi eq, %c4_i32_31, %c0_i32_32 : i32
    %c1_i32_33 = arith.constant 1 : i32
    %50 = arith.select %49, %c1_i32_33, %c4_i32_31 : i32
    %51 = vector.broadcast %50 : i32 to vector<4x64xi32>
    %52 = arith.remsi %47, %51 : vector<4x64xi32>
    %c0_i32_34 = arith.constant 0 : i32
    %53 = vector.broadcast %c0_i32_34 : i32 to vector<4x64xi32>
    %54 = arith.cmpi ne, %52, %53 : vector<4x64xi32>
    %c0_i32_35 = arith.constant 0 : i32
    %55 = vector.broadcast %c0_i32_35 : i32 to vector<4x64xi32>
    %56 = arith.cmpi slt, %52, %55 : vector<4x64xi32>
    %c0_i32_36 = arith.constant 0 : i32
    %57 = arith.cmpi slt, %50, %c0_i32_36 : i32
    %58 = vector.broadcast %57 : i1 to vector<4x64xi1>
    %59 = vector.broadcast %58 : vector<4x64xi1> to vector<4x64xi1>
    %60 = arith.xori %56, %59 : vector<4x64xi1>
    %61 = arith.andi %60, %54 : vector<4x64xi1>
    %62 = vector.broadcast %50 : i32 to vector<4x64xi32>
    %63 = arith.addi %52, %62 : vector<4x64xi32>
    %64 = arith.select %61, %63, %52 : vector<4x64xi1>, vector<4x64xi32>
    %65 = arith.cmpi eq, %64, %48 : vector<4x64xi32>
    %66 = arith.extui %65 : vector<4x64xi1> to vector<4x64xi32>
    %67 = arith.sitofp %66 : vector<4x64xi32> to vector<4x64xf32>
    %cst_37 = arith.constant dense<0.000000e+00> : vector<64xf32>
    %68 = vector.multi_reduction <add>, %23, %cst_37 [0] : vector<32x64xf32> to vector<64xf32>
    %69 = vector.shape_cast %68 : vector<64xf32> to vector<1x64xf32>
    %cst_38 = arith.constant dense<0.000000e+00> : vector<1x4xf32>
    %70 = tpu.matmul %69, %46, %cst_38 {dimension_numbers = #tpu.dot_dimension_numbers<[1], [0], [0], [1], [0, 0, 1, 1], [], []>} : vector<1x64xf32>, vector<64x4xf32>, vector<1x4xf32> -> vector<1x4xf32>
    %cst_39 = arith.constant 5.120000e+02 : f32
    %71 = vector.broadcast %cst_39 : f32 to vector<1x4xf32>
    %72 = arith.divf %70, %71 : vector<1x4xf32>
    %cst_40 = arith.constant dense<0.000000e+00> : vector<1x64xf32>
    %73 = tpu.matmul %72, %67, %cst_40 {dimension_numbers = #tpu.dot_dimension_numbers<[1], [0], [0], [1], [0, 0, 1, 1], [], []>} : vector<1x4xf32>, vector<4x64xf32>, vector<1x64xf32> -> vector<1x64xf32>
    %74 = vector.broadcast %73 : vector<1x64xf32> to vector<32x64xf32>
    %75 = arith.subf %23, %74 : vector<32x64xf32>
    %76 = arith.mulf %75, %75 : vector<32x64xf32>
    %cst_41 = arith.constant dense<0.000000e+00> : vector<64xf32>
    %77 = vector.multi_reduction <add>, %76, %cst_41 [0] : vector<32x64xf32> to vector<64xf32>
    %78 = vector.shape_cast %77 : vector<64xf32> to vector<1x64xf32>
    %cst_42 = arith.constant dense<0.000000e+00> : vector<1x4xf32>
    %79 = tpu.matmul %78, %46, %cst_42 {dimension_numbers = #tpu.dot_dimension_numbers<[1], [0], [0], [1], [0, 0, 1, 1], [], []>} : vector<1x64xf32>, vector<64x4xf32>, vector<1x4xf32> -> vector<1x4xf32>
    %cst_43 = arith.constant 5.120000e+02 : f32
    %80 = vector.broadcast %cst_43 : f32 to vector<1x4xf32>
    %81 = arith.divf %79, %80 : vector<1x4xf32>
    %cst_44 = arith.constant 9.99999974E-6 : f32
    %82 = vector.broadcast %cst_44 : f32 to vector<1x4xf32>
    %83 = arith.addf %81, %82 : vector<1x4xf32>
    %84 = math.rsqrt %83 : vector<1x4xf32>
    %85 = arith.mulf %24, %84 : vector<1x4xf32>
    %86 = arith.mulf %72, %85 : vector<1x4xf32>
    %87 = arith.subf %25, %86 : vector<1x4xf32>
    %cst_45 = arith.constant dense<0.000000e+00> : vector<1x64xf32>
    %88 = tpu.matmul %85, %67, %cst_45 {dimension_numbers = #tpu.dot_dimension_numbers<[1], [0], [0], [1], [0, 0, 1, 1], [], []>} : vector<1x4xf32>, vector<4x64xf32>, vector<1x64xf32> -> vector<1x64xf32>
    %cst_46 = arith.constant dense<0.000000e+00> : vector<1x64xf32>
    %89 = tpu.matmul %87, %67, %cst_46 {dimension_numbers = #tpu.dot_dimension_numbers<[1], [0], [0], [1], [0, 0, 1, 1], [], []>} : vector<1x4xf32>, vector<4x64xf32>, vector<1x64xf32> -> vector<1x64xf32>
    %90 = vector.broadcast %88 : vector<1x64xf32> to vector<32x64xf32>
    %91 = arith.mulf %23, %90 : vector<32x64xf32>
    %92 = vector.broadcast %89 : vector<1x64xf32> to vector<32x64xf32>
    %93 = arith.addf %91, %92 : vector<32x64xf32>
    %cst_47 = arith.constant 0.000000e+00 : f32
    %94 = vector.broadcast %cst_47 : f32 to vector<32x64xf32>
    %95 = arith.cmpf oge, %93, %94 : vector<32x64xf32>
    %cst_48 = arith.constant 0.229166672 : f32
    %96 = vector.broadcast %cst_48 : f32 to vector<32x64xf32>
    %97 = arith.mulf %96, %93 : vector<32x64xf32>
    %98 = arith.select %95, %93, %97 : vector<32x64xi1>, vector<32x64xf32>
    %c0_49 = arith.constant 0 : index
    %c0_50 = arith.constant 0 : index
    %99 = vector.load %arg7[%c0_49, %c0_50] : memref<1x256xf32, #tpu.memory_space<vmem>>, vector<1x256xf32>
    %c0_51 = arith.constant 0 : index
    %c0_52 = arith.constant 0 : index
    %c0_53 = arith.constant 0 : index
    %100 = vector.load %arg2[%c0_51, %c0_52, %c0_53] : memref<3x64x32xf32, #tpu.memory_space<vmem>>, vector<1x64x32xf32>
    %101 = vector.shape_cast %100 : vector<1x64x32xf32> to vector<64x32xf32>
    %cst_54 = arith.constant dense<0.000000e+00> : vector<64x64xf32>
    %102 = tpu.matmul %101, %98, %cst_54 {dimension_numbers = #tpu.dot_dimension_numbers<[1], [0], [0], [1], [0, 0, 1, 1], [], []>} : vector<64x32xf32>, vector<32x64xf32>, vector<64x64xf32> -> vector<64x64xf32>
    %c0_55 = arith.constant 0 : index
    %c0_56 = arith.constant 0 : index
    %c0_57 = arith.constant 0 : index
    %103 = vector.load %arg4[%c0_55, %c0_56, %c0_57] : memref<3x64x256xf32, #tpu.memory_space<vmem>>, vector<1x64x256xf32>
    %104 = vector.shape_cast %103 : vector<1x64x256xf32> to vector<64x256xf32>
    %cst_58 = arith.constant dense<0.000000e+00> : vector<64x256xf32>
    %105 = tpu.matmul %102, %104, %cst_58 {dimension_numbers = #tpu.dot_dimension_numbers<[1], [0], [0], [1], [0, 0, 1, 1], [], []>} : vector<64x64xf32>, vector<64x256xf32>, vector<64x256xf32> -> vector<64x256xf32>
    %106 = vector.broadcast %99 : vector<1x256xf32> to vector<64x256xf32>
    %107 = arith.addf %106, %105 : vector<64x256xf32>
    %c1_59 = arith.constant 1 : index
    %c0_60 = arith.constant 0 : index
    %c0_61 = arith.constant 0 : index
    %108 = vector.load %arg2[%c1_59, %c0_60, %c0_61] : memref<3x64x32xf32, #tpu.memory_space<vmem>>, vector<1x64x32xf32>
    %109 = vector.shape_cast %108 : vector<1x64x32xf32> to vector<64x32xf32>
    %cst_62 = arith.constant dense<0.000000e+00> : vector<64x64xf32>
    %110 = tpu.matmul %109, %98, %cst_62 {dimension_numbers = #tpu.dot_dimension_numbers<[1], [0], [0], [1], [0, 0, 1, 1], [], []>} : vector<64x32xf32>, vector<32x64xf32>, vector<64x64xf32> -> vector<64x64xf32>
    %c1_63 = arith.constant 1 : index
    %c0_64 = arith.constant 0 : index
    %c0_65 = arith.constant 0 : index
    %111 = vector.load %arg4[%c1_63, %c0_64, %c0_65] : memref<3x64x256xf32, #tpu.memory_space<vmem>>, vector<1x64x256xf32>
    %112 = vector.shape_cast %111 : vector<1x64x256xf32> to vector<64x256xf32>
    %cst_66 = arith.constant dense<0.000000e+00> : vector<64x256xf32>
    %113 = tpu.matmul %110, %112, %cst_66 {dimension_numbers = #tpu.dot_dimension_numbers<[1], [0], [0], [1], [0, 0, 1, 1], [], []>} : vector<64x64xf32>, vector<64x256xf32>, vector<64x256xf32> -> vector<64x256xf32>
    %114 = arith.addf %107, %113 : vector<64x256xf32>
    %c2_67 = arith.constant 2 : index
    %c0_68 = arith.constant 0 : index
    %c0_69 = arith.constant 0 : index
    %115 = vector.load %arg2[%c2_67, %c0_68, %c0_69] : memref<3x64x32xf32, #tpu.memory_space<vmem>>, vector<1x64x32xf32>
    %116 = vector.shape_cast %115 : vector<1x64x32xf32> to vector<64x32xf32>
    %cst_70 = arith.constant dense<0.000000e+00> : vector<64x64xf32>
    %117 = tpu.matmul %116, %98, %cst_70 {dimension_numbers = #tpu.dot_dimension_numbers<[1], [0], [0], [1], [0, 0, 1, 1], [], []>} : vector<64x32xf32>, vector<32x64xf32>, vector<64x64xf32> -> vector<64x64xf32>
    %c2_71 = arith.constant 2 : index
    %c0_72 = arith.constant 0 : index
    %c0_73 = arith.constant 0 : index
    %118 = vector.load %arg4[%c2_71, %c0_72, %c0_73] : memref<3x64x256xf32, #tpu.memory_space<vmem>>, vector<1x64x256xf32>
    %119 = vector.shape_cast %118 : vector<1x64x256xf32> to vector<64x256xf32>
    %cst_74 = arith.constant dense<0.000000e+00> : vector<64x256xf32>
    %120 = tpu.matmul %117, %119, %cst_74 {dimension_numbers = #tpu.dot_dimension_numbers<[1], [0], [0], [1], [0, 0, 1, 1], [], []>} : vector<64x64xf32>, vector<64x256xf32>, vector<64x256xf32> -> vector<64x256xf32>
    %121 = arith.addf %114, %120 : vector<64x256xf32>
    %c0_75 = arith.constant 0 : index
    %c0_76 = arith.constant 0 : index
    %122 = vector.load %arg11[%c0_75, %c0_76] : memref<1x8xf32, #tpu.memory_space<vmem>>, vector<1x8xf32>
    %c0_77 = arith.constant 0 : index
    %c0_78 = arith.constant 0 : index
    %123 = vector.load %arg12[%c0_77, %c0_78] : memref<1x8xf32, #tpu.memory_space<vmem>>, vector<1x8xf32>
    %124 = tpu.iota {dimensions = array<i32: 0>} : vector<256x8xi32>
    %125 = tpu.iota {dimensions = array<i32: 1>} : vector<256x8xi32>
    %c8_i32 = arith.constant 8 : i32
    %c0_i32_79 = arith.constant 0 : i32
    %126 = arith.cmpi eq, %c8_i32, %c0_i32_79 : i32
    %c1_i32_80 = arith.constant 1 : i32
    %127 = arith.select %126, %c1_i32_80, %c8_i32 : i32
    %128 = vector.broadcast %127 : i32 to vector<256x8xi32>
    %129 = arith.remsi %124, %128 : vector<256x8xi32>
    %c0_i32_81 = arith.constant 0 : i32
    %130 = vector.broadcast %c0_i32_81 : i32 to vector<256x8xi32>
    %131 = arith.cmpi ne, %129, %130 : vector<256x8xi32>
    %c0_i32_82 = arith.constant 0 : i32
    %132 = vector.broadcast %c0_i32_82 : i32 to vector<256x8xi32>
    %133 = arith.cmpi slt, %129, %132 : vector<256x8xi32>
    %c0_i32_83 = arith.constant 0 : i32
    %134 = arith.cmpi slt, %127, %c0_i32_83 : i32
    %135 = vector.broadcast %134 : i1 to vector<256x8xi1>
    %136 = vector.broadcast %135 : vector<256x8xi1> to vector<256x8xi1>
    %137 = arith.xori %133, %136 : vector<256x8xi1>
    %138 = arith.andi %137, %131 : vector<256x8xi1>
    %139 = vector.broadcast %127 : i32 to vector<256x8xi32>
    %140 = arith.addi %129, %139 : vector<256x8xi32>
    %141 = arith.select %138, %140, %129 : vector<256x8xi1>, vector<256x8xi32>
    %142 = arith.cmpi eq, %141, %125 : vector<256x8xi32>
    %143 = arith.extui %142 : vector<256x8xi1> to vector<256x8xi32>
    %144 = arith.sitofp %143 : vector<256x8xi32> to vector<256x8xf32>
    %145 = tpu.iota {dimensions = array<i32: 1>} : vector<8x256xi32>
    %146 = tpu.iota {dimensions = array<i32: 0>} : vector<8x256xi32>
    %c8_i32_84 = arith.constant 8 : i32
    %c0_i32_85 = arith.constant 0 : i32
    %147 = arith.cmpi eq, %c8_i32_84, %c0_i32_85 : i32
    %c1_i32_86 = arith.constant 1 : i32
    %148 = arith.select %147, %c1_i32_86, %c8_i32_84 : i32
    %149 = vector.broadcast %148 : i32 to vector<8x256xi32>
    %150 = arith.remsi %145, %149 : vector<8x256xi32>
    %c0_i32_87 = arith.constant 0 : i32
    %151 = vector.broadcast %c0_i32_87 : i32 to vector<8x256xi32>
    %152 = arith.cmpi ne, %150, %151 : vector<8x256xi32>
    %c0_i32_88 = arith.constant 0 : i32
    %153 = vector.broadcast %c0_i32_88 : i32 to vector<8x256xi32>
    %154 = arith.cmpi slt, %150, %153 : vector<8x256xi32>
    %c0_i32_89 = arith.constant 0 : i32
    %155 = arith.cmpi slt, %148, %c0_i32_89 : i32
    %156 = vector.broadcast %155 : i1 to vector<8x256xi1>
    %157 = vector.broadcast %156 : vector<8x256xi1> to vector<8x256xi1>
    %158 = arith.xori %154, %157 : vector<8x256xi1>
    %159 = arith.andi %158, %152 : vector<8x256xi1>
    %160 = vector.broadcast %148 : i32 to vector<8x256xi32>
    %161 = arith.addi %150, %160 : vector<8x256xi32>
    %162 = arith.select %159, %161, %150 : vector<8x256xi1>, vector<8x256xi32>
    %163 = arith.cmpi eq, %162, %146 : vector<8x256xi32>
    %164 = arith.extui %163 : vector<8x256xi1> to vector<8x256xi32>
    %165 = arith.sitofp %164 : vector<8x256xi32> to vector<8x256xf32>
    %cst_90 = arith.constant dense<0.000000e+00> : vector<256xf32>
    %166 = vector.multi_reduction <add>, %121, %cst_90 [0] : vector<64x256xf32> to vector<256xf32>
    %167 = vector.shape_cast %166 : vector<256xf32> to vector<1x256xf32>
    %cst_91 = arith.constant dense<0.000000e+00> : vector<1x8xf32>
    %168 = tpu.matmul %167, %144, %cst_91 {dimension_numbers = #tpu.dot_dimension_numbers<[1], [0], [0], [1], [0, 0, 1, 1], [], []>} : vector<1x256xf32>, vector<256x8xf32>, vector<1x8xf32> -> vector<1x8xf32>
    %cst_92 = arith.constant 2.048000e+03 : f32
    %169 = vector.broadcast %cst_92 : f32 to vector<1x8xf32>
    %170 = arith.divf %168, %169 : vector<1x8xf32>
    %cst_93 = arith.constant dense<0.000000e+00> : vector<1x256xf32>
    %171 = tpu.matmul %170, %165, %cst_93 {dimension_numbers = #tpu.dot_dimension_numbers<[1], [0], [0], [1], [0, 0, 1, 1], [], []>} : vector<1x8xf32>, vector<8x256xf32>, vector<1x256xf32> -> vector<1x256xf32>
    %172 = vector.broadcast %171 : vector<1x256xf32> to vector<64x256xf32>
    %173 = arith.subf %121, %172 : vector<64x256xf32>
    %174 = arith.mulf %173, %173 : vector<64x256xf32>
    %cst_94 = arith.constant dense<0.000000e+00> : vector<256xf32>
    %175 = vector.multi_reduction <add>, %174, %cst_94 [0] : vector<64x256xf32> to vector<256xf32>
    %176 = vector.shape_cast %175 : vector<256xf32> to vector<1x256xf32>
    %cst_95 = arith.constant dense<0.000000e+00> : vector<1x8xf32>
    %177 = tpu.matmul %176, %144, %cst_95 {dimension_numbers = #tpu.dot_dimension_numbers<[1], [0], [0], [1], [0, 0, 1, 1], [], []>} : vector<1x256xf32>, vector<256x8xf32>, vector<1x8xf32> -> vector<1x8xf32>
    %cst_96 = arith.constant 2.048000e+03 : f32
    %178 = vector.broadcast %cst_96 : f32 to vector<1x8xf32>
    %179 = arith.divf %177, %178 : vector<1x8xf32>
    %cst_97 = arith.constant 9.99999974E-6 : f32
    %180 = vector.broadcast %cst_97 : f32 to vector<1x8xf32>
    %181 = arith.addf %179, %180 : vector<1x8xf32>
    %182 = math.rsqrt %181 : vector<1x8xf32>
    %183 = arith.mulf %122, %182 : vector<1x8xf32>
    %184 = arith.mulf %170, %183 : vector<1x8xf32>
    %185 = arith.subf %123, %184 : vector<1x8xf32>
    %cst_98 = arith.constant dense<0.000000e+00> : vector<1x256xf32>
    %186 = tpu.matmul %183, %165, %cst_98 {dimension_numbers = #tpu.dot_dimension_numbers<[1], [0], [0], [1], [0, 0, 1, 1], [], []>} : vector<1x8xf32>, vector<8x256xf32>, vector<1x256xf32> -> vector<1x256xf32>
    %cst_99 = arith.constant dense<0.000000e+00> : vector<1x256xf32>
    %187 = tpu.matmul %185, %165, %cst_99 {dimension_numbers = #tpu.dot_dimension_numbers<[1], [0], [0], [1], [0, 0, 1, 1], [], []>} : vector<1x8xf32>, vector<8x256xf32>, vector<1x256xf32> -> vector<1x256xf32>
    %188 = vector.broadcast %186 : vector<1x256xf32> to vector<64x256xf32>
    %189 = arith.mulf %121, %188 : vector<64x256xf32>
    %190 = vector.broadcast %187 : vector<1x256xf32> to vector<64x256xf32>
    %191 = arith.addf %189, %190 : vector<64x256xf32>
    %c0_100 = arith.constant 0 : index
    %c0_101 = arith.constant 0 : index
    %192 = vector.load %arg8[%c0_100, %c0_101] : memref<1x256xf32, #tpu.memory_space<vmem>>, vector<1x256xf32>
    %c0_102 = arith.constant 0 : index
    %c0_103 = arith.constant 0 : index
    %c0_104 = arith.constant 0 : index
    %193 = vector.load %arg2[%c0_102, %c0_103, %c0_104] : memref<3x64x32xf32, #tpu.memory_space<vmem>>, vector<1x64x32xf32>
    %194 = vector.shape_cast %193 : vector<1x64x32xf32> to vector<64x32xf32>
    %cst_105 = arith.constant dense<0.000000e+00> : vector<64x64xf32>
    %195 = tpu.matmul %194, %0, %cst_105 {dimension_numbers = #tpu.dot_dimension_numbers<[1], [0], [0], [1], [0, 0, 1, 1], [], []>} : vector<64x32xf32>, vector<32x64xf32>, vector<64x64xf32> -> vector<64x64xf32>
    %c0_106 = arith.constant 0 : index
    %c0_107 = arith.constant 0 : index
    %c0_108 = arith.constant 0 : index
    %196 = vector.load %arg5[%c0_106, %c0_107, %c0_108] : memref<3x64x256xf32, #tpu.memory_space<vmem>>, vector<1x64x256xf32>
    %197 = vector.shape_cast %196 : vector<1x64x256xf32> to vector<64x256xf32>
    %cst_109 = arith.constant dense<0.000000e+00> : vector<64x256xf32>
    %198 = tpu.matmul %195, %197, %cst_109 {dimension_numbers = #tpu.dot_dimension_numbers<[1], [0], [0], [1], [0, 0, 1, 1], [], []>} : vector<64x64xf32>, vector<64x256xf32>, vector<64x256xf32> -> vector<64x256xf32>
    %199 = vector.broadcast %192 : vector<1x256xf32> to vector<64x256xf32>
    %200 = arith.addf %199, %198 : vector<64x256xf32>
    %c1_110 = arith.constant 1 : index
    %c0_111 = arith.constant 0 : index
    %c0_112 = arith.constant 0 : index
    %201 = vector.load %arg2[%c1_110, %c0_111, %c0_112] : memref<3x64x32xf32, #tpu.memory_space<vmem>>, vector<1x64x32xf32>
    %202 = vector.shape_cast %201 : vector<1x64x32xf32> to vector<64x32xf32>
    %cst_113 = arith.constant dense<0.000000e+00> : vector<64x64xf32>
    %203 = tpu.matmul %202, %0, %cst_113 {dimension_numbers = #tpu.dot_dimension_numbers<[1], [0], [0], [1], [0, 0, 1, 1], [], []>} : vector<64x32xf32>, vector<32x64xf32>, vector<64x64xf32> -> vector<64x64xf32>
    %c1_114 = arith.constant 1 : index
    %c0_115 = arith.constant 0 : index
    %c0_116 = arith.constant 0 : index
    %204 = vector.load %arg5[%c1_114, %c0_115, %c0_116] : memref<3x64x256xf32, #tpu.memory_space<vmem>>, vector<1x64x256xf32>
    %205 = vector.shape_cast %204 : vector<1x64x256xf32> to vector<64x256xf32>
    %cst_117 = arith.constant dense<0.000000e+00> : vector<64x256xf32>
    %206 = tpu.matmul %203, %205, %cst_117 {dimension_numbers = #tpu.dot_dimension_numbers<[1], [0], [0], [1], [0, 0, 1, 1], [], []>} : vector<64x64xf32>, vector<64x256xf32>, vector<64x256xf32> -> vector<64x256xf32>
    %207 = arith.addf %200, %206 : vector<64x256xf32>
    %c2_118 = arith.constant 2 : index
    %c0_119 = arith.constant 0 : index
    %c0_120 = arith.constant 0 : index
    %208 = vector.load %arg2[%c2_118, %c0_119, %c0_120] : memref<3x64x32xf32, #tpu.memory_space<vmem>>, vector<1x64x32xf32>
    %209 = vector.shape_cast %208 : vector<1x64x32xf32> to vector<64x32xf32>
    %cst_121 = arith.constant dense<0.000000e+00> : vector<64x64xf32>
    %210 = tpu.matmul %209, %0, %cst_121 {dimension_numbers = #tpu.dot_dimension_numbers<[1], [0], [0], [1], [0, 0, 1, 1], [], []>} : vector<64x32xf32>, vector<32x64xf32>, vector<64x64xf32> -> vector<64x64xf32>
    %c2_122 = arith.constant 2 : index
    %c0_123 = arith.constant 0 : index
    %c0_124 = arith.constant 0 : index
    %211 = vector.load %arg5[%c2_122, %c0_123, %c0_124] : memref<3x64x256xf32, #tpu.memory_space<vmem>>, vector<1x64x256xf32>
    %212 = vector.shape_cast %211 : vector<1x64x256xf32> to vector<64x256xf32>
    %cst_125 = arith.constant dense<0.000000e+00> : vector<64x256xf32>
    %213 = tpu.matmul %210, %212, %cst_125 {dimension_numbers = #tpu.dot_dimension_numbers<[1], [0], [0], [1], [0, 0, 1, 1], [], []>} : vector<64x64xf32>, vector<64x256xf32>, vector<64x256xf32> -> vector<64x256xf32>
    %214 = arith.addf %207, %213 : vector<64x256xf32>
    %215 = arith.addf %191, %214 : vector<64x256xf32>
    %cst_126 = arith.constant 0.000000e+00 : f32
    %216 = vector.broadcast %cst_126 : f32 to vector<64x256xf32>
    %217 = arith.cmpf oge, %215, %216 : vector<64x256xf32>
    %cst_127 = arith.constant 0.229166672 : f32
    %218 = vector.broadcast %cst_127 : f32 to vector<64x256xf32>
    %219 = arith.mulf %218, %215 : vector<64x256xf32>
    %220 = arith.select %217, %215, %219 : vector<64x256xi1>, vector<64x256xf32>
    %c0_128 = arith.constant 0 : index
    %c0_129 = arith.constant 0 : index
    %221 = vector.load %arg13[%c0_128, %c0_129] : memref<64x256xf32, #tpu.memory_space<vmem>>, vector<64x256xf32>
    tpu.vector_store %arg13[%c0_128, %c0_129], %220 {strides = array<i32>} : memref<64x256xf32, #tpu.memory_space<vmem>>, vector<64x256xf32>,
    return
  }
}

</mosaic_0001>

<llo_original>
// kernel: tile.18
$region0: #{tile.18}
  #allocation0 [shape = 's32[1]{0}', space=sflag, size = 0x4, scoped, tag = 'scoped memory for tile.18']
  %s0 = inlined_call_operand.vmem [shape: f32[8], index: 0, kind: input, shape index: {}]
  %s1 = inlined_call_operand.vmem [shape: f32[32,8], index: 1, kind: output, shape index: {}]
  // Predicated region
  $region2: #{tile.18} parent=0 // pred_check
    _
  $region3: #{tile.18} parent=0 // pred_check_branch
    %3 = sbr.rel (0) target = $region5
  $region4: #{tile.18} parent=0 // pred_region
    _
  $region5: #{tile.18} parent=0 // pred_fallthru
    _
  %v4 = vld [vmem:[%s0] ss:$0 sm:$0xff]
  %5 = vst [vmem:[%s1] sm:$0xff] %v4
  %s6 = scalar_lea.vmem %s1, 8
  %7 = vst [vmem:[%s6] sm:$0xff] %v4
  %s8 = scalar_lea.vmem %s1, 16
  %9 = vst [vmem:[%s8] sm:$0xff] %v4
  %s10 = scalar_lea.vmem %s1, 24
  %11 = vst [vmem:[%s10] sm:$0xff] %v4

// kernel: tile.19
$region0: #{tile.19}
  %s0 = inlined_call_operand.vmem [shape: f32[32,8], index: 0, kind: input, shape index: {}]
  %s1 = inlined_call_operand.vmem [shape: f32[1,256], index: 1, kind: output, shape index: {}]
  $region1: #{tile.19} parent=0
    #allocation0 [shape = 'u8[8192]{0}', space=vmem, size = 0x2000, scoped, tag = 'scoped mem for output reshape']
    %s2 = smov 3
    %v3 = vld [vmem:[%s0] ss:$16 sm:%s2]
    %vm4 = vcmask 64512
    %5 = vst.msk [vmem:[#allocation0] ss:$8 sm:$0x3] %vm4, %v3
    %s6 = scalar_lea.vmem %s0, 15
    %s7 = smov 3
    %v8 = vld [vmem:[%s6] ss:$16 sm:%s7]
    %9 = vrot.lane.b32.xlu0 %v8, 120
    %v10 = vpop.permute.xlu0 %9
    %vm11 = vcmask 1048512
    %12 = vst.msk [vmem:[#allocation0] ss:$8 sm:$0x3] %vm11, %v10
    %s13 = scalar_lea.vmem %s0, 14
    %s14 = smov 3
    %v15 = vld [vmem:[%s13] ss:$16 sm:%s14]
    %16 = vrot.lane.b32.xlu0 %v15, 112
    %v17 = vpop.permute.xlu0 %16
    %vm18 = vcmask 982912
    %19 = vst.msk [vmem:[#allocation0] ss:$8 sm:$0x3] %vm18, %v17
    %s20 = scalar_lea.vmem %s0, 13
    %s21 = smov 3
    %v22 = vld [vmem:[%s20] ss:$16 sm:%s21]
    %23 = vrot.lane.b32.xlu0 %v22, 104
    %v24 = vpop.permute.xlu0 %23
    %vm25 = vcmask 917312
    %26 = vst.msk [vmem:[#allocation0] ss:$8 sm:$0x3] %vm25, %v24
    %s27 = scalar_lea.vmem %s0, 12
    %s28 = smov 3
    %v29 = vld [vmem:[%s27] ss:$16 sm:%s28]
    %30 = vrot.lane.b32.xlu0 %v29, 96
    %v31 = vpop.permute.xlu0 %30
    %vm32 = vcmask 851712
    %33 = vst.msk [vmem:[#allocation0] ss:$8 sm:$0x3] %vm32, %v31
    %s34 = scalar_lea.vmem %s0, 11
    %s35 = smov 3
    %v36 = vld [vmem:[%s34] ss:$16 sm:%s35]
    %37 = vrot.lane.b32.xlu0 %v36, 88
    %v38 = vpop.permute.xlu0 %37
    %vm39 = vcmask 786112
    %40 = vst.msk [vmem:[#allocation0] ss:$8 sm:$0x3] %vm39, %v38
    %s41 = scalar_lea.vmem %s0, 10
    %s42 = smov 3
    %v43 = vld [vmem:[%s41] ss:$16 sm:%s42]
    %44 = vrot.lane.b32.xlu0 %v43, 80
    %v45 = vpop.permute.xlu0 %44
    %vm46 = vcmask 720512
    %47 = vst.msk [vmem:[#allocation0] ss:$8 sm:$0x3] %vm46, %v45
    %s48 = scalar_lea.vmem %s0, 9
    %s49 = smov 3
    %v50 = vld [vmem:[%s48] ss:$16 sm:%s49]
    %51 = vrot.lane.b32.xlu0 %v50, 72
    %v52 = vpop.permute.xlu0 %51
    %vm53 = vcmask 654912
    %54 = vst.msk [vmem:[#allocation0] ss:$8 sm:$0x3] %vm53, %v52
    %s55 = scalar_lea.vmem %s0, 8
    %s56 = smov 3
    %v57 = vld [vmem:[%s55] ss:$16 sm:%s56]
    %58 = vrot.lane.b32.xlu0 %v57, 64
    %v59 = vpop.permute.xlu0 %58
    %vm60 = vcmask 589312
    %61 = vst.msk [vmem:[#allocation0] ss:$8 sm:$0x3] %vm60, %v59
    %s62 = scalar_lea.vmem %s0, 7
    %s63 = smov 3
    %v64 = vld [vmem:[%s62] ss:$16 sm:%s63]
    %65 = vrot.lane.b32.xlu0 %v64, 56
    %v66 = vpop.permute.xlu0 %65
    %vm67 = vcmask 523712
    %68 = vst.msk [vmem:[#allocation0] ss:$8 sm:$0x3] %vm67, %v66
    %s69 = scalar_lea.vmem %s0, 6
    %s70 = smov 3
    %v71 = vld [vmem:[%s69] ss:$16 sm:%s70]
    %72 = vrot.lane.b32.xlu0 %v71, 48
    %v73 = vpop.permute.xlu0 %72
    %vm74 = vcmask 458112
    %75 = vst.msk [vmem:[#allocation0] ss:$8 sm:$0x3] %vm74, %v73
    %s76 = scalar_lea.vmem %s0, 5
    %s77 = smov 3
    %v78 = vld [vmem:[%s76] ss:$16 sm:%s77]
    %79 = vrot.lane.b32.xlu0 %v78, 40
    %v80 = vpop.permute.xlu0 %79
    %vm81 = vcmask 392512
    %82 = vst.msk [vmem:[#allocation0] ss:$8 sm:$0x3] %vm81, %v80
    %s83 = scalar_lea.vmem %s0, 4
    %s84 = smov 3
    %v85 = vld [vmem:[%s83] ss:$16 sm:%s84]
    %86 = vrot.lane.b32.xlu0 %v85, 32
    %v87 = vpop.permute.xlu0 %86
    %vm88 = vcmask 326912
    %89 = vst.msk [vmem:[#allocation0] ss:$8 sm:$0x3] %vm88, %v87
    %s90 = scalar_lea.vmem %s0, 3
    %s91 = smov 3
    %v92 = vld [vmem:[%s90] ss:$16 sm:%s91]
    %93 = vrot.lane.b32.xlu0 %v92, 24
    %v94 = vpop.permute.xlu0 %93
    %vm95 = vcmask 261312
    %96 = vst.msk [vmem:[#allocation0] ss:$8 sm:$0x3] %vm95, %v94
    %s97 = scalar_lea.vmem %s0, 2
    %s98 = smov 3
    %v99 = vld [vmem:[%s97] ss:$16 sm:%s98]
    %100 = vrot.lane.b32.xlu0 %v99, 16
    %v101 = vpop.permute.xlu0 %100
    %vm102 = vcmask 195712
    %103 = vst.msk [vmem:[#allocation0] ss:$8 sm:$0x3] %vm102, %v101
    %s104 = scalar_lea.vmem %s0, 1
    %s105 = smov 3
    %v106 = vld [vmem:[%s104] ss:$16 sm:%s105]
    %107 = vrot.lane.b32.xlu0 %v106, 8
    %v108 = vpop.permute.xlu0 %107
    %vm109 = vcmask 130112
    %110 = vst.msk [vmem:[#allocation0] ss:$8 sm:$0x3] %vm109, %v108
    %s112 = sshll.u32 1, 1
    %s113 = ssub.s32 %s112, 1
    %v115 = vld [vmem:[#allocation0] sm:%s113]
    %s116 = sshll.u32 1, 1
    %s117 = ssub.s32 %s116, 1
    %118 = vst [vmem:[%s1] sm:%s117] %v115
    %s119 = scalar_lea.vmem [#allocation0], 8
    %v120 = vld [vmem:[%s119] sm:%s113]
    %s121 = sshll.u32 1, 1
    %s122 = ssub.s32 %s121, 1
    %s123 = scalar_lea.vmem %s1, 1
    %124 = vst [vmem:[%s123] sm:%s122] %v120

// kernel: tile.14
$region0: #{tile.14}
  #allocation0 [shape = 's32[1]{0}', space=sflag, size = 0x4, scoped, tag = 'scoped memory for tile.14']
  %s0 = inlined_call_operand.vmem [shape: f32[4], index: 0, kind: input, shape index: {}]
  %s1 = inlined_call_operand.vmem [shape: f32[16,4], index: 1, kind: output, shape index: {}]
  // Predicated region
  $region2: #{tile.14} parent=0 // pred_check
    _
  $region3: #{tile.14} parent=0 // pred_check_branch
    %3 = sbr.rel (0) target = $region5
  $region4: #{tile.14} parent=0 // pred_region
    _
  $region5: #{tile.14} parent=0 // pred_fallthru
    _
  %v4 = vld [vmem:[%s0] ss:$0 sm:$0xff]
  %5 = vst [vmem:[%s1] sm:$0xff] %v4
  %s6 = scalar_lea.vmem %s1, 8
  %7 = vst [vmem:[%s6] sm:$0xff] %v4

// kernel: tile.15
$region0: #{tile.15}
  %s0 = inlined_call_operand.vmem [shape: f32[16,4], index: 0, kind: input, shape index: {}]
  %s1 = inlined_call_operand.vmem [shape: f32[1,64], index: 1, kind: output, shape index: {}]
  $region1: #{tile.15} parent=0
    #allocation0 [shape = 'u8[4096]{0}', space=vmem, size = 0x1000, scoped, tag = 'scoped mem for output reshape']
    %v2 = vld [vmem:[%s0] sm:$0x1]
    %vm3 = vcmask 31744
    %4 = vst.msk [vmem:[#allocation0] sm:$0x1] %vm3, %v2
    %s5 = scalar_lea.vmem %s0, 15
    %v6 = vld [vmem:[%s5] sm:$0x1]
    %7 = vrot.lane.b32.xlu0 %v6, 60
    %v8 = vpop.permute.xlu0 %7
    %vm9 = vcmask 523744
    %10 = vst.msk [vmem:[#allocation0] sm:$0x1] %vm9, %v8
    %s11 = scalar_lea.vmem %s0, 14
    %v12 = vld [vmem:[%s11] sm:$0x1]
    %13 = vrot.lane.b32.xlu0 %v12, 56
    %v14 = vpop.permute.xlu0 %13
    %vm15 = vcmask 490944
    %16 = vst.msk [vmem:[#allocation0] sm:$0x1] %vm15, %v14
    %s17 = scalar_lea.vmem %s0, 13
    %v18 = vld [vmem:[%s17] sm:$0x1]
    %19 = vrot.lane.b32.xlu0 %v18, 52
    %v20 = vpop.permute.xlu0 %19
    %vm21 = vcmask 458144
    %22 = vst.msk [vmem:[#allocation0] sm:$0x1] %vm21, %v20
    %s23 = scalar_lea.vmem %s0, 12
    %v24 = vld [vmem:[%s23] sm:$0x1]
    %25 = vrot.lane.b32.xlu0 %v24, 48
    %v26 = vpop.permute.xlu0 %25
    %vm27 = vcmask 425344
    %28 = vst.msk [vmem:[#allocation0] sm:$0x1] %vm27, %v26
    %s29 = scalar_lea.vmem %s0, 11
    %v30 = vld [vmem:[%s29] sm:$0x1]
    %31 = vrot.lane.b32.xlu0 %v30, 44
    %v32 = vpop.permute.xlu0 %31
    %vm33 = vcmask 392544
    %34 = vst.msk [vmem:[#allocation0] sm:$0x1] %vm33, %v32
    %s35 = scalar_lea.vmem %s0, 10
    %v36 = vld [vmem:[%s35] sm:$0x1]
    %37 = vrot.lane.b32.xlu0 %v36, 40
    %v38 = vpop.permute.xlu0 %37
    %vm39 = vcmask 359744
    %40 = vst.msk [vmem:[#allocation0] sm:$0x1] %vm39, %v38
    %s41 = scalar_lea.vmem %s0, 9
    %v42 = vld [vmem:[%s41] sm:$0x1]
    %43 = vrot.lane.b32.xlu0 %v42, 36
    %v44 = vpop.permute.xlu0 %43
    %vm45 = vcmask 326944
    %46 = vst.msk [vmem:[#allocation0] sm:$0x1] %vm45, %v44
    %s47 = scalar_lea.vmem %s0, 8
    %v48 = vld [vmem:[%s47] sm:$0x1]
    %49 = vrot.lane.b32.xlu0 %v48, 32
    %v50 = vpop.permute.xlu0 %49
    %vm51 = vcmask 294144
    %52 = vst.msk [vmem:[#allocation0] sm:$0x1] %vm51, %v50
    %s53 = scalar_lea.vmem %s0, 7
    %v54 = vld [vmem:[%s53] sm:$0x1]
    %55 = vrot.lane.b32.xlu0 %v54, 28
    %v56 = vpop.permute.xlu0 %55
    %vm57 = vcmask 261344
    %58 = vst.msk [vmem:[#allocation0] sm:$0x1] %vm57, %v56
    %s59 = scalar_lea.vmem %s0, 6
    %v60 = vld [vmem:[%s59] sm:$0x1]
    %61 = vrot.lane.b32.xlu0 %v60, 24
    %v62 = vpop.permute.xlu0 %61
    %vm63 = vcmask 228544
    %64 = vst.msk [vmem:[#allocation0] sm:$0x1] %vm63, %v62
    %s65 = scalar_lea.vmem %s0, 5
    %v66 = vld [vmem:[%s65] sm:$0x1]
    %67 = vrot.lane.b32.xlu0 %v66, 20
    %v68 = vpop.permute.xlu0 %67
    %vm69 = vcmask 195744
    %70 = vst.msk [vmem:[#allocation0] sm:$0x1] %vm69, %v68
    %s71 = scalar_lea.vmem %s0, 4
    %v72 = vld [vmem:[%s71] sm:$0x1]
    %73 = vrot.lane.b32.xlu0 %v72, 16
    %v74 = vpop.permute.xlu0 %73
    %vm75 = vcmask 162944
    %76 = vst.msk [vmem:[#allocation0] sm:$0x1] %vm75, %v74
    %s77 = scalar_lea.vmem %s0, 3
    %v78 = vld [vmem:[%s77] sm:$0x1]
    %79 = vrot.lane.b32.xlu0 %v78, 12
    %v80 = vpop.permute.xlu0 %79
    %vm81 = vcmask 130144
    %82 = vst.msk [vmem:[#allocation0] sm:$0x1] %vm81, %v80
    %s83 = scalar_lea.vmem %s0, 2
    %v84 = vld [vmem:[%s83] sm:$0x1]
    %85 = vrot.lane.b32.xlu0 %v84, 8
    %v86 = vpop.permute.xlu0 %85
    %vm87 = vcmask 97344
    %88 = vst.msk [vmem:[#allocation0] sm:$0x1] %vm87, %v86
    %s89 = scalar_lea.vmem %s0, 1
    %v90 = vld [vmem:[%s89] sm:$0x1]
    %91 = vrot.lane.b32.xlu0 %v90, 4
    %v92 = vpop.permute.xlu0 %91
    %vm93 = vcmask 64544
    %94 = vst.msk [vmem:[#allocation0] sm:$0x1] %vm93, %v92
    %s96 = sshll.u32 1, 1
    %s97 = ssub.s32 %s96, 1
    %v99 = vld [vmem:[#allocation0] sm:%s97]
    %s100 = sshll.u32 1, 1
    %s101 = ssub.s32 %s100, 1
    %102 = vst [vmem:[%s1] sm:%s101] %v99

// kernel: _lambda_.1
$region0: #{_lambda_.1}
  #allocation0 [shape = 'u32[]', space=smem, size = 0x4, offset = 0x4, fixed_abs, tag = 'smem constant byte address 0x4 - core index']
  #allocation1 [shape = 'u32[144,128]{1,0:T(1,128)}', space=vmem, size = 0x12000, scoped, tag = 'internal scratch']
  %s0 = inlined_call_operand.vmem [shape: f32[32,64], index: 0, kind: input, shape index: {}]
  %s1 = inlined_call_operand.vmem [shape: f32[3,32,32], index: 1, kind: input, shape index: {}]
  %s2 = inlined_call_operand.vmem [shape: f32[3,64,32], index: 2, kind: input, shape index: {}]
  %s3 = inlined_call_operand.vmem [shape: f32[3,64,64], index: 3, kind: input, shape index: {}]
  %s4 = inlined_call_operand.vmem [shape: f32[3,64,256], index: 4, kind: input, shape index: {}]
  %s5 = inlined_call_operand.vmem [shape: f32[3,64,256], index: 5, kind: input, shape index: {}]
  %s6 = inlined_call_operand.vmem [shape: f32[1,64], index: 6, kind: input, shape index: {}]
  %s7 = inlined_call_operand.vmem [shape: f32[1,256], index: 7, kind: input, shape index: {}]
  %s8 = inlined_call_operand.vmem [shape: f32[1,256], index: 8, kind: input, shape index: {}]
  %s9 = inlined_call_operand.vmem [shape: f32[1,4], index: 9, kind: input, shape index: {}]
  %s10 = inlined_call_operand.vmem [shape: f32[1,4], index: 10, kind: input, shape index: {}]
  %s11 = inlined_call_operand.vmem [shape: f32[1,8], index: 11, kind: input, shape index: {}]
  %s12 = inlined_call_operand.vmem [shape: f32[1,8], index: 12, kind: input, shape index: {}]
  %s13 = inlined_call_operand.vmem [shape: f32[64,256], index: 13, kind: output, shape index: {}]
  %s14 = sld [smem:[#allocation0]]
  $region62: #{_lambda_.1} parent=0
    _
  %s16 = ssub.s32 1, %s14
  %s17 = scalar_select 0, %s16, %s14
  // Predicated region
  $region2: #{_lambda_.1} parent=0 // pred_check
    _
  $region3: #{_lambda_.1} parent=0 // pred_check_branch
    %19 = sbr.rel (0) target = $region5
  $region4: #{_lambda_.1} parent=0 // pred_region
    _
  $region5: #{_lambda_.1} parent=0 // pred_fallthru
    _
  // Predicated region
  $region6: #{_lambda_.1} parent=0 // pred_check
    _
  $region7: #{_lambda_.1} parent=0 // pred_check_branch
    %21 = sbr.rel (0) target = $region9
  $region8: #{_lambda_.1} parent=0 // pred_region
    _
  $region9: #{_lambda_.1} parent=0 // pred_fallthru
    _
  // Predicated region
  $region10: #{_lambda_.1} parent=0 // pred_check
    _
  $region11: #{_lambda_.1} parent=0 // pred_check_branch
    %23 = sbr.rel (0) target = $region13
  $region12: #{_lambda_.1} parent=0 // pred_region
    _
  $region13: #{_lambda_.1} parent=0 // pred_fallthru
    _
  // Predicated region
  $region14: #{_lambda_.1} parent=0 // pred_check
    _
  $region15: #{_lambda_.1} parent=0 // pred_check_branch
    %25 = sbr.rel (0) target = $region17
  $region16: #{_lambda_.1} parent=0 // pred_region
    _
  $region17: #{_lambda_.1} parent=0 // pred_fallthru
    _
  // Predicated region
  $region18: #{_lambda_.1} parent=0 // pred_check
    _
  $region19: #{_lambda_.1} parent=0 // pred_check_branch
    %27 = sbr.rel (0) target = $region21
  $region20: #{_lambda_.1} parent=0 // pred_region
    _
  $region21: #{_lambda_.1} parent=0 // pred_fallthru
    _
  // Predicated region
  $region22: #{_lambda_.1} parent=0 // pred_check
    _
  $region23: #{_lambda_.1} parent=0 // pred_check_branch
    %29 = sbr.rel (0) target = $region25
  $region24: #{_lambda_.1} parent=0 // pred_region
    _
  $region25: #{_lambda_.1} parent=0 // pred_fallthru
    _
  // Predicated region
  $region26: #{_lambda_.1} parent=0 // pred_check
    _
  $region27: #{_lambda_.1} parent=0 // pred_check_branch
    %31 = sbr.rel (0) target = $region29
  $region28: #{_lambda_.1} parent=0 // pred_region
    _
  $region29: #{_lambda_.1} parent=0 // pred_fallthru
    _
  // Predicated region
  $region30: #{_lambda_.1} parent=0 // pred_check
    _
  $region31: #{_lambda_.1} parent=0 // pred_check_branch
    %33 = sbr.rel (0) target = $region33
  $region32: #{_lambda_.1} parent=0 // pred_region
    _
  $region33: #{_lambda_.1} parent=0 // pred_fallthru
    _
  // Predicated region
  $region34: #{_lambda_.1} parent=0 // pred_check
    _
  $region35: #{_lambda_.1} parent=0 // pred_check_branch
    %35 = sbr.rel (0) target = $region37
  $region36: #{_lambda_.1} parent=0 // pred_region
    _
  $region37: #{_lambda_.1} parent=0 // pred_fallthru
    _
  // Predicated region
  $region38: #{_lambda_.1} parent=0 // pred_check
    _
  $region39: #{_lambda_.1} parent=0 // pred_check_branch
    %37 = sbr.rel (0) target = $region41
  $region40: #{_lambda_.1} parent=0 // pred_region
    _
  $region41: #{_lambda_.1} parent=0 // pred_fallthru
    _
  // Predicated region
  $region42: #{_lambda_.1} parent=0 // pred_check
    _
  $region43: #{_lambda_.1} parent=0 // pred_check_branch
    %39 = sbr.rel (0) target = $region45
  $region44: #{_lambda_.1} parent=0 // pred_region
    _
  $region45: #{_lambda_.1} parent=0 // pred_fallthru
    _
  // Predicated region
  $region46: #{_lambda_.1} parent=0 // pred_check
    _
  $region47: #{_lambda_.1} parent=0 // pred_check_branch
    %41 = sbr.rel (0) target = $region49
  $region48: #{_lambda_.1} parent=0 // pred_region
    _
  $region49: #{_lambda_.1} parent=0 // pred_fallthru
    _
  // Predicated region
  $region50: #{_lambda_.1} parent=0 // pred_check
    _
  $region51: #{_lambda_.1} parent=0 // pred_check_branch
    %43 = sbr.rel (0) target = $region53
  $region52: #{_lambda_.1} parent=0 // pred_region
    _
  $region53: #{_lambda_.1} parent=0 // pred_fallthru
    _
  %v44 = vld [vmem:[%s0] sm:$0xff]
  %v45 = vld [vmem:[%s0 + $0x8] sm:$0xff]
  %v46 = vld [vmem:[%s0 + $0x10] sm:$0xff]
  %v47 = vld [vmem:[%s0 + $0x18] sm:$0xff]
  %v48 = vld [vmem:[%s6] sm:$0x1]
  %v49 = vld [vmem:[%s1] sm:$0xff]
  %v50 = vld [vmem:[%s1 + $0x8] sm:$0xff]
  %v51 = vld [vmem:[%s1 + $0x10] sm:$0xff]
  %v52 = vld [vmem:[%s1 + $0x18] sm:$0xff]
  %vm53 = vcmask 261120
  %v55 = vsel %vm53, %v49, 0
  %v58 = vsel %vm53, %v50, 0
  %v61 = vsel %vm53, %v51, 0
  %v64 = vsel %vm53, %v52, 0
  %66 = vmatprep.subr.mxu0 0.0
  %67 = vmatpush1.msra.mxu0 0.0
  %68 = vmatprep.subr.mxu0 0.0
  %69 = vmatpush1.msra.mxu0 0.0
  %70 = vmatprep.subr.mxu0 0.0
  %71 = vmatpush1.msra.mxu0 0.0
  %72 = vmatprep.subr.mxu0 0.0
  %73 = vmatpush1.msra.mxu0 0.0
  %74 = vmatprep.subr.mxu0 0.0
  %75 = vmatpush1.msra.mxu0 0.0
  %76 = vmatprep.subr.mxu0 0.0
  %77 = vmatpush1.msra.mxu0 0.0
  %78 = vmatprep.subr.mxu0 0.0
  %79 = vmatpush1.msra.mxu0 0.0
  %80 = vmatprep.subr.mxu0 0.0
  %81 = vmatpush1.msra.mxu0 0.0
  %82 = vmatprep.subr.mxu0 0.0
  %83 = vmatpush1.msra.mxu0 0.0
  %84 = vmatprep.subr.mxu0 0.0
  %85 = vmatpush1.msra.mxu0 0.0
  %86 = vmatprep.subr.mxu0 0.0
  %87 = vmatpush1.msra.mxu0 0.0
  %88 = vmatprep.subr.mxu0 0.0
  %89 = vmatpush1.msra.mxu0 0.0
  %90 = vmatprep.subr.mxu0 0.0
  %91 = vmatpush1.msra.mxu0 %v47
  %92 = vmatprep.subr.mxu0 0.0
  %93 = vmatpush1.msra.mxu0 %v46
  %94 = vmatprep.subr.mxu0 0.0
  %95 = vmatpush1.msra.mxu0 %v45
  %96 = vmatprep.subr.mxu0 0.0
  %97 = vmatpush1.msra.mxu0 %v44
  %98 = vmatprep.subr.mxu0 0.0
  %99 = vmatpush2.msra.mxu0 0.0
  %100 = vmatprep.subr.mxu0 0.0
  %101 = vmatpush2.msra.mxu0 0.0
  %102 = vmatprep.subr.mxu0 0.0
  %103 = vmatpush2.msra.mxu0 0.0
  %104 = vmatprep.subr.mxu0 0.0
  %105 = vmatpush2.msra.mxu0 0.0
  %106 = vmatprep.subr.mxu0 0.0
  %107 = vmatpush2.msra.mxu0 0.0
  %108 = vmatprep.subr.mxu0 0.0
  %109 = vmatpush2.msra.mxu0 0.0
  %110 = vmatprep.subr.mxu0 0.0
  %111 = vmatpush2.msra.mxu0 0.0
  %112 = vmatprep.subr.mxu0 0.0
  %113 = vmatpush2.msra.mxu0 0.0
  %114 = vmatprep.subr.mxu0 0.0
  %115 = vmatpush2.msra.mxu0 0.0
  %116 = vmatprep.subr.mxu0 0.0
  %117 = vmatpush2.msra.mxu0 0.0
  %118 = vmatprep.subr.mxu0 0.0
  %119 = vmatpush2.msra.mxu0 0.0
  %120 = vmatprep.subr.mxu0 0.0
  %121 = vmatpush2.msra.mxu0 0.0
  %122 = vmatprep.subr.mxu0 0.0
  %123 = vmatpush2.msra.mxu0 0.0
  %124 = vmatprep.subr.mxu0 0.0
  %125 = vmatpush2.msra.mxu0 0.0
  %126 = vmatprep.subr.mxu0 0.0
  %127 = vmatpush2.msra.mxu0 0.0
  %128 = vmatprep.subr.mxu0 0.0
  %129 = vmatpush2.msra.mxu0 0.0
  %130 = vmatprep.mubr.f32.mxu0 0.0
  %131 = vmatmul.mubr.f32.gmra.mxu0 %v55
  %v132 = vpop.f32.mrf.mxu0
  %v133 = vadd.f32 0.0, %v132
  %v134 = vpop.f32.mrf.mxu0
  %135 = vmatprep.mubr.f32.mxu0 0.0
  %136 = vmatmul.mubr.f32.gmra.mxu0 %v58
  %v137 = vpop.f32.mrf.mxu0
  %v138 = vadd.f32 0.0, %v137
  %v139 = vpop.f32.mrf.mxu0
  %140 = vmatprep.mubr.f32.mxu0 0.0
  %141 = vmatmul.mubr.f32.gmra.mxu0 %v61
  %v142 = vpop.f32.mrf.mxu0
  %v143 = vadd.f32 0.0, %v142
  %v144 = vpop.f32.mrf.mxu0
  %145 = vmatprep.mubr.f32.mxu0 0.0
  %146 = vmatmul.mubr.f32.gmra.mxu0 %v64
  %v147 = vpop.f32.mrf.mxu0
  %v148 = vadd.f32 0.0, %v147
  %v149 = vpop.f32.mrf.mxu0
  %150 = vdwg.mxu0
  %v151 = vld [vmem:[%s3] sm:$0xff]
  %v152 = vld [vmem:[%s3 + $0x8] sm:$0xff]
  %v153 = vld [vmem:[%s3 + $0x10] sm:$0xff]
  %v154 = vld [vmem:[%s3 + $0x18] sm:$0xff]
  %v155 = vld [vmem:[%s3 + $0x20] sm:$0xff]
  %v156 = vld [vmem:[%s3 + $0x28] sm:$0xff]
  %v157 = vld [vmem:[%s3 + $0x30] sm:$0xff]
  %v158 = vld [vmem:[%s3 + $0x38] sm:$0xff]
  %vm159 = vcmask 523264
  %v161 = vsel %vm159, %v133, 0
  %v164 = vsel %vm159, %v138, 0
  %v167 = vsel %vm159, %v143, 0
  %v170 = vsel %vm159, %v148, 0
  %172 = vmatprep.subr.mxu0 0.0
  %173 = vmatpush1.msra.mxu0 0.0
  %174 = vmatprep.subr.mxu0 0.0
  %175 = vmatpush1.msra.mxu0 0.0
  %176 = vmatprep.subr.mxu0 0.0
  %177 = vmatpush1.msra.mxu0 0.0
  %178 = vmatprep.subr.mxu0 0.0
  %179 = vmatpush1.msra.mxu0 0.0
  %180 = vmatprep.subr.mxu0 0.0
  %181 = vmatpush1.msra.mxu0 0.0
  %182 = vmatprep.subr.mxu0 0.0
  %183 = vmatpush1.msra.mxu0 0.0
  %184 = vmatprep.subr.mxu0 0.0
  %185 = vmatpush1.msra.mxu0 0.0
  %186 = vmatprep.subr.mxu0 0.0
  %187 = vmatpush1.msra.mxu0 0.0
  %188 = vmatprep.subr.mxu0 0.0
  %189 = vmatpush1.msra.mxu0 %v158
  %190 = vmatprep.subr.mxu0 0.0
  %191 = vmatpush1.msra.mxu0 %v157
  %192 = vmatprep.subr.mxu0 0.0
  %193 = vmatpush1.msra.mxu0 %v156
  %194 = vmatprep.subr.mxu0 0.0
  %195 = vmatpush1.msra.mxu0 %v155
  %196 = vmatprep.subr.mxu0 0.0
  %197 = vmatpush1.msra.mxu0 %v154
  %198 = vmatprep.subr.mxu0 0.0
  %199 = vmatpush1.msra.mxu0 %v153
  %200 = vmatprep.subr.mxu0 0.0
  %201 = vmatpush1.msra.mxu0 %v152
  %202 = vmatprep.subr.mxu0 0.0
  %203 = vmatpush1.msra.mxu0 %v151
  %204 = vmatprep.subr.mxu0 0.0
  %205 = vmatpush2.msra.mxu0 0.0
  %206 = vmatprep.subr.mxu0 0.0
  %207 = vmatpush2.msra.mxu0 0.0
  %208 = vmatprep.subr.mxu0 0.0
  %209 = vmatpush2.msra.mxu0 0.0
  %210 = vmatprep.subr.mxu0 0.0
  %211 = vmatpush2.msra.mxu0 0.0
  %212 = vmatprep.subr.mxu0 0.0
  %213 = vmatpush2.msra.mxu0 0.0
  %214 = vmatprep.subr.mxu0 0.0
  %215 = vmatpush2.msra.mxu0 0.0
  %216 = vmatprep.subr.mxu0 0.0
  %217 = vmatpush2.msra.mxu0 0.0
  %218 = vmatprep.subr.mxu0 0.0
  %219 = vmatpush2.msra.mxu0 0.0
  %220 = vmatprep.subr.mxu0 0.0
  %221 = vmatpush2.msra.mxu0 0.0
  %222 = vmatprep.subr.mxu0 0.0
  %223 = vmatpush2.msra.mxu0 0.0
  %224 = vmatprep.subr.mxu0 0.0
  %225 = vmatpush2.msra.mxu0 0.0
  %226 = vmatprep.subr.mxu0 0.0
  %227 = vmatpush2.msra.mxu0 0.0
  %228 = vmatprep.subr.mxu0 0.0
  %229 = vmatpush2.msra.mxu0 0.0
  %230 = vmatprep.subr.mxu0 0.0
  %231 = vmatpush2.msra.mxu0 0.0
  %232 = vmatprep.subr.mxu0 0.0
  %233 = vmatpush2.msra.mxu0 0.0
  %234 = vmatprep.subr.mxu0 0.0
  %235 = vmatpush2.msra.mxu0 0.0
  %236 = vmatprep.mubr.f32.mxu0 0.0
  %237 = vmatmul.mubr.f32.gmra.mxu0 %v161
  %v238 = vpop.f32.mrf.mxu0
  %v239 = vadd.f32 0.0, %v238
  %v240 = vpop.f32.mrf.mxu0
  %241 = vmatprep.mubr.f32.mxu0 0.0
  %242 = vmatmul.mubr.f32.gmra.mxu0 %v164
  %v243 = vpop.f32.mrf.mxu0
  %v244 = vadd.f32 0.0, %v243
  %v245 = vpop.f32.mrf.mxu0
  %246 = vmatprep.mubr.f32.mxu0 0.0
  %247 = vmatmul.mubr.f32.gmra.mxu0 %v167
  %v248 = vpop.f32.mrf.mxu0
  %v249 = vadd.f32 0.0, %v248
  %v250 = vpop.f32.mrf.mxu0
  %251 = vmatprep.mubr.f32.mxu0 0.0
  %252 = vmatmul.mubr.f32.gmra.mxu0 %v170
  %v253 = vpop.f32.mrf.mxu0
  %v254 = vadd.f32 0.0, %v253
  %v255 = vpop.f32.mrf.mxu0
  %256 = vdwg.mxu0
  %v258 = vlaneseq
  %v259 = vshrl.u32 %v258, 7
  %v260 = vsub.s32 0, %v259
  %v261 = vrot.slane %v48, %v260
  %v263 = vadd.f32 %v261, %v239
  %v264 = vadd.f32 %v261, %v244
  %v265 = vadd.f32 %v261, %v249
  %v266 = vadd.f32 %v261, %v254
  %s267 = scalar_lea.vmem %s1, 32
  %v268 = vld [vmem:[%s267] sm:$0xff]
  %v269 = vld [vmem:[%s267 + $0x8] sm:$0xff]
  %v270 = vld [vmem:[%s267 + $0x10] sm:$0xff]
  %v271 = vld [vmem:[%s267 + $0x18] sm:$0xff]
  %v273 = vsel %vm53, %v268, 0
  %v276 = vsel %vm53, %v269, 0
  %v279 = vsel %vm53, %v270, 0
  %v282 = vsel %vm53, %v271, 0
  %284 = vmatprep.subr.mxu0 0.0
  %285 = vmatpush1.msra.mxu0 0.0
  %286 = vmatprep.subr.mxu0 0.0
  %287 = vmatpush1.msra.mxu0 0.0
  %288 = vmatprep.subr.mxu0 0.0
  %289 = vmatpush1.msra.mxu0 0.0
  %290 = vmatprep.subr.mxu0 0.0
  %291 = vmatpush1.msra.mxu0 0.0
  %292 = vmatprep.subr.mxu0 0.0
  %293 = vmatpush1.msra.mxu0 0.0
  %294 = vmatprep.subr.mxu0 0.0
  %295 = vmatpush1.msra.mxu0 0.0
  %296 = vmatprep.subr.mxu0 0.0
  %297 = vmatpush1.msra.mxu0 0.0
  %298 = vmatprep.subr.mxu0 0.0
  %299 = vmatpush1.msra.mxu0 0.0
  %300 = vmatprep.subr.mxu0 0.0
  %301 = vmatpush1.msra.mxu0 0.0
  %302 = vmatprep.subr.mxu0 0.0
  %303 = vmatpush1.msra.mxu0 0.0
  %304 = vmatprep.subr.mxu0 0.0
  %305 = vmatpush1.msra.mxu0 0.0
  %306 = vmatprep.subr.mxu0 0.0
  %307 = vmatpush1.msra.mxu0 0.0
  %308 = vmatprep.subr.mxu0 0.0
  %309 = vmatpush1.msra.mxu0 %v47
  %310 = vmatprep.subr.mxu0 0.0
  %311 = vmatpush1.msra.mxu0 %v46
  %312 = vmatprep.subr.mxu0 0.0
  %313 = vmatpush1.msra.mxu0 %v45
  %314 = vmatprep.subr.mxu0 0.0
  %315 = vmatpush1.msra.mxu0 %v44
  %316 = vmatprep.subr.mxu0 0.0
  %317 = vmatpush2.msra.mxu0 0.0
  %318 = vmatprep.subr.mxu0 0.0
  %319 = vmatpush2.msra.mxu0 0.0
  %320 = vmatprep.subr.mxu0 0.0
  %321 = vmatpush2.msra.mxu0 0.0
  %322 = vmatprep.subr.mxu0 0.0
  %323 = vmatpush2.msra.mxu0 0.0
  %324 = vmatprep.subr.mxu0 0.0
  %325 = vmatpush2.msra.mxu0 0.0
  %326 = vmatprep.subr.mxu0 0.0
  %327 = vmatpush2.msra.mxu0 0.0
  %328 = vmatprep.subr.mxu0 0.0
  %329 = vmatpush2.msra.mxu0 0.0
  %330 = vmatprep.subr.mxu0 0.0
  %331 = vmatpush2.msra.mxu0 0.0
  %332 = vmatprep.subr.mxu0 0.0
  %333 = vmatpush2.msra.mxu0 0.0
  %334 = vmatprep.subr.mxu0 0.0
  %335 = vmatpush2.msra.mxu0 0.0
  %336 = vmatprep.subr.mxu0 0.0
  %337 = vmatpush2.msra.mxu0 0.0
  %338 = vmatprep.subr.mxu0 0.0
  %339 = vmatpush2.msra.mxu0 0.0
  %340 = vmatprep.subr.mxu0 0.0
  %341 = vmatpush2.msra.mxu0 0.0
  %342 = vmatprep.subr.mxu0 0.0
  %343 = vmatpush2.msra.mxu0 0.0
  %344 = vmatprep.subr.mxu0 0.0
  %345 = vmatpush2.msra.mxu0 0.0
  %346 = vmatprep.subr.mxu0 0.0
  %347 = vmatpush2.msra.mxu0 0.0
  %348 = vmatprep.mubr.f32.mxu0 0.0
  %349 = vmatmul.mubr.f32.gmra.mxu0 %v273
  %v350 = vpop.f32.mrf.mxu0
  %v351 = vadd.f32 0.0, %v350
  %v352 = vpop.f32.mrf.mxu0
  %353 = vmatprep.mubr.f32.mxu0 0.0
  %354 = vmatmul.mubr.f32.gmra.mxu0 %v276
  %v355 = vpop.f32.mrf.mxu0
  %v356 = vadd.f32 0.0, %v355
  %v357 = vpop.f32.mrf.mxu0
  %358 = vmatprep.mubr.f32.mxu0 0.0
  %359 = vmatmul.mubr.f32.gmra.mxu0 %v279
  %v360 = vpop.f32.mrf.mxu0
  %v361 = vadd.f32 0.0, %v360
  %v362 = vpop.f32.mrf.mxu0
  %363 = vmatprep.mubr.f32.mxu0 0.0
  %364 = vmatmul.mubr.f32.gmra.mxu0 %v282
  %v365 = vpop.f32.mrf.mxu0
  %v366 = vadd.f32 0.0, %v365
  %v367 = vpop.f32.mrf.mxu0
  %368 = vdwg.mxu0
  %s369 = scalar_lea.vmem %s3, 64
  %v370 = vld [vmem:[%s369] sm:$0xff]
  %v371 = vld [vmem:[%s369 + $0x8] sm:$0xff]
  %v372 = vld [vmem:[%s369 + $0x10] sm:$0xff]
  %v373 = vld [vmem:[%s369 + $0x18] sm:$0xff]
  %v374 = vld [vmem:[%s369 + $0x20] sm:$0xff]
  %v375 = vld [vmem:[%s369 + $0x28] sm:$0xff]
  %v376 = vld [vmem:[%s369 + $0x30] sm:$0xff]
  %v377 = vld [vmem:[%s369 + $0x38] sm:$0xff]
  %v379 = vsel %vm159, %v351, 0
  %v382 = vsel %vm159, %v356, 0
  %v385 = vsel %vm159, %v361, 0
  %v388 = vsel %vm159, %v366, 0
  %390 = vmatprep.subr.mxu0 0.0
  %391 = vmatpush1.msra.mxu0 0.0
  %392 = vmatprep.subr.mxu0 0.0
  %393 = vmatpush1.msra.mxu0 0.0
  %394 = vmatprep.subr.mxu0 0.0
  %395 = vmatpush1.msra.mxu0 0.0
  %396 = vmatprep.subr.mxu0 0.0
  %397 = vmatpush1.msra.mxu0 0.0
  %398 = vmatprep.subr.mxu0 0.0
  %399 = vmatpush1.msra.mxu0 0.0
  %400 = vmatprep.subr.mxu0 0.0
  %401 = vmatpush1.msra.mxu0 0.0
  %402 = vmatprep.subr.mxu0 0.0
  %403 = vmatpush1.msra.mxu0 0.0
  %404 = vmatprep.subr.mxu0 0.0
  %405 = vmatpush1.msra.mxu0 0.0
  %406 = vmatprep.subr.mxu0 0.0
  %407 = vmatpush1.msra.mxu0 %v377
  %408 = vmatprep.subr.mxu0 0.0
  %409 = vmatpush1.msra.mxu0 %v376
  %410 = vmatprep.subr.mxu0 0.0
  %411 = vmatpush1.msra.mxu0 %v375
  %412 = vmatprep.subr.mxu0 0.0
  %413 = vmatpush1.msra.mxu0 %v374
  %414 = vmatprep.subr.mxu0 0.0
  %415 = vmatpush1.msra.mxu0 %v373
  %416 = vmatprep.subr.mxu0 0.0
  %417 = vmatpush1.msra.mxu0 %v372
  %418 = vmatprep.subr.mxu0 0.0
  %419 = vmatpush1.msra.mxu0 %v371
  %420 = vmatprep.subr.mxu0 0.0
  %421 = vmatpush1.msra.mxu0 %v370
  %422 = vmatprep.subr.mxu0 0.0
  %423 = vmatpush2.msra.mxu0 0.0
  %424 = vmatprep.subr.mxu0 0.0
  %425 = vmatpush2.msra.mxu0 0.0
  %426 = vmatprep.subr.mxu0 0.0
  %427 = vmatpush2.msra.mxu0 0.0
  %428 = vmatprep.subr.mxu0 0.0
  %429 = vmatpush2.msra.mxu0 0.0
  %430 = vmatprep.subr.mxu0 0.0
  %431 = vmatpush2.msra.mxu0 0.0
  %432 = vmatprep.subr.mxu0 0.0
  %433 = vmatpush2.msra.mxu0 0.0
  %434 = vmatprep.subr.mxu0 0.0
  %435 = vmatpush2.msra.mxu0 0.0
  %436 = vmatprep.subr.mxu0 0.0
  %437 = vmatpush2.msra.mxu0 0.0
  %438 = vmatprep.subr.mxu0 0.0
  %439 = vmatpush2.msra.mxu0 0.0
  %440 = vmatprep.subr.mxu0 0.0
  %441 = vmatpush2.msra.mxu0 0.0
  %442 = vmatprep.subr.mxu0 0.0
  %443 = vmatpush2.msra.mxu0 0.0
  %444 = vmatprep.subr.mxu0 0.0
  %445 = vmatpush2.msra.mxu0 0.0
  %446 = vmatprep.subr.mxu0 0.0
  %447 = vmatpush2.msra.mxu0 0.0
  %448 = vmatprep.subr.mxu0 0.0
  %449 = vmatpush2.msra.mxu0 0.0
  %450 = vmatprep.subr.mxu0 0.0
  %451 = vmatpush2.msra.mxu0 0.0
  %452 = vmatprep.subr.mxu0 0.0
  %453 = vmatpush2.msra.mxu0 0.0
  %454 = vmatprep.mubr.f32.mxu0 0.0
  %455 = vmatmul.mubr.f32.gmra.mxu0 %v379
  %v456 = vpop.f32.mrf.mxu0
  %v457 = vadd.f32 0.0, %v456
  %v458 = vpop.f32.mrf.mxu0
  %459 = vmatprep.mubr.f32.mxu0 0.0
  %460 = vmatmul.mubr.f32.gmra.mxu0 %v382
  %v461 = vpop.f32.mrf.mxu0
  %v462 = vadd.f32 0.0, %v461
  %v463 = vpop.f32.mrf.mxu0
  %464 = vmatprep.mubr.f32.mxu0 0.0
  %465 = vmatmul.mubr.f32.gmra.mxu0 %v385
  %v466 = vpop.f32.mrf.mxu0
  %v467 = vadd.f32 0.0, %v466
  %v468 = vpop.f32.mrf.mxu0
  %469 = vmatprep.mubr.f32.mxu0 0.0
  %470 = vmatmul.mubr.f32.gmra.mxu0 %v388
  %v471 = vpop.f32.mrf.mxu0
  %v472 = vadd.f32 0.0, %v471
  %v473 = vpop.f32.mrf.mxu0
  %474 = vdwg.mxu0
  %v475 = vadd.f32 %v263, %v457
  %v476 = vadd.f32 %v264, %v462
  %v477 = vadd.f32 %v265, %v467
  %v478 = vadd.f32 %v266, %v472
  %s479 = scalar_lea.vmem %s1, 64
  %v480 = vld [vmem:[%s479] sm:$0xff]
  %v481 = vld [vmem:[%s479 + $0x8] sm:$0xff]
  %v482 = vld [vmem:[%s479 + $0x10] sm:$0xff]
  %v483 = vld [vmem:[%s479 + $0x18] sm:$0xff]
  %v485 = vsel %vm53, %v480, 0
  %v488 = vsel %vm53, %v481, 0
  %v491 = vsel %vm53, %v482, 0
  %v494 = vsel %vm53, %v483, 0
  %496 = vmatprep.subr.mxu0 0.0
  %497 = vmatpush1.msra.mxu0 0.0
  %498 = vmatprep.subr.mxu0 0.0
  %499 = vmatpush1.msra.mxu0 0.0
  %500 = vmatprep.subr.mxu0 0.0
  %501 = vmatpush1.msra.mxu0 0.0
  %502 = vmatprep.subr.mxu0 0.0
  %503 = vmatpush1.msra.mxu0 0.0
  %504 = vmatprep.subr.mxu0 0.0
  %505 = vmatpush1.msra.mxu0 0.0
  %506 = vmatprep.subr.mxu0 0.0
  %507 = vmatpush1.msra.mxu0 0.0
  %508 = vmatprep.subr.mxu0 0.0
  %509 = vmatpush1.msra.mxu0 0.0
  %510 = vmatprep.subr.mxu0 0.0
  %511 = vmatpush1.msra.mxu0 0.0
  %512 = vmatprep.subr.mxu0 0.0
  %513 = vmatpush1.msra.mxu0 0.0
  %514 = vmatprep.subr.mxu0 0.0
  %515 = vmatpush1.msra.mxu0 0.0
  %516 = vmatprep.subr.mxu0 0.0
  %517 = vmatpush1.msra.mxu0 0.0
  %518 = vmatprep.subr.mxu0 0.0
  %519 = vmatpush1.msra.mxu0 0.0
  %520 = vmatprep.subr.mxu0 0.0
  %521 = vmatpush1.msra.mxu0 %v47
  %522 = vmatprep.subr.mxu0 0.0
  %523 = vmatpush1.msra.mxu0 %v46
  %524 = vmatprep.subr.mxu0 0.0
  %525 = vmatpush1.msra.mxu0 %v45
  %526 = vmatprep.subr.mxu0 0.0
  %527 = vmatpush1.msra.mxu0 %v44
  %528 = vmatprep.subr.mxu0 0.0
  %529 = vmatpush2.msra.mxu0 0.0
  %530 = vmatprep.subr.mxu0 0.0
  %531 = vmatpush2.msra.mxu0 0.0
  %532 = vmatprep.subr.mxu0 0.0
  %533 = vmatpush2.msra.mxu0 0.0
  %534 = vmatprep.subr.mxu0 0.0
  %535 = vmatpush2.msra.mxu0 0.0
  %536 = vmatprep.subr.mxu0 0.0
  %537 = vmatpush2.msra.mxu0 0.0
  %538 = vmatprep.subr.mxu0 0.0
  %539 = vmatpush2.msra.mxu0 0.0
  %540 = vmatprep.subr.mxu0 0.0
  %541 = vmatpush2.msra.mxu0 0.0
  %542 = vmatprep.subr.mxu0 0.0
  %543 = vmatpush2.msra.mxu0 0.0
  %544 = vmatprep.subr.mxu0 0.0
  %545 = vmatpush2.msra.mxu0 0.0
  %546 = vmatprep.subr.mxu0 0.0
  %547 = vmatpush2.msra.mxu0 0.0
  %548 = vmatprep.subr.mxu0 0.0
  %549 = vmatpush2.msra.mxu0 0.0
  %550 = vmatprep.subr.mxu0 0.0
  %551 = vmatpush2.msra.mxu0 0.0
  %552 = vmatprep.subr.mxu0 0.0
  %553 = vmatpush2.msra.mxu0 0.0
  %554 = vmatprep.subr.mxu0 0.0
  %555 = vmatpush2.msra.mxu0 0.0
  %556 = vmatprep.subr.mxu0 0.0
  %557 = vmatpush2.msra.mxu0 0.0
  %558 = vmatprep.subr.mxu0 0.0
  %559 = vmatpush2.msra.mxu0 0.0
  %560 = vmatprep.mubr.f32.mxu0 0.0
  %561 = vmatmul.mubr.f32.gmra.mxu0 %v485
  %v562 = vpop.f32.mrf.mxu0
  %v563 = vadd.f32 0.0, %v562
  %v564 = vpop.f32.mrf.mxu0
  %565 = vmatprep.mubr.f32.mxu0 0.0
  %566 = vmatmul.mubr.f32.gmra.mxu0 %v488
  %v567 = vpop.f32.mrf.mxu0
  %v568 = vadd.f32 0.0, %v567
  %v569 = vpop.f32.mrf.mxu0
  %570 = vmatprep.mubr.f32.mxu0 0.0
  %571 = vmatmul.mubr.f32.gmra.mxu0 %v491
  %v572 = vpop.f32.mrf.mxu0
  %v573 = vadd.f32 0.0, %v572
  %v574 = vpop.f32.mrf.mxu0
  %575 = vmatprep.mubr.f32.mxu0 0.0
  %576 = vmatmul.mubr.f32.gmra.mxu0 %v494
  %v577 = vpop.f32.mrf.mxu0
  %v578 = vadd.f32 0.0, %v577
  %v579 = vpop.f32.mrf.mxu0
  %580 = vdwg.mxu0
  %s581 = scalar_lea.vmem %s3, 128
  %v582 = vld [vmem:[%s581] sm:$0xff]
  %v583 = vld [vmem:[%s581 + $0x8] sm:$0xff]
  %v584 = vld [vmem:[%s581 + $0x10] sm:$0xff]
  %v585 = vld [vmem:[%s581 + $0x18] sm:$0xff]
  %v586 = vld [vmem:[%s581 + $0x20] sm:$0xff]
  %v587 = vld [vmem:[%s581 + $0x28] sm:$0xff]
  %v588 = vld [vmem:[%s581 + $0x30] sm:$0xff]
  %v589 = vld [vmem:[%s581 + $0x38] sm:$0xff]
  %v591 = vsel %vm159, %v563, 0
  %v594 = vsel %vm159, %v568, 0
  %v597 = vsel %vm159, %v573, 0
  %v600 = vsel %vm159, %v578, 0
  %602 = vmatprep.subr.mxu0 0.0
  %603 = vmatpush1.msra.mxu0 0.0
  %604 = vmatprep.subr.mxu0 0.0
  %605 = vmatpush1.msra.mxu0 0.0
  %606 = vmatprep.subr.mxu0 0.0
  %607 = vmatpush1.msra.mxu0 0.0
  %608 = vmatprep.subr.mxu0 0.0
  %609 = vmatpush1.msra.mxu0 0.0
  %610 = vmatprep.subr.mxu0 0.0
  %611 = vmatpush1.msra.mxu0 0.0
  %612 = vmatprep.subr.mxu0 0.0
  %613 = vmatpush1.msra.mxu0 0.0
  %614 = vmatprep.subr.mxu0 0.0
  %615 = vmatpush1.msra.mxu0 0.0
  %616 = vmatprep.subr.mxu0 0.0
  %617 = vmatpush1.msra.mxu0 0.0
  %618 = vmatprep.subr.mxu0 0.0
  %619 = vmatpush1.msra.mxu0 %v589
  %620 = vmatprep.subr.mxu0 0.0
  %621 = vmatpush1.msra.mxu0 %v588
  %622 = vmatprep.subr.mxu0 0.0
  %623 = vmatpush1.msra.mxu0 %v587
  %624 = vmatprep.subr.mxu0 0.0
  %625 = vmatpush1.msra.mxu0 %v586
  %626 = vmatprep.subr.mxu0 0.0
  %627 = vmatpush1.msra.mxu0 %v585
  %628 = vmatprep.subr.mxu0 0.0
  %629 = vmatpush1.msra.mxu0 %v584
  %630 = vmatprep.subr.mxu0 0.0
  %631 = vmatpush1.msra.mxu0 %v583
  %632 = vmatprep.subr.mxu0 0.0
  %633 = vmatpush1.msra.mxu0 %v582
  %634 = vmatprep.subr.mxu0 0.0
  %635 = vmatpush2.msra.mxu0 0.0
  %636 = vmatprep.subr.mxu0 0.0
  %637 = vmatpush2.msra.mxu0 0.0
  %638 = vmatprep.subr.mxu0 0.0
  %639 = vmatpush2.msra.mxu0 0.0
  %640 = vmatprep.subr.mxu0 0.0
  %641 = vmatpush2.msra.mxu0 0.0
  %642 = vmatprep.subr.mxu0 0.0
  %643 = vmatpush2.msra.mxu0 0.0
  %644 = vmatprep.subr.mxu0 0.0
  %645 = vmatpush2.msra.mxu0 0.0
  %646 = vmatprep.subr.mxu0 0.0
  %647 = vmatpush2.msra.mxu0 0.0
  %648 = vmatprep.subr.mxu0 0.0
  %649 = vmatpush2.msra.mxu0 0.0
  %650 = vmatprep.subr.mxu0 0.0
  %651 = vmatpush2.msra.mxu0 0.0
  %652 = vmatprep.subr.mxu0 0.0
  %653 = vmatpush2.msra.mxu0 0.0
  %654 = vmatprep.subr.mxu0 0.0
  %655 = vmatpush2.msra.mxu0 0.0
  %656 = vmatprep.subr.mxu0 0.0
  %657 = vmatpush2.msra.mxu0 0.0
  %658 = vmatprep.subr.mxu0 0.0
  %659 = vmatpush2.msra.mxu0 0.0
  %660 = vmatprep.subr.mxu0 0.0
  %661 = vmatpush2.msra.mxu0 0.0
  %662 = vmatprep.subr.mxu0 0.0
  %663 = vmatpush2.msra.mxu0 0.0
  %664 = vmatprep.subr.mxu0 0.0
  %665 = vmatpush2.msra.mxu0 0.0
  %666 = vmatprep.mubr.f32.mxu0 0.0
  %667 = vmatmul.mubr.f32.gmra.mxu0 %v591
  %v668 = vpop.f32.mrf.mxu0
  %v669 = vadd.f32 0.0, %v668
  %v670 = vpop.f32.mrf.mxu0
  %671 = vmatprep.mubr.f32.mxu0 0.0
  %672 = vmatmul.mubr.f32.gmra.mxu0 %v594
  %v673 = vpop.f32.mrf.mxu0
  %v674 = vadd.f32 0.0, %v673
  %v675 = vpop.f32.mrf.mxu0
  %676 = vmatprep.mubr.f32.mxu0 0.0
  %677 = vmatmul.mubr.f32.gmra.mxu0 %v597
  %v678 = vpop.f32.mrf.mxu0
  %v679 = vadd.f32 0.0, %v678
  %v680 = vpop.f32.mrf.mxu0
  %681 = vmatprep.mubr.f32.mxu0 0.0
  %682 = vmatmul.mubr.f32.gmra.mxu0 %v600
  %v683 = vpop.f32.mrf.mxu0
  %v684 = vadd.f32 0.0, %v683
  %v685 = vpop.f32.mrf.mxu0
  %686 = vdwg.mxu0
  %v687 = vadd.f32 %v475, %v669
  %v688 = vadd.f32 %v476, %v674
  %v689 = vadd.f32 %v477, %v679
  %v690 = vadd.f32 %v478, %v684
  %v691 = vld [vmem:[%s9] sm:$0x1]
  %v692 = vld [vmem:[%s10] sm:$0x1]
  %v693 = vlaneseq
  %v694 = vshrl.u32 %v693, 7
  %v695 = vadd.s32 %v694, 8
  %v696 = vadd.s32 %v694, 16
  %v697 = vadd.s32 %v694, 24
  %v698 = vadd.s32 %v694, 32
  %v699 = vadd.s32 %v694, 40
  %v700 = vadd.s32 %v694, 48
  %v701 = vadd.s32 %v694, 56
  %v702 = vlaneseq
  %v703 = vand.u32 %v702, 127
  %vm704 = vcmp.lt.s32.totalorder %v694, 0
  %v705 = vsub.s32 0, %v694
  %v706 = vsel %vm704, %v705, %v694
  %v707 = vshrl.u32 %v706, 2
  %v708 = vand.u32 %v706, 3
  %v709 = vsub.s32 0, %v708
  %v710 = vsel %vm704, %v709, %v708
  %vm711 = vcmp.lt.s32.totalorder %v695, 0
  %v712 = vsub.s32 0, %v695
  %v713 = vsel %vm711, %v712, %v695
  %v714 = vshrl.u32 %v713, 2
  %v715 = vand.u32 %v713, 3
  %v716 = vsub.s32 0, %v715
  %v717 = vsel %vm711, %v716, %v715
  %vm718 = vcmp.lt.s32.totalorder %v696, 0
  %v719 = vsub.s32 0, %v696
  %v720 = vsel %vm718, %v719, %v696
  %v721 = vshrl.u32 %v720, 2
  %v722 = vand.u32 %v720, 3
  %v723 = vsub.s32 0, %v722
  %v724 = vsel %vm718, %v723, %v722
  %vm725 = vcmp.lt.s32.totalorder %v697, 0
  %v726 = vsub.s32 0, %v697
  %v727 = vsel %vm725, %v726, %v697
  %v728 = vshrl.u32 %v727, 2
  %v729 = vand.u32 %v727, 3
  %v730 = vsub.s32 0, %v729
  %v731 = vsel %vm725, %v730, %v729
  %vm732 = vcmp.lt.s32.totalorder %v698, 0
  %v733 = vsub.s32 0, %v698
  %v734 = vsel %vm732, %v733, %v698
  %v735 = vshrl.u32 %v734, 2
  %v736 = vand.u32 %v734, 3
  %v737 = vsub.s32 0, %v736
  %v738 = vsel %vm732, %v737, %v736
  %vm739 = vcmp.lt.s32.totalorder %v699, 0
  %v740 = vsub.s32 0, %v699
  %v741 = vsel %vm739, %v740, %v699
  %v742 = vshrl.u32 %v741, 2
  %v743 = vand.u32 %v741, 3
  %v744 = vsub.s32 0, %v743
  %v745 = vsel %vm739, %v744, %v743
  %vm746 = vcmp.lt.s32.totalorder %v700, 0
  %v747 = vsub.s32 0, %v700
  %v748 = vsel %vm746, %v747, %v700
  %v749 = vshrl.u32 %v748, 2
  %v750 = vand.u32 %v748, 3
  %v751 = vsub.s32 0, %v750
  %v752 = vsel %vm746, %v751, %v750
  %vm753 = vcmp.lt.s32.totalorder %v701, 0
  %v754 = vsub.s32 0, %v701
  %v755 = vsel %vm753, %v754, %v701
  %v756 = vshrl.u32 %v755, 2
  %v757 = vand.u32 %v755, 3
  %v758 = vsub.s32 0, %v757
  %v759 = vsel %vm753, %v758, %v757
  %vm760 = vcmp.ne.s32.totalorder %v710, 0
  %vm761 = vcmp.ne.s32.totalorder %v717, 0
  %vm762 = vcmp.ne.s32.totalorder %v724, 0
  %vm763 = vcmp.ne.s32.totalorder %v731, 0
  %vm764 = vcmp.ne.s32.totalorder %v738, 0
  %vm765 = vcmp.ne.s32.totalorder %v745, 0
  %vm766 = vcmp.ne.s32.totalorder %v752, 0
  %vm767 = vcmp.ne.s32.totalorder %v759, 0
  %vm768 = vcmp.lt.s32.totalorder %v710, 0
  %vm769 = vcmp.lt.s32.totalorder %v717, 0
  %vm770 = vcmp.lt.s32.totalorder %v724, 0
  %vm771 = vcmp.lt.s32.totalorder %v731, 0
  %vm772 = vcmp.lt.s32.totalorder %v738, 0
  %vm773 = vcmp.lt.s32.totalorder %v745, 0
  %vm774 = vcmp.lt.s32.totalorder %v752, 0
  %vm775 = vcmp.lt.s32.totalorder %v759, 0
  %vm776 = vmand %vm768, %vm760
  %vm777 = vmand %vm769, %vm761
  %vm778 = vmand %vm770, %vm762
  %vm779 = vmand %vm771, %vm763
  %vm780 = vmand %vm772, %vm764
  %vm781 = vmand %vm773, %vm765
  %vm782 = vmand %vm774, %vm766
  %vm783 = vmand %vm775, %vm767
  %v784 = vadd.s32 %v710, 4
  %v785 = vadd.s32 %v717, 4
  %v786 = vadd.s32 %v724, 4
  %v787 = vadd.s32 %v731, 4
  %v788 = vadd.s32 %v738, 4
  %v789 = vadd.s32 %v745, 4
  %v790 = vadd.s32 %v752, 4
  %v791 = vadd.s32 %v759, 4
  %v792 = vsel %vm776, %v784, %v710
  %v793 = vsel %vm777, %v785, %v717
  %v794 = vsel %vm778, %v786, %v724
  %v795 = vsel %vm779, %v787, %v731
  %v796 = vsel %vm780, %v788, %v738
  %v797 = vsel %vm781, %v789, %v745
  %v798 = vsel %vm782, %v790, %v752
  %v799 = vsel %vm783, %v791, %v759
  %vm800 = vcmp.eq.s32.totalorder %v792, %v703
  %vm801 = vcmp.eq.s32.totalorder %v793, %v703
  %vm802 = vcmp.eq.s32.totalorder %v794, %v703
  %vm803 = vcmp.eq.s32.totalorder %v795, %v703
  %vm804 = vcmp.eq.s32.totalorder %v796, %v703
  %vm805 = vcmp.eq.s32.totalorder %v797, %v703
  %vm806 = vcmp.eq.s32.totalorder %v798, %v703
  %vm807 = vcmp.eq.s32.totalorder %v799, %v703
  %v808 = vsel %vm800, 1, 0
  %v809 = vsel %vm801, 1, 0
  %v810 = vsel %vm802, 1, 0
  %v811 = vsel %vm803, 1, 0
  %v812 = vsel %vm804, 1, 0
  %v813 = vsel %vm805, 1, 0
  %v814 = vsel %vm806, 1, 0
  %v815 = vsel %vm807, 1, 0
  %v816 = vcvt.s32.f32 %v808
  %v817 = vcvt.s32.f32 %v809
  %v818 = vcvt.s32.f32 %v810
  %v819 = vcvt.s32.f32 %v811
  %v820 = vcvt.s32.f32 %v812
  %v821 = vcvt.s32.f32 %v813
  %v822 = vcvt.s32.f32 %v814
  %v823 = vcvt.s32.f32 %v815
  %vm824 = vcmp.lt.s32.totalorder %v703, 0
  %v825 = vsub.s32 0, %v703
  %v826 = vsel %vm824, %v825, %v703
  %v827 = vshrl.u32 %v826, 2
  %v828 = vand.u32 %v826, 3
  %v829 = vsub.s32 0, %v828
  %v830 = vsel %vm824, %v829, %v828
  %vm831 = vcmp.ne.s32.totalorder %v830, 0
  %vm832 = vcmp.lt.s32.totalorder %v830, 0
  %vm833 = vmand %vm832, %vm831
  %v834 = vadd.s32 %v830, 4
  %v835 = vsel %vm833, %v834, %v830
  %vm836 = vcmp.eq.s32.totalorder %v835, %v694
  %v837 = vsel %vm836, 1, 0
  %v838 = vcvt.s32.f32 %v837
  %v839 = vsel %vm159, %v687, 0.0
  %v840 = vsel %vm159, %v688, 0.0
  %v841 = vadd.f32 %v839, %v840
  %v842 = vsel %vm159, %v689, 0.0
  %v843 = vadd.f32 %v841, %v842
  %v844 = vsel %vm159, %v690, 0.0
  %v845 = vadd.f32 %v843, %v844
  %v846 = vrot.slane %v845, 4
  %v847 = vadd.f32 %v845, %v846
  %v848 = vrot.slane %v847, 2
  %v849 = vadd.f32 %v847, %v848
  %v850 = vrot.slane %v849, 1
  %v851 = vadd.f32 %v849, %v850
  %v853 = vsel %vm159, %v851, 0
  %855 = vmatprep.subr.mxu0 0.0
  %856 = vmatpush1.msra.mxu0 0.0
  %857 = vmatprep.subr.mxu0 0.0
  %858 = vmatpush1.msra.mxu0 0.0
  %859 = vmatprep.subr.mxu0 0.0
  %860 = vmatpush1.msra.mxu0 0.0
  %861 = vmatprep.subr.mxu0 0.0
  %862 = vmatpush1.msra.mxu0 0.0
  %863 = vmatprep.subr.mxu0 0.0
  %864 = vmatpush1.msra.mxu0 0.0
  %865 = vmatprep.subr.mxu0 0.0
  %866 = vmatpush1.msra.mxu0 0.0
  %867 = vmatprep.subr.mxu0 0.0
  %868 = vmatpush1.msra.mxu0 0.0
  %869 = vmatprep.subr.mxu0 0.0
  %870 = vmatpush1.msra.mxu0 0.0
  %871 = vmatprep.subr.mxu0 0.0
  %872 = vmatpush1.msra.mxu0 %v823
  %873 = vmatprep.subr.mxu0 0.0
  %874 = vmatpush1.msra.mxu0 %v822
  %875 = vmatprep.subr.mxu0 0.0
  %876 = vmatpush1.msra.mxu0 %v821
  %877 = vmatprep.subr.mxu0 0.0
  %878 = vmatpush1.msra.mxu0 %v820
  %879 = vmatprep.subr.mxu0 0.0
  %880 = vmatpush1.msra.mxu0 %v819
  %881 = vmatprep.subr.mxu0 0.0
  %882 = vmatpush1.msra.mxu0 %v818
  %883 = vmatprep.subr.mxu0 0.0
  %884 = vmatpush1.msra.mxu0 %v817
  %885 = vmatprep.subr.mxu0 0.0
  %886 = vmatpush1.msra.mxu0 %v816
  %887 = vmatprep.subr.mxu0 0.0
  %888 = vmatpush2.msra.mxu0 0.0
  %889 = vmatprep.subr.mxu0 0.0
  %890 = vmatpush2.msra.mxu0 0.0
  %891 = vmatprep.subr.mxu0 0.0
  %892 = vmatpush2.msra.mxu0 0.0
  %893 = vmatprep.subr.mxu0 0.0
  %894 = vmatpush2.msra.mxu0 0.0
  %895 = vmatprep.subr.mxu0 0.0
  %896 = vmatpush2.msra.mxu0 0.0
  %897 = vmatprep.subr.mxu0 0.0
  %898 = vmatpush2.msra.mxu0 0.0
  %899 = vmatprep.subr.mxu0 0.0
  %900 = vmatpush2.msra.mxu0 0.0
  %901 = vmatprep.subr.mxu0 0.0
  %902 = vmatpush2.msra.mxu0 0.0
  %903 = vmatprep.subr.mxu0 0.0
  %904 = vmatpush2.msra.mxu0 0.0
  %905 = vmatprep.subr.mxu0 0.0
  %906 = vmatpush2.msra.mxu0 0.0
  %907 = vmatprep.subr.mxu0 0.0
  %908 = vmatpush2.msra.mxu0 0.0
  %909 = vmatprep.subr.mxu0 0.0
  %910 = vmatpush2.msra.mxu0 0.0
  %911 = vmatprep.subr.mxu0 0.0
  %912 = vmatpush2.msra.mxu0 0.0
  %913 = vmatprep.subr.mxu0 0.0
  %914 = vmatpush2.msra.mxu0 0.0
  %915 = vmatprep.subr.mxu0 0.0
  %916 = vmatpush2.msra.mxu0 0.0
  %917 = vmatprep.subr.mxu0 0.0
  %918 = vmatpush2.msra.mxu0 0.0
  %919 = vmatprep.mubr.f32.mxu0 0.0
  %920 = vmatmul.mubr.f32.gmra.mxu0 %v853
  %v921 = vpop.f32.mrf.mxu0
  %v922 = vadd.f32 0.0, %v921
  %v923 = vpop.f32.mrf.mxu0
  %924 = vdwg.mxu0
  %v925 = vrcp.pop 512.0
  %v926 = vmul.f32 %v922, %v925
  %vm927 = vcmask 31744
  %v929 = vsel %vm927, %v926, 0
  %vm931 = vcmask 1043456
  %v933 = vsel %vm931, %v838, 0
  %935 = vmatprep.subr.mxu0 0.0
  %936 = vmatpush1.msra.mxu0 0.0
  %937 = vmatprep.subr.mxu0 0.0
  %938 = vmatpush1.msra.mxu0 0.0
  %939 = vmatprep.subr.mxu0 0.0
  %940 = vmatpush1.msra.mxu0 0.0
  %941 = vmatprep.subr.mxu0 0.0
  %942 = vmatpush1.msra.mxu0 0.0
  %943 = vmatprep.subr.mxu0 0.0
  %944 = vmatpush1.msra.mxu0 0.0
  %945 = vmatprep.subr.mxu0 0.0
  %946 = vmatpush1.msra.mxu0 0.0
  %947 = vmatprep.subr.mxu0 0.0
  %948 = vmatpush1.msra.mxu0 0.0
  %949 = vmatprep.subr.mxu0 0.0
  %950 = vmatpush1.msra.mxu0 0.0
  %951 = vmatprep.subr.mxu0 0.0
  %952 = vmatpush1.msra.mxu0 0.0
  %953 = vmatprep.subr.mxu0 0.0
  %954 = vmatpush1.msra.mxu0 0.0
  %955 = vmatprep.subr.mxu0 0.0
  %956 = vmatpush1.msra.mxu0 0.0
  %957 = vmatprep.subr.mxu0 0.0
  %958 = vmatpush1.msra.mxu0 0.0
  %959 = vmatprep.subr.mxu0 0.0
  %960 = vmatpush1.msra.mxu0 0.0
  %961 = vmatprep.subr.mxu0 0.0
  %962 = vmatpush1.msra.mxu0 0.0
  %963 = vmatprep.subr.mxu0 0.0
  %964 = vmatpush1.msra.mxu0 0.0
  %965 = vmatprep.subr.mxu0 0.0
  %966 = vmatpush1.msra.mxu0 %v933
  %967 = vmatprep.subr.mxu0 0.0
  %968 = vmatpush2.msra.mxu0 0.0
  %969 = vmatprep.subr.mxu0 0.0
  %970 = vmatpush2.msra.mxu0 0.0
  %971 = vmatprep.subr.mxu0 0.0
  %972 = vmatpush2.msra.mxu0 0.0
  %973 = vmatprep.subr.mxu0 0.0
  %974 = vmatpush2.msra.mxu0 0.0
  %975 = vmatprep.subr.mxu0 0.0
  %976 = vmatpush2.msra.mxu0 0.0
  %977 = vmatprep.subr.mxu0 0.0
  %978 = vmatpush2.msra.mxu0 0.0
  %979 = vmatprep.subr.mxu0 0.0
  %980 = vmatpush2.msra.mxu0 0.0
  %981 = vmatprep.subr.mxu0 0.0
  %982 = vmatpush2.msra.mxu0 0.0
  %983 = vmatprep.subr.mxu0 0.0
  %984 = vmatpush2.msra.mxu0 0.0
  %985 = vmatprep.subr.mxu0 0.0
  %986 = vmatpush2.msra.mxu0 0.0
  %987 = vmatprep.subr.mxu0 0.0
  %988 = vmatpush2.msra.mxu0 0.0
  %989 = vmatprep.subr.mxu0 0.0
  %990 = vmatpush2.msra.mxu0 0.0
  %991 = vmatprep.subr.mxu0 0.0
  %992 = vmatpush2.msra.mxu0 0.0
  %993 = vmatprep.subr.mxu0 0.0
  %994 = vmatpush2.msra.mxu0 0.0
  %995 = vmatprep.subr.mxu0 0.0
  %996 = vmatpush2.msra.mxu0 0.0
  %997 = vmatprep.subr.mxu0 0.0
  %998 = vmatpush2.msra.mxu0 0.0
  %999 = vmatprep.mubr.f32.mxu0 0.0
  %1000 = vmatmul.mubr.f32.gmra.mxu0 %v929
  %v1001 = vpop.f32.mrf.mxu0
  %v1002 = vadd.f32 0.0, %v1001
  %v1003 = vpop.f32.mrf.mxu0
  %1004 = vdwg.mxu0
  %v1005 = vlaneseq
  %v1006 = vshrl.u32 %v1005, 7
  %v1007 = vsub.s32 0, %v1006
  %v1008 = vrot.slane %v1002, %v1007
  %v1009 = vsub.f32 %v687, %v1008
  %v1010 = vsub.f32 %v688, %v1008
  %v1011 = vsub.f32 %v689, %v1008
  %v1012 = vsub.f32 %v690, %v1008
  %v1013 = vmul.f32 %v1009, %v1009
  %v1014 = vmul.f32 %v1010, %v1010
  %v1015 = vmul.f32 %v1011, %v1011
  %v1016 = vmul.f32 %v1012, %v1012
  %v1017 = vsel %vm159, %v1013, 0.0
  %v1018 = vsel %vm159, %v1014, 0.0
  %v1019 = vadd.f32 %v1017, %v1018
  %v1020 = vsel %vm159, %v1015, 0.0
  %v1021 = vadd.f32 %v1019, %v1020
  %v1022 = vsel %vm159, %v1016, 0.0
  %v1023 = vadd.f32 %v1021, %v1022
  %v1024 = vrot.slane %v1023, 4
  %v1025 = vadd.f32 %v1023, %v1024
  %v1026 = vrot.slane %v1025, 2
  %v1027 = vadd.f32 %v1025, %v1026
  %v1028 = vrot.slane %v1027, 1
  %v1029 = vadd.f32 %v1027, %v1028
  %v1031 = vsel %vm159, %v1029, 0
  %1033 = vmatprep.subr.mxu0 0.0
  %1034 = vmatpush1.msra.mxu0 0.0
  %1035 = vmatprep.subr.mxu0 0.0
  %1036 = vmatpush1.msra.mxu0 0.0
  %1037 = vmatprep.subr.mxu0 0.0
  %1038 = vmatpush1.msra.mxu0 0.0
  %1039 = vmatprep.subr.mxu0 0.0
  %1040 = vmatpush1.msra.mxu0 0.0
  %1041 = vmatprep.subr.mxu0 0.0
  %1042 = vmatpush1.msra.mxu0 0.0
  %1043 = vmatprep.subr.mxu0 0.0
  %1044 = vmatpush1.msra.mxu0 0.0
  %1045 = vmatprep.subr.mxu0 0.0
  %1046 = vmatpush1.msra.mxu0 0.0
  %1047 = vmatprep.subr.mxu0 0.0
  %1048 = vmatpush1.msra.mxu0 0.0
  %1049 = vmatprep.subr.mxu0 0.0
  %1050 = vmatpush1.msra.mxu0 %v823
  %1051 = vmatprep.subr.mxu0 0.0
  %1052 = vmatpush1.msra.mxu0 %v822
  %1053 = vmatprep.subr.mxu0 0.0
  %1054 = vmatpush1.msra.mxu0 %v821
  %1055 = vmatprep.subr.mxu0 0.0
  %1056 = vmatpush1.msra.mxu0 %v820
  %1057 = vmatprep.subr.mxu0 0.0
  %1058 = vmatpush1.msra.mxu0 %v819
  %1059 = vmatprep.subr.mxu0 0.0
  %1060 = vmatpush1.msra.mxu0 %v818
  %1061 = vmatprep.subr.mxu0 0.0
  %1062 = vmatpush1.msra.mxu0 %v817
  %1063 = vmatprep.subr.mxu0 0.0
  %1064 = vmatpush1.msra.mxu0 %v816
  %1065 = vmatprep.subr.mxu0 0.0
  %1066 = vmatpush2.msra.mxu0 0.0
  %1067 = vmatprep.subr.mxu0 0.0
  %1068 = vmatpush2.msra.mxu0 0.0
  %1069 = vmatprep.subr.mxu0 0.0
  %1070 = vmatpush2.msra.mxu0 0.0
  %1071 = vmatprep.subr.mxu0 0.0
  %1072 = vmatpush2.msra.mxu0 0.0
  %1073 = vmatprep.subr.mxu0 0.0
  %1074 = vmatpush2.msra.mxu0 0.0
  %1075 = vmatprep.subr.mxu0 0.0
  %1076 = vmatpush2.msra.mxu0 0.0
  %1077 = vmatprep.subr.mxu0 0.0
  %1078 = vmatpush2.msra.mxu0 0.0
  %1079 = vmatprep.subr.mxu0 0.0
  %1080 = vmatpush2.msra.mxu0 0.0
  %1081 = vmatprep.subr.mxu0 0.0
  %1082 = vmatpush2.msra.mxu0 0.0
  %1083 = vmatprep.subr.mxu0 0.0
  %1084 = vmatpush2.msra.mxu0 0.0
  %1085 = vmatprep.subr.mxu0 0.0
  %1086 = vmatpush2.msra.mxu0 0.0
  %1087 = vmatprep.subr.mxu0 0.0
  %1088 = vmatpush2.msra.mxu0 0.0
  %1089 = vmatprep.subr.mxu0 0.0
  %1090 = vmatpush2.msra.mxu0 0.0
  %1091 = vmatprep.subr.mxu0 0.0
  %1092 = vmatpush2.msra.mxu0 0.0
  %1093 = vmatprep.subr.mxu0 0.0
  %1094 = vmatpush2.msra.mxu0 0.0
  %1095 = vmatprep.subr.mxu0 0.0
  %1096 = vmatpush2.msra.mxu0 0.0
  %1097 = vmatprep.mubr.f32.mxu0 0.0
  %1098 = vmatmul.mubr.f32.gmra.mxu0 %v1031
  %v1099 = vpop.f32.mrf.mxu0
  %v1100 = vadd.f32 0.0, %v1099
  %v1101 = vpop.f32.mrf.mxu0
  %1102 = vdwg.mxu0
  %v1103 = vmul.f32 %v1100, %v925
  %v1104 = vadd.f32 %v1103, 1e-05
  %v1105 = vrsqrt.pop %v1104
  %v1106 = vmul.f32 %v691, %v1105
  %v1107 = vmul.f32 %v926, %v1106
  %v1108 = vsub.f32 %v692, %v1107
  %v1110 = vsel %vm927, %v1106, 0
  %1112 = vmatprep.subr.mxu0 0.0
  %1113 = vmatpush1.msra.mxu0 0.0
  %1114 = vmatprep.subr.mxu0 0.0
  %1115 = vmatpush1.msra.mxu0 0.0
  %1116 = vmatprep.subr.mxu0 0.0
  %1117 = vmatpush1.msra.mxu0 0.0
  %1118 = vmatprep.subr.mxu0 0.0
  %1119 = vmatpush1.msra.mxu0 0.0
  %1120 = vmatprep.subr.mxu0 0.0
  %1121 = vmatpush1.msra.mxu0 0.0
  %1122 = vmatprep.subr.mxu0 0.0
  %1123 = vmatpush1.msra.mxu0 0.0
  %1124 = vmatprep.subr.mxu0 0.0
  %1125 = vmatpush1.msra.mxu0 0.0
  %1126 = vmatprep.subr.mxu0 0.0
  %1127 = vmatpush1.msra.mxu0 0.0
  %1128 = vmatprep.subr.mxu0 0.0
  %1129 = vmatpush1.msra.mxu0 0.0
  %1130 = vmatprep.subr.mxu0 0.0
  %1131 = vmatpush1.msra.mxu0 0.0
  %1132 = vmatprep.subr.mxu0 0.0
  %1133 = vmatpush1.msra.mxu0 0.0
  %1134 = vmatprep.subr.mxu0 0.0
  %1135 = vmatpush1.msra.mxu0 0.0
  %1136 = vmatprep.subr.mxu0 0.0
  %1137 = vmatpush1.msra.mxu0 0.0
  %1138 = vmatprep.subr.mxu0 0.0
  %1139 = vmatpush1.msra.mxu0 0.0
  %1140 = vmatprep.subr.mxu0 0.0
  %1141 = vmatpush1.msra.mxu0 0.0
  %1142 = vmatprep.subr.mxu0 0.0
  %1143 = vmatpush1.msra.mxu0 %v933
  %1144 = vmatprep.subr.mxu0 0.0
  %1145 = vmatpush2.msra.mxu0 0.0
  %1146 = vmatprep.subr.mxu0 0.0
  %1147 = vmatpush2.msra.mxu0 0.0
  %1148 = vmatprep.subr.mxu0 0.0
  %1149 = vmatpush2.msra.mxu0 0.0
  %1150 = vmatprep.subr.mxu0 0.0
  %1151 = vmatpush2.msra.mxu0 0.0
  %1152 = vmatprep.subr.mxu0 0.0
  %1153 = vmatpush2.msra.mxu0 0.0
  %1154 = vmatprep.subr.mxu0 0.0
  %1155 = vmatpush2.msra.mxu0 0.0
  %1156 = vmatprep.subr.mxu0 0.0
  %1157 = vmatpush2.msra.mxu0 0.0
  %1158 = vmatprep.subr.mxu0 0.0
  %1159 = vmatpush2.msra.mxu0 0.0
  %1160 = vmatprep.subr.mxu0 0.0
  %1161 = vmatpush2.msra.mxu0 0.0
  %1162 = vmatprep.subr.mxu0 0.0
  %1163 = vmatpush2.msra.mxu0 0.0
  %1164 = vmatprep.subr.mxu0 0.0
  %1165 = vmatpush2.msra.mxu0 0.0
  %1166 = vmatprep.subr.mxu0 0.0
  %1167 = vmatpush2.msra.mxu0 0.0
  %1168 = vmatprep.subr.mxu0 0.0
  %1169 = vmatpush2.msra.mxu0 0.0
  %1170 = vmatprep.subr.mxu0 0.0
  %1171 = vmatpush2.msra.mxu0 0.0
  %1172 = vmatprep.subr.mxu0 0.0
  %1173 = vmatpush2.msra.mxu0 0.0
  %1174 = vmatprep.subr.mxu0 0.0
  %1175 = vmatpush2.msra.mxu0 0.0
  %1176 = vmatprep.mubr.f32.mxu0 0.0
  %1177 = vmatmul.mubr.f32.gmra.mxu0 %v1110
  %v1178 = vpop.f32.mrf.mxu0
  %v1179 = vadd.f32 0.0, %v1178
  %v1180 = vpop.f32.mrf.mxu0
  %1181 = vdwg.mxu0
  %v1183 = vsel %vm927, %v1108, 0
  %1185 = vmatprep.subr.mxu0 0.0
  %1186 = vmatpush1.msra.mxu0 0.0
  %1187 = vmatprep.subr.mxu0 0.0
  %1188 = vmatpush1.msra.mxu0 0.0
  %1189 = vmatprep.subr.mxu0 0.0
  %1190 = vmatpush1.msra.mxu0 0.0
  %1191 = vmatprep.subr.mxu0 0.0
  %1192 = vmatpush1.msra.mxu0 0.0
  %1193 = vmatprep.subr.mxu0 0.0
  %1194 = vmatpush1.msra.mxu0 0.0
  %1195 = vmatprep.subr.mxu0 0.0
  %1196 = vmatpush1.msra.mxu0 0.0
  %1197 = vmatprep.subr.mxu0 0.0
  %1198 = vmatpush1.msra.mxu0 0.0
  %1199 = vmatprep.subr.mxu0 0.0
  %1200 = vmatpush1.msra.mxu0 0.0
  %1201 = vmatprep.subr.mxu0 0.0
  %1202 = vmatpush1.msra.mxu0 0.0
  %1203 = vmatprep.subr.mxu0 0.0
  %1204 = vmatpush1.msra.mxu0 0.0
  %1205 = vmatprep.subr.mxu0 0.0
  %1206 = vmatpush1.msra.mxu0 0.0
  %1207 = vmatprep.subr.mxu0 0.0
  %1208 = vmatpush1.msra.mxu0 0.0
  %1209 = vmatprep.subr.mxu0 0.0
  %1210 = vmatpush1.msra.mxu0 0.0
  %1211 = vmatprep.subr.mxu0 0.0
  %1212 = vmatpush1.msra.mxu0 0.0
  %1213 = vmatprep.subr.mxu0 0.0
  %1214 = vmatpush1.msra.mxu0 0.0
  %1215 = vmatprep.subr.mxu0 0.0
  %1216 = vmatpush1.msra.mxu0 %v933
  %1217 = vmatprep.subr.mxu0 0.0
  %1218 = vmatpush2.msra.mxu0 0.0
  %1219 = vmatprep.subr.mxu0 0.0
  %1220 = vmatpush2.msra.mxu0 0.0
  %1221 = vmatprep.subr.mxu0 0.0
  %1222 = vmatpush2.msra.mxu0 0.0
  %1223 = vmatprep.subr.mxu0 0.0
  %1224 = vmatpush2.msra.mxu0 0.0
  %1225 = vmatprep.subr.mxu0 0.0
  %1226 = vmatpush2.msra.mxu0 0.0
  %1227 = vmatprep.subr.mxu0 0.0
  %1228 = vmatpush2.msra.mxu0 0.0
  %1229 = vmatprep.subr.mxu0 0.0
  %1230 = vmatpush2.msra.mxu0 0.0
  %1231 = vmatprep.subr.mxu0 0.0
  %1232 = vmatpush2.msra.mxu0 0.0
  %1233 = vmatprep.subr.mxu0 0.0
  %1234 = vmatpush2.msra.mxu0 0.0
  %1235 = vmatprep.subr.mxu0 0.0
  %1236 = vmatpush2.msra.mxu0 0.0
  %1237 = vmatprep.subr.mxu0 0.0
  %1238 = vmatpush2.msra.mxu0 0.0
  %1239 = vmatprep.subr.mxu0 0.0
  %1240 = vmatpush2.msra.mxu0 0.0
  %1241 = vmatprep.subr.mxu0 0.0
  %1242 = vmatpush2.msra.mxu0 0.0
  %1243 = vmatprep.subr.mxu0 0.0
  %1244 = vmatpush2.msra.mxu0 0.0
  %1245 = vmatprep.subr.mxu0 0.0
  %1246 = vmatpush2.msra.mxu0 0.0
  %1247 = vmatprep.subr.mxu0 0.0
  %1248 = vmatpush2.msra.mxu0 0.0
  %1249 = vmatprep.mubr.f32.mxu0 0.0
  %1250 = vmatmul.mubr.f32.gmra.mxu0 %v1183
  %v1251 = vpop.f32.mrf.mxu0
  %v1252 = vadd.f32 0.0, %v1251
  %v1253 = vpop.f32.mrf.mxu0
  %1254 = vdwg.mxu0
  %v1255 = vlaneseq
  %v1256 = vshrl.u32 %v1255, 7
  %v1257 = vsub.s32 0, %v1256
  %v1258 = vrot.slane %v1179, %v1257
  %v1259 = vmul.f32 %v687, %v1258
  %v1260 = vmul.f32 %v688, %v1258
  %v1261 = vmul.f32 %v689, %v1258
  %v1262 = vmul.f32 %v690, %v1258
  %v1263 = vlaneseq
  %v1264 = vshrl.u32 %v1263, 7
  %v1265 = vsub.s32 0, %v1264
  %v1266 = vrot.slane %v1252, %v1265
  %v1267 = vadd.f32 %v1259, %v1266
  %v1268 = vadd.f32 %v1260, %v1266
  %v1269 = vadd.f32 %v1261, %v1266
  %v1270 = vadd.f32 %v1262, %v1266
  %vm1271 = vcmp.ge.f32.partialorder %v1267, 0.0
  %vm1272 = vcmp.ge.f32.partialorder %v1268, 0.0
  %vm1273 = vcmp.ge.f32.partialorder %v1269, 0.0
  %vm1274 = vcmp.ge.f32.partialorder %v1270, 0.0
  %v1275 = vmul.f32 %v1267, 0.22916667
  %v1276 = vmul.f32 %v1268, 0.22916667
  %v1277 = vmul.f32 %v1269, 0.22916667
  %v1278 = vmul.f32 %v1270, 0.22916667
  %v1279 = vsel %vm1271, %v1267, %v1275
  %v1280 = vsel %vm1272, %v1268, %v1276
  %v1281 = vsel %vm1273, %v1269, %v1277
  %v1282 = vsel %vm1274, %v1270, %v1278
  %v1283 = vld [vmem:[%s7] sm:$0x3]
  %v1284 = vld [vmem:[%s2] sm:$0xff]
  %v1285 = vld [vmem:[%s2 + $0x8] sm:$0xff]
  %v1286 = vld [vmem:[%s2 + $0x10] sm:$0xff]
  %v1287 = vld [vmem:[%s2 + $0x18] sm:$0xff]
  %v1288 = vld [vmem:[%s2 + $0x20] sm:$0xff]
  %v1289 = vld [vmem:[%s2 + $0x28] sm:$0xff]
  %v1290 = vld [vmem:[%s2 + $0x30] sm:$0xff]
  %v1291 = vld [vmem:[%s2 + $0x38] sm:$0xff]
  %v1293 = vsel %vm53, %v1284, 0
  %v1296 = vsel %vm53, %v1285, 0
  %v1299 = vsel %vm53, %v1286, 0
  %v1302 = vsel %vm53, %v1287, 0
  %v1305 = vsel %vm53, %v1288, 0
  %v1308 = vsel %vm53, %v1289, 0
  %v1311 = vsel %vm53, %v1290, 0
  %v1314 = vsel %vm53, %v1291, 0
  %1316 = vmatprep.subr.mxu0 0.0
  %1317 = vmatpush1.msra.mxu0 0.0
  %1318 = vmatprep.subr.mxu0 0.0
  %1319 = vmatpush1.msra.mxu0 0.0
  %1320 = vmatprep.subr.mxu0 0.0
  %1321 = vmatpush1.msra.mxu0 0.0
  %1322 = vmatprep.subr.mxu0 0.0
  %1323 = vmatpush1.msra.mxu0 0.0
  %1324 = vmatprep.subr.mxu0 0.0
  %1325 = vmatpush1.msra.mxu0 0.0
  %1326 = vmatprep.subr.mxu0 0.0
  %1327 = vmatpush1.msra.mxu0 0.0
  %1328 = vmatprep.subr.mxu0 0.0
  %1329 = vmatpush1.msra.mxu0 0.0
  %1330 = vmatprep.subr.mxu0 0.0
  %1331 = vmatpush1.msra.mxu0 0.0
  %1332 = vmatprep.subr.mxu0 0.0
  %1333 = vmatpush1.msra.mxu0 0.0
  %1334 = vmatprep.subr.mxu0 0.0
  %1335 = vmatpush1.msra.mxu0 0.0
  %1336 = vmatprep.subr.mxu0 0.0
  %1337 = vmatpush1.msra.mxu0 0.0
  %1338 = vmatprep.subr.mxu0 0.0
  %1339 = vmatpush1.msra.mxu0 0.0
  %1340 = vmatprep.subr.mxu0 0.0
  %1341 = vmatpush1.msra.mxu0 %v1282
  %1342 = vmatprep.subr.mxu0 0.0
  %1343 = vmatpush1.msra.mxu0 %v1281
  %1344 = vmatprep.subr.mxu0 0.0
  %1345 = vmatpush1.msra.mxu0 %v1280
  %1346 = vmatprep.subr.mxu0 0.0
  %1347 = vmatpush1.msra.mxu0 %v1279
  %1348 = vmatprep.subr.mxu0 0.0
  %1349 = vmatpush2.msra.mxu0 0.0
  %1350 = vmatprep.subr.mxu0 0.0
  %1351 = vmatpush2.msra.mxu0 0.0
  %1352 = vmatprep.subr.mxu0 0.0
  %1353 = vmatpush2.msra.mxu0 0.0
  %1354 = vmatprep.subr.mxu0 0.0
  %1355 = vmatpush2.msra.mxu0 0.0
  %1356 = vmatprep.subr.mxu0 0.0
  %1357 = vmatpush2.msra.mxu0 0.0
  %1358 = vmatprep.subr.mxu0 0.0
  %1359 = vmatpush2.msra.mxu0 0.0
  %1360 = vmatprep.subr.mxu0 0.0
  %1361 = vmatpush2.msra.mxu0 0.0
  %1362 = vmatprep.subr.mxu0 0.0
  %1363 = vmatpush2.msra.mxu0 0.0
  %1364 = vmatprep.subr.mxu0 0.0
  %1365 = vmatpush2.msra.mxu0 0.0
  %1366 = vmatprep.subr.mxu0 0.0
  %1367 = vmatpush2.msra.mxu0 0.0
  %1368 = vmatprep.subr.mxu0 0.0
  %1369 = vmatpush2.msra.mxu0 0.0
  %1370 = vmatprep.subr.mxu0 0.0
  %1371 = vmatpush2.msra.mxu0 0.0
  %1372 = vmatprep.subr.mxu0 0.0
  %1373 = vmatpush2.msra.mxu0 0.0
  %1374 = vmatprep.subr.mxu0 0.0
  %1375 = vmatpush2.msra.mxu0 0.0
  %1376 = vmatprep.subr.mxu0 0.0
  %1377 = vmatpush2.msra.mxu0 0.0
  %1378 = vmatprep.subr.mxu0 0.0
  %1379 = vmatpush2.msra.mxu0 0.0
  %1380 = vmatprep.mubr.f32.mxu0 0.0
  %1381 = vmatmul.mubr.f32.gmra.mxu0 %v1293
  %v1382 = vpop.f32.mrf.mxu0
  %v1383 = vadd.f32 0.0, %v1382
  %v1384 = vpop.f32.mrf.mxu0
  %1385 = vmatprep.mubr.f32.mxu0 0.0
  %1386 = vmatmul.mubr.f32.gmra.mxu0 %v1296
  %v1387 = vpop.f32.mrf.mxu0
  %v1388 = vadd.f32 0.0, %v1387
  %v1389 = vpop.f32.mrf.mxu0
  %1390 = vmatprep.mubr.f32.mxu0 0.0
  %1391 = vmatmul.mubr.f32.gmra.mxu0 %v1299
  %v1392 = vpop.f32.mrf.mxu0
  %v1393 = vadd.f32 0.0, %v1392
  %v1394 = vpop.f32.mrf.mxu0
  %1395 = vmatprep.mubr.f32.mxu0 0.0
  %1396 = vmatmul.mubr.f32.gmra.mxu0 %v1302
  %v1397 = vpop.f32.mrf.mxu0
  %v1398 = vadd.f32 0.0, %v1397
  %v1399 = vpop.f32.mrf.mxu0
  %1400 = vmatprep.mubr.f32.mxu0 0.0
  %1401 = vmatmul.mubr.f32.gmra.mxu0 %v1305
  %v1402 = vpop.f32.mrf.mxu0
  %v1403 = vadd.f32 0.0, %v1402
  %v1404 = vpop.f32.mrf.mxu0
  %1405 = vmatprep.mubr.f32.mxu0 0.0
  %1406 = vmatmul.mubr.f32.gmra.mxu0 %v1308
  %v1407 = vpop.f32.mrf.mxu0
  %v1408 = vadd.f32 0.0, %v1407
  %v1409 = vpop.f32.mrf.mxu0
  %1410 = vmatprep.mubr.f32.mxu0 0.0
  %1411 = vmatmul.mubr.f32.gmra.mxu0 %v1311
  %v1412 = vpop.f32.mrf.mxu0
  %v1413 = vadd.f32 0.0, %v1412
  %v1414 = vpop.f32.mrf.mxu0
  %1415 = vmatprep.mubr.f32.mxu0 0.0
  %1416 = vmatmul.mubr.f32.gmra.mxu0 %v1314
  %v1417 = vpop.f32.mrf.mxu0
  %v1418 = vadd.f32 0.0, %v1417
  %v1419 = vpop.f32.mrf.mxu0
  %1420 = vdwg.mxu0
  %v1421 = vld [vmem:[%s4] sm:$0xff]
  %v1422 = vld [vmem:[%s4 + $0x8] sm:$0xff]
  %v1423 = vld [vmem:[%s4 + $0x10] sm:$0xff]
  %v1424 = vld [vmem:[%s4 + $0x18] sm:$0xff]
  %v1425 = vld [vmem:[%s4 + $0x20] sm:$0xff]
  %v1426 = vld [vmem:[%s4 + $0x28] sm:$0xff]
  %v1427 = vld [vmem:[%s4 + $0x30] sm:$0xff]
  %v1428 = vld [vmem:[%s4 + $0x38] sm:$0xff]
  %v1429 = vld [vmem:[%s4 + $0x40] sm:$0xff]
  %v1430 = vld [vmem:[%s4 + $0x48] sm:$0xff]
  %v1431 = vld [vmem:[%s4 + $0x50] sm:$0xff]
  %v1432 = vld [vmem:[%s4 + $0x58] sm:$0xff]
  %v1433 = vld [vmem:[%s4 + $0x60] sm:$0xff]
  %v1434 = vld [vmem:[%s4 + $0x68] sm:$0xff]
  %v1435 = vld [vmem:[%s4 + $0x70] sm:$0xff]
  %v1436 = vld [vmem:[%s4 + $0x78] sm:$0xff]
  %v1438 = vsel %vm159, %v1383, 0
  %v1441 = vsel %vm159, %v1388, 0
  %v1444 = vsel %vm159, %v1393, 0
  %v1447 = vsel %vm159, %v1398, 0
  %v1450 = vsel %vm159, %v1403, 0
  %v1453 = vsel %vm159, %v1408, 0
  %v1456 = vsel %vm159, %v1413, 0
  %v1459 = vsel %vm159, %v1418, 0
  %1461 = vmatprep.subr.mxu0 0.0
  %1462 = vmatpush1.msra.mxu0 0.0
  %1463 = vmatprep.subr.mxu0 0.0
  %1464 = vmatpush1.msra.mxu0 0.0
  %1465 = vmatprep.subr.mxu0 0.0
  %1466 = vmatpush1.msra.mxu0 0.0
  %1467 = vmatprep.subr.mxu0 0.0
  %1468 = vmatpush1.msra.mxu0 0.0
  %1469 = vmatprep.subr.mxu0 0.0
  %1470 = vmatpush1.msra.mxu0 0.0
  %1471 = vmatprep.subr.mxu0 0.0
  %1472 = vmatpush1.msra.mxu0 0.0
  %1473 = vmatprep.subr.mxu0 0.0
  %1474 = vmatpush1.msra.mxu0 0.0
  %1475 = vmatprep.subr.mxu0 0.0
  %1476 = vmatpush1.msra.mxu0 0.0
  %1477 = vmatprep.subr.mxu0 %v1436
  %1478 = vmatpush1.msra.mxu0 %v1435
  %1479 = vmatprep.subr.mxu0 %v1434
  %1480 = vmatpush1.msra.mxu0 %v1433
  %1481 = vmatprep.subr.mxu0 %v1432
  %1482 = vmatpush1.msra.mxu0 %v1431
  %1483 = vmatprep.subr.mxu0 %v1430
  %1484 = vmatpush1.msra.mxu0 %v1429
  %1485 = vmatprep.subr.mxu0 %v1428
  %1486 = vmatpush1.msra.mxu0 %v1427
  %1487 = vmatprep.subr.mxu0 %v1426
  %1488 = vmatpush1.msra.mxu0 %v1425
  %1489 = vmatprep.subr.mxu0 %v1424
  %1490 = vmatpush1.msra.mxu0 %v1423
  %1491 = vmatprep.subr.mxu0 %v1422
  %1492 = vmatpush1.msra.mxu0 %v1421
  %1493 = vmatprep.subr.mxu0 0.0
  %1494 = vmatpush2.msra.mxu0 0.0
  %1495 = vmatprep.subr.mxu0 0.0
  %1496 = vmatpush2.msra.mxu0 0.0
  %1497 = vmatprep.subr.mxu0 0.0
  %1498 = vmatpush2.msra.mxu0 0.0
  %1499 = vmatprep.subr.mxu0 0.0
  %1500 = vmatpush2.msra.mxu0 0.0
  %1501 = vmatprep.subr.mxu0 0.0
  %1502 = vmatpush2.msra.mxu0 0.0
  %1503 = vmatprep.subr.mxu0 0.0
  %1504 = vmatpush2.msra.mxu0 0.0
  %1505 = vmatprep.subr.mxu0 0.0
  %1506 = vmatpush2.msra.mxu0 0.0
  %1507 = vmatprep.subr.mxu0 0.0
  %1508 = vmatpush2.msra.mxu0 0.0
  %1509 = vmatprep.subr.mxu0 0.0
  %1510 = vmatpush2.msra.mxu0 0.0
  %1511 = vmatprep.subr.mxu0 0.0
  %1512 = vmatpush2.msra.mxu0 0.0
  %1513 = vmatprep.subr.mxu0 0.0
  %1514 = vmatpush2.msra.mxu0 0.0
  %1515 = vmatprep.subr.mxu0 0.0
  %1516 = vmatpush2.msra.mxu0 0.0
  %1517 = vmatprep.subr.mxu0 0.0
  %1518 = vmatpush2.msra.mxu0 0.0
  %1519 = vmatprep.subr.mxu0 0.0
  %1520 = vmatpush2.msra.mxu0 0.0
  %1521 = vmatprep.subr.mxu0 0.0
  %1522 = vmatpush2.msra.mxu0 0.0
  %1523 = vmatprep.subr.mxu0 0.0
  %1524 = vmatpush2.msra.mxu0 0.0
  %1525 = vmatprep.mubr.f32.mxu0 0.0
  %1526 = vmatmul.mubr.f32.gmra.mxu0 %v1438
  %v1527 = vpop.f32.mrf.mxu0
  %v1528 = vadd.f32 0.0, %v1527
  %v1529 = vpop.f32.mrf.mxu0
  %v1530 = vadd.f32 0.0, %v1529
  %1531 = vmatprep.mubr.f32.mxu0 0.0
  %1532 = vmatmul.mubr.f32.gmra.mxu0 %v1441
  %v1533 = vpop.f32.mrf.mxu0
  %v1534 = vadd.f32 0.0, %v1533
  %v1535 = vpop.f32.mrf.mxu0
  %v1536 = vadd.f32 0.0, %v1535
  %1537 = vmatprep.mubr.f32.mxu0 0.0
  %1538 = vmatmul.mubr.f32.gmra.mxu0 %v1444
  %v1539 = vpop.f32.mrf.mxu0
  %v1540 = vadd.f32 0.0, %v1539
  %v1541 = vpop.f32.mrf.mxu0
  %v1542 = vadd.f32 0.0, %v1541
  %1543 = vmatprep.mubr.f32.mxu0 0.0
  %1544 = vmatmul.mubr.f32.gmra.mxu0 %v1447
  %v1545 = vpop.f32.mrf.mxu0
  %v1546 = vadd.f32 0.0, %v1545
  %v1547 = vpop.f32.mrf.mxu0
  %v1548 = vadd.f32 0.0, %v1547
  %1549 = vmatprep.mubr.f32.mxu0 0.0
  %1550 = vmatmul.mubr.f32.gmra.mxu0 %v1450
  %v1551 = vpop.f32.mrf.mxu0
  %v1552 = vadd.f32 0.0, %v1551
  %v1553 = vpop.f32.mrf.mxu0
  %v1554 = vadd.f32 0.0, %v1553
  %1555 = vmatprep.mubr.f32.mxu0 0.0
  %1556 = vmatmul.mubr.f32.gmra.mxu0 %v1453
  %v1557 = vpop.f32.mrf.mxu0
  %v1558 = vadd.f32 0.0, %v1557
  %v1559 = vpop.f32.mrf.mxu0
  %v1560 = vadd.f32 0.0, %v1559
  %1561 = vmatprep.mubr.f32.mxu0 0.0
  %1562 = vmatmul.mubr.f32.gmra.mxu0 %v1456
  %v1563 = vpop.f32.mrf.mxu0
  %v1564 = vadd.f32 0.0, %v1563
  %v1565 = vpop.f32.mrf.mxu0
  %v1566 = vadd.f32 0.0, %v1565
  %1567 = vmatprep.mubr.f32.mxu0 0.0
  %1568 = vmatmul.mubr.f32.gmra.mxu0 %v1459
  %v1569 = vpop.f32.mrf.mxu0
  %v1570 = vadd.f32 0.0, %v1569
  %v1571 = vpop.f32.mrf.mxu0
  %v1572 = vadd.f32 0.0, %v1571
  %1573 = vdwg.mxu0
  %v1575 = vlaneseq
  %v1576 = vshrl.u32 %v1575, 7
  %v1577 = vsub.s32 0, %v1576
  %v1578 = vrot.slane %v1283, %v1577
  %v1579 = vlaneseq
  %v1580 = vshrl.u32 %v1579, 7
  %v1581 = vsub.s32 1, %v1580
  %v1582 = vrot.slane %v1283, %v1581
  %v1585 = vadd.f32 %v1578, %v1528
  %v1586 = vadd.f32 %v1582, %v1530
  %v1587 = vadd.f32 %v1578, %v1534
  %v1588 = vadd.f32 %v1582, %v1536
  %v1589 = vadd.f32 %v1578, %v1540
  %v1590 = vadd.f32 %v1582, %v1542
  %v1591 = vadd.f32 %v1578, %v1546
  %v1592 = vadd.f32 %v1582, %v1548
  %v1593 = vadd.f32 %v1578, %v1552
  %v1594 = vadd.f32 %v1582, %v1554
  %v1595 = vadd.f32 %v1578, %v1558
  %v1596 = vadd.f32 %v1582, %v1560
  %v1597 = vadd.f32 %v1578, %v1564
  %v1598 = vadd.f32 %v1582, %v1566
  %v1599 = vadd.f32 %v1578, %v1570
  %v1600 = vadd.f32 %v1582, %v1572
  %s1601 = scalar_lea.vmem %s2, 64
  %v1602 = vld [vmem:[%s1601] sm:$0xff]
  %v1603 = vld [vmem:[%s1601 + $0x8] sm:$0xff]
  %v1604 = vld [vmem:[%s1601 + $0x10] sm:$0xff]
  %v1605 = vld [vmem:[%s1601 + $0x18] sm:$0xff]
  %v1606 = vld [vmem:[%s1601 + $0x20] sm:$0xff]
  %v1607 = vld [vmem:[%s1601 + $0x28] sm:$0xff]
  %v1608 = vld [vmem:[%s1601 + $0x30] sm:$0xff]
  %v1609 = vld [vmem:[%s1601 + $0x38] sm:$0xff]
  %v1611 = vsel %vm53, %v1602, 0
  %v1614 = vsel %vm53, %v1603, 0
  %v1617 = vsel %vm53, %v1604, 0
  %v1620 = vsel %vm53, %v1605, 0
  %v1623 = vsel %vm53, %v1606, 0
  %v1626 = vsel %vm53, %v1607, 0
  %v1629 = vsel %vm53, %v1608, 0
  %v1632 = vsel %vm53, %v1609, 0
  %1634 = vmatprep.subr.mxu0 0.0
  %1635 = vmatpush1.msra.mxu0 0.0
  %1636 = vmatprep.subr.mxu0 0.0
  %1637 = vmatpush1.msra.mxu0 0.0
  %1638 = vmatprep.subr.mxu0 0.0
  %1639 = vmatpush1.msra.mxu0 0.0
  %1640 = vmatprep.subr.mxu0 0.0
  %1641 = vmatpush1.msra.mxu0 0.0
  %1642 = vmatprep.subr.mxu0 0.0
  %1643 = vmatpush1.msra.mxu0 0.0
  %1644 = vmatprep.subr.mxu0 0.0
  %1645 = vmatpush1.msra.mxu0 0.0
  %1646 = vmatprep.subr.mxu0 0.0
  %1647 = vmatpush1.msra.mxu0 0.0
  %1648 = vmatprep.subr.mxu0 0.0
  %1649 = vmatpush1.msra.mxu0 0.0
  %1650 = vmatprep.subr.mxu0 0.0
  %1651 = vmatpush1.msra.mxu0 0.0
  %1652 = vmatprep.subr.mxu0 0.0
  %1653 = vmatpush1.msra.mxu0 0.0
  %1654 = vmatprep.subr.mxu0 0.0
  %1655 = vmatpush1.msra.mxu0 0.0
  %1656 = vmatprep.subr.mxu0 0.0
  %1657 = vmatpush1.msra.mxu0 0.0
  %1658 = vmatprep.subr.mxu0 0.0
  %1659 = vmatpush1.msra.mxu0 %v1282
  %1660 = vmatprep.subr.mxu0 0.0
  %1661 = vmatpush1.msra.mxu0 %v1281
  %1662 = vmatprep.subr.mxu0 0.0
  %1663 = vmatpush1.msra.mxu0 %v1280
  %1664 = vmatprep.subr.mxu0 0.0
  %1665 = vmatpush1.msra.mxu0 %v1279
  %1666 = vmatprep.subr.mxu0 0.0
  %1667 = vmatpush2.msra.mxu0 0.0
  %1668 = vmatprep.subr.mxu0 0.0
  %1669 = vmatpush2.msra.mxu0 0.0
  %1670 = vmatprep.subr.mxu0 0.0
  %1671 = vmatpush2.msra.mxu0 0.0
  %1672 = vmatprep.subr.mxu0 0.0
  %1673 = vmatpush2.msra.mxu0 0.0
  %1674 = vmatprep.subr.mxu0 0.0
  %1675 = vmatpush2.msra.mxu0 0.0
  %1676 = vmatprep.subr.mxu0 0.0
  %1677 = vmatpush2.msra.mxu0 0.0
  %1678 = vmatprep.subr.mxu0 0.0
  %1679 = vmatpush2.msra.mxu0 0.0
  %1680 = vmatprep.subr.mxu0 0.0
  %1681 = vmatpush2.msra.mxu0 0.0
  %1682 = vmatprep.subr.mxu0 0.0
  %1683 = vmatpush2.msra.mxu0 0.0
  %1684 = vmatprep.subr.mxu0 0.0
  %1685 = vmatpush2.msra.mxu0 0.0
  %1686 = vmatprep.subr.mxu0 0.0
  %1687 = vmatpush2.msra.mxu0 0.0
  %1688 = vmatprep.subr.mxu0 0.0
  %1689 = vmatpush2.msra.mxu0 0.0
  %1690 = vmatprep.subr.mxu0 0.0
  %1691 = vmatpush2.msra.mxu0 0.0
  %1692 = vmatprep.subr.mxu0 0.0
  %1693 = vmatpush2.msra.mxu0 0.0
  %1694 = vmatprep.subr.mxu0 0.0
  %1695 = vmatpush2.msra.mxu0 0.0
  %1696 = vmatprep.subr.mxu0 0.0
  %1697 = vmatpush2.msra.mxu0 0.0
  %1698 = vmatprep.mubr.f32.mxu0 0.0
  %1699 = vmatmul.mubr.f32.gmra.mxu0 %v1611
  %v1700 = vpop.f32.mrf.mxu0
  %v1701 = vadd.f32 0.0, %v1700
  %v1702 = vpop.f32.mrf.mxu0
  %1703 = vmatprep.mubr.f32.mxu0 0.0
  %1704 = vmatmul.mubr.f32.gmra.mxu0 %v1614
  %v1705 = vpop.f32.mrf.mxu0
  %v1706 = vadd.f32 0.0, %v1705
  %v1707 = vpop.f32.mrf.mxu0
  %1708 = vmatprep.mubr.f32.mxu0 0.0
  %1709 = vmatmul.mubr.f32.gmra.mxu0 %v1617
  %v1710 = vpop.f32.mrf.mxu0
  %v1711 = vadd.f32 0.0, %v1710
  %v1712 = vpop.f32.mrf.mxu0
  %1713 = vmatprep.mubr.f32.mxu0 0.0
  %1714 = vmatmul.mubr.f32.gmra.mxu0 %v1620
  %v1715 = vpop.f32.mrf.mxu0
  %v1716 = vadd.f32 0.0, %v1715
  %v1717 = vpop.f32.mrf.mxu0
  %1718 = vmatprep.mubr.f32.mxu0 0.0
  %1719 = vmatmul.mubr.f32.gmra.mxu0 %v1623
  %v1720 = vpop.f32.mrf.mxu0
  %v1721 = vadd.f32 0.0, %v1720
  %v1722 = vpop.f32.mrf.mxu0
  %1723 = vmatprep.mubr.f32.mxu0 0.0
  %1724 = vmatmul.mubr.f32.gmra.mxu0 %v1626
  %v1725 = vpop.f32.mrf.mxu0
  %v1726 = vadd.f32 0.0, %v1725
  %v1727 = vpop.f32.mrf.mxu0
  %1728 = vmatprep.mubr.f32.mxu0 0.0
  %1729 = vmatmul.mubr.f32.gmra.mxu0 %v1629
  %v1730 = vpop.f32.mrf.mxu0
  %v1731 = vadd.f32 0.0, %v1730
  %v1732 = vpop.f32.mrf.mxu0
  %1733 = vmatprep.mubr.f32.mxu0 0.0
  %1734 = vmatmul.mubr.f32.gmra.mxu0 %v1632
  %v1735 = vpop.f32.mrf.mxu0
  %v1736 = vadd.f32 0.0, %v1735
  %v1737 = vpop.f32.mrf.mxu0
  %1738 = vdwg.mxu0
  %s1739 = scalar_lea.vmem %s4, 128
  %v1740 = vld [vmem:[%s1739] sm:$0xff]
  %v1741 = vld [vmem:[%s1739 + $0x8] sm:$0xff]
  %v1742 = vld [vmem:[%s1739 + $0x10] sm:$0xff]
  %v1743 = vld [vmem:[%s1739 + $0x18] sm:$0xff]
  %v1744 = vld [vmem:[%s1739 + $0x20] sm:$0xff]
  %v1745 = vld [vmem:[%s1739 + $0x28] sm:$0xff]
  %v1746 = vld [vmem:[%s1739 + $0x30] sm:$0xff]
  %v1747 = vld [vmem:[%s1739 + $0x38] sm:$0xff]
  %v1748 = vld [vmem:[%s1739 + $0x40] sm:$0xff]
  %v1749 = vld [vmem:[%s1739 + $0x48] sm:$0xff]
  %v1750 = vld [vmem:[%s1739 + $0x50] sm:$0xff]
  %v1751 = vld [vmem:[%s1739 + $0x58] sm:$0xff]
  %v1752 = vld [vmem:[%s1739 + $0x60] sm:$0xff]
  %v1753 = vld [vmem:[%s1739 + $0x68] sm:$0xff]
  %v1754 = vld [vmem:[%s1739 + $0x70] sm:$0xff]
  %v1755 = vld [vmem:[%s1739 + $0x78] sm:$0xff]
  %v1757 = vsel %vm159, %v1701, 0
  %v1760 = vsel %vm159, %v1706, 0
  %v1763 = vsel %vm159, %v1711, 0
  %v1766 = vsel %vm159, %v1716, 0
  %v1769 = vsel %vm159, %v1721, 0
  %v1772 = vsel %vm159, %v1726, 0
  %v1775 = vsel %vm159, %v1731, 0
  %v1778 = vsel %vm159, %v1736, 0
  %1780 = vmatprep.subr.mxu0 0.0
  %1781 = vmatpush1.msra.mxu0 0.0
  %1782 = vmatprep.subr.mxu0 0.0
  %1783 = vmatpush1.msra.mxu0 0.0
  %1784 = vmatprep.subr.mxu0 0.0
  %1785 = vmatpush1.msra.mxu0 0.0
  %1786 = vmatprep.subr.mxu0 0.0
  %1787 = vmatpush1.msra.mxu0 0.0
  %1788 = vmatprep.subr.mxu0 0.0
  %1789 = vmatpush1.msra.mxu0 0.0
  %1790 = vmatprep.subr.mxu0 0.0
  %1791 = vmatpush1.msra.mxu0 0.0
  %1792 = vmatprep.subr.mxu0 0.0
  %1793 = vmatpush1.msra.mxu0 0.0
  %1794 = vmatprep.subr.mxu0 0.0
  %1795 = vmatpush1.msra.mxu0 0.0
  %1796 = vmatprep.subr.mxu0 %v1755
  %1797 = vmatpush1.msra.mxu0 %v1754
  %1798 = vmatprep.subr.mxu0 %v1753
  %1799 = vmatpush1.msra.mxu0 %v1752
  %1800 = vmatprep.subr.mxu0 %v1751
  %1801 = vmatpush1.msra.mxu0 %v1750
  %1802 = vmatprep.subr.mxu0 %v1749
  %1803 = vmatpush1.msra.mxu0 %v1748
  %1804 = vmatprep.subr.mxu0 %v1747
  %1805 = vmatpush1.msra.mxu0 %v1746
  %1806 = vmatprep.subr.mxu0 %v1745
  %1807 = vmatpush1.msra.mxu0 %v1744
  %1808 = vmatprep.subr.mxu0 %v1743
  %1809 = vmatpush1.msra.mxu0 %v1742
  %1810 = vmatprep.subr.mxu0 %v1741
  %1811 = vmatpush1.msra.mxu0 %v1740
  %1812 = vmatprep.subr.mxu0 0.0
  %1813 = vmatpush2.msra.mxu0 0.0
  %1814 = vmatprep.subr.mxu0 0.0
  %1815 = vmatpush2.msra.mxu0 0.0
  %1816 = vmatprep.subr.mxu0 0.0
  %1817 = vmatpush2.msra.mxu0 0.0
  %1818 = vmatprep.subr.mxu0 0.0
  %1819 = vmatpush2.msra.mxu0 0.0
  %1820 = vmatprep.subr.mxu0 0.0
  %1821 = vmatpush2.msra.mxu0 0.0
  %1822 = vmatprep.subr.mxu0 0.0
  %1823 = vmatpush2.msra.mxu0 0.0
  %1824 = vmatprep.subr.mxu0 0.0
  %1825 = vmatpush2.msra.mxu0 0.0
  %1826 = vmatprep.subr.mxu0 0.0
  %1827 = vmatpush2.msra.mxu0 0.0
  %1828 = vmatprep.subr.mxu0 0.0
  %1829 = vmatpush2.msra.mxu0 0.0
  %1830 = vmatprep.subr.mxu0 0.0
  %1831 = vmatpush2.msra.mxu0 0.0
  %1832 = vmatprep.subr.mxu0 0.0
  %1833 = vmatpush2.msra.mxu0 0.0
  %1834 = vmatprep.subr.mxu0 0.0
  %1835 = vmatpush2.msra.mxu0 0.0
  %1836 = vmatprep.subr.mxu0 0.0
  %1837 = vmatpush2.msra.mxu0 0.0
  %1838 = vmatprep.subr.mxu0 0.0
  %1839 = vmatpush2.msra.mxu0 0.0
  %1840 = vmatprep.subr.mxu0 0.0
  %1841 = vmatpush2.msra.mxu0 0.0
  %1842 = vmatprep.subr.mxu0 0.0
  %1843 = vmatpush2.msra.mxu0 0.0
  %1844 = vmatprep.mubr.f32.mxu0 0.0
  %1845 = vmatmul.mubr.f32.gmra.mxu0 %v1757
  %v1846 = vpop.f32.mrf.mxu0
  %v1847 = vadd.f32 0.0, %v1846
  %v1848 = vpop.f32.mrf.mxu0
  %v1849 = vadd.f32 0.0, %v1848
  %1850 = vmatprep.mubr.f32.mxu0 0.0
  %1851 = vmatmul.mubr.f32.gmra.mxu0 %v1760
  %v1852 = vpop.f32.mrf.mxu0
  %v1853 = vadd.f32 0.0, %v1852
  %v1854 = vpop.f32.mrf.mxu0
  %v1855 = vadd.f32 0.0, %v1854
  %1856 = vmatprep.mubr.f32.mxu0 0.0
  %1857 = vmatmul.mubr.f32.gmra.mxu0 %v1763
  %v1858 = vpop.f32.mrf.mxu0
  %v1859 = vadd.f32 0.0, %v1858
  %v1860 = vpop.f32.mrf.mxu0
  %v1861 = vadd.f32 0.0, %v1860
  %1862 = vmatprep.mubr.f32.mxu0 0.0
  %1863 = vmatmul.mubr.f32.gmra.mxu0 %v1766
  %v1864 = vpop.f32.mrf.mxu0
  %v1865 = vadd.f32 0.0, %v1864
  %v1866 = vpop.f32.mrf.mxu0
  %v1867 = vadd.f32 0.0, %v1866
  %1868 = vmatprep.mubr.f32.mxu0 0.0
  %1869 = vmatmul.mubr.f32.gmra.mxu0 %v1769
  %v1870 = vpop.f32.mrf.mxu0
  %v1871 = vadd.f32 0.0, %v1870
  %v1872 = vpop.f32.mrf.mxu0
  %v1873 = vadd.f32 0.0, %v1872
  %1874 = vmatprep.mubr.f32.mxu0 0.0
  %1875 = vmatmul.mubr.f32.gmra.mxu0 %v1772
  %v1876 = vpop.f32.mrf.mxu0
  %v1877 = vadd.f32 0.0, %v1876
  %v1878 = vpop.f32.mrf.mxu0
  %v1879 = vadd.f32 0.0, %v1878
  %1880 = vmatprep.mubr.f32.mxu0 0.0
  %1881 = vmatmul.mubr.f32.gmra.mxu0 %v1775
  %v1882 = vpop.f32.mrf.mxu0
  %v1883 = vadd.f32 0.0, %v1882
  %v1884 = vpop.f32.mrf.mxu0
  %v1885 = vadd.f32 0.0, %v1884
  %1886 = vmatprep.mubr.f32.mxu0 0.0
  %1887 = vmatmul.mubr.f32.gmra.mxu0 %v1778
  %v1888 = vpop.f32.mrf.mxu0
  %v1889 = vadd.f32 0.0, %v1888
  %v1890 = vpop.f32.mrf.mxu0
  %v1891 = vadd.f32 0.0, %v1890
  %1892 = vdwg.mxu0
  %v1893 = vadd.f32 %v1585, %v1847
  %v1894 = vadd.f32 %v1586, %v1849
  %v1895 = vadd.f32 %v1587, %v1853
  %v1896 = vadd.f32 %v1588, %v1855
  %v1897 = vadd.f32 %v1589, %v1859
  %v1898 = vadd.f32 %v1590, %v1861
  %v1899 = vadd.f32 %v1591, %v1865
  %v1900 = vadd.f32 %v1592, %v1867
  %v1901 = vadd.f32 %v1593, %v1871
  %v1902 = vadd.f32 %v1594, %v1873
  %v1903 = vadd.f32 %v1595, %v1877
  %v1904 = vadd.f32 %v1596, %v1879
  %v1905 = vadd.f32 %v1597, %v1883
  %v1906 = vadd.f32 %v1598, %v1885
  %v1907 = vadd.f32 %v1599, %v1889
  %v1908 = vadd.f32 %v1600, %v1891
  %s1909 = scalar_lea.vmem %s2, 128
  %v1910 = vld [vmem:[%s1909] sm:$0xff]
  %v1911 = vld [vmem:[%s1909 + $0x8] sm:$0xff]
  %v1912 = vld [vmem:[%s1909 + $0x10] sm:$0xff]
  %v1913 = vld [vmem:[%s1909 + $0x18] sm:$0xff]
  %v1914 = vld [vmem:[%s1909 + $0x20] sm:$0xff]
  %v1915 = vld [vmem:[%s1909 + $0x28] sm:$0xff]
  %v1916 = vld [vmem:[%s1909 + $0x30] sm:$0xff]
  %v1917 = vld [vmem:[%s1909 + $0x38] sm:$0xff]
  %v1919 = vsel %vm53, %v1910, 0
  %v1922 = vsel %vm53, %v1911, 0
  %v1925 = vsel %vm53, %v1912, 0
  %v1928 = vsel %vm53, %v1913, 0
  %v1931 = vsel %vm53, %v1914, 0
  %v1934 = vsel %vm53, %v1915, 0
  %v1937 = vsel %vm53, %v1916, 0
  %v1940 = vsel %vm53, %v1917, 0
  %1942 = vmatprep.subr.mxu0 0.0
  %1943 = vmatpush1.msra.mxu0 0.0
  %1944 = vmatprep.subr.mxu0 0.0
  %1945 = vmatpush1.msra.mxu0 0.0
  %1946 = vmatprep.subr.mxu0 0.0
  %1947 = vmatpush1.msra.mxu0 0.0
  %1948 = vmatprep.subr.mxu0 0.0
  %1949 = vmatpush1.msra.mxu0 0.0
  %1950 = vmatprep.subr.mxu0 0.0
  %1951 = vmatpush1.msra.mxu0 0.0
  %1952 = vmatprep.subr.mxu0 0.0
  %1953 = vmatpush1.msra.mxu0 0.0
  %1954 = vmatprep.subr.mxu0 0.0
  %1955 = vmatpush1.msra.mxu0 0.0
  %1956 = vmatprep.subr.mxu0 0.0
  %1957 = vmatpush1.msra.mxu0 0.0
  %1958 = vmatprep.subr.mxu0 0.0
  %1959 = vmatpush1.msra.mxu0 0.0
  %1960 = vmatprep.subr.mxu0 0.0
  %1961 = vmatpush1.msra.mxu0 0.0
  %1962 = vmatprep.subr.mxu0 0.0
  %1963 = vmatpush1.msra.mxu0 0.0
  %1964 = vmatprep.subr.mxu0 0.0
  %1965 = vmatpush1.msra.mxu0 0.0
  %1966 = vmatprep.subr.mxu0 0.0
  %1967 = vmatpush1.msra.mxu0 %v1282
  %1968 = vmatprep.subr.mxu0 0.0
  %1969 = vmatpush1.msra.mxu0 %v1281
  %1970 = vmatprep.subr.mxu0 0.0
  %1971 = vmatpush1.msra.mxu0 %v1280
  %1972 = vmatprep.subr.mxu0 0.0
  %1973 = vmatpush1.msra.mxu0 %v1279
  %1974 = vmatprep.subr.mxu0 0.0
  %1975 = vmatpush2.msra.mxu0 0.0
  %1976 = vmatprep.subr.mxu0 0.0
  %1977 = vmatpush2.msra.mxu0 0.0
  %1978 = vmatprep.subr.mxu0 0.0
  %1979 = vmatpush2.msra.mxu0 0.0
  %1980 = vmatprep.subr.mxu0 0.0
  %1981 = vmatpush2.msra.mxu0 0.0
  %1982 = vmatprep.subr.mxu0 0.0
  %1983 = vmatpush2.msra.mxu0 0.0
  %1984 = vmatprep.subr.mxu0 0.0
  %1985 = vmatpush2.msra.mxu0 0.0
  %1986 = vmatprep.subr.mxu0 0.0
  %1987 = vmatpush2.msra.mxu0 0.0
  %1988 = vmatprep.subr.mxu0 0.0
  %1989 = vmatpush2.msra.mxu0 0.0
  %1990 = vmatprep.subr.mxu0 0.0
  %1991 = vmatpush2.msra.mxu0 0.0
  %1992 = vmatprep.subr.mxu0 0.0
  %1993 = vmatpush2.msra.mxu0 0.0
  %1994 = vmatprep.subr.mxu0 0.0
  %1995 = vmatpush2.msra.mxu0 0.0
  %1996 = vmatprep.subr.mxu0 0.0
  %1997 = vmatpush2.msra.mxu0 0.0
  %1998 = vmatprep.subr.mxu0 0.0
  %1999 = vmatpush2.msra.mxu0 0.0
  %2000 = vmatprep.subr.mxu0 0.0
  %2001 = vmatpush2.msra.mxu0 0.0
  %2002 = vmatprep.subr.mxu0 0.0
  %2003 = vmatpush2.msra.mxu0 0.0
  %2004 = vmatprep.subr.mxu0 0.0
  %2005 = vmatpush2.msra.mxu0 0.0
  %2006 = vmatprep.mubr.f32.mxu0 0.0
  %2007 = vmatmul.mubr.f32.gmra.mxu0 %v1919
  %v2008 = vpop.f32.mrf.mxu0
  %v2009 = vadd.f32 0.0, %v2008
  %v2010 = vpop.f32.mrf.mxu0
  %2011 = vmatprep.mubr.f32.mxu0 0.0
  %2012 = vmatmul.mubr.f32.gmra.mxu0 %v1922
  %v2013 = vpop.f32.mrf.mxu0
  %v2014 = vadd.f32 0.0, %v2013
  %v2015 = vpop.f32.mrf.mxu0
  %2016 = vmatprep.mubr.f32.mxu0 0.0
  %2017 = vmatmul.mubr.f32.gmra.mxu0 %v1925
  %v2018 = vpop.f32.mrf.mxu0
  %v2019 = vadd.f32 0.0, %v2018
  %v2020 = vpop.f32.mrf.mxu0
  %2021 = vmatprep.mubr.f32.mxu0 0.0
  %2022 = vmatmul.mubr.f32.gmra.mxu0 %v1928
  %v2023 = vpop.f32.mrf.mxu0
  %v2024 = vadd.f32 0.0, %v2023
  %v2025 = vpop.f32.mrf.mxu0
  %2026 = vmatprep.mubr.f32.mxu0 0.0
  %2027 = vmatmul.mubr.f32.gmra.mxu0 %v1931
  %v2028 = vpop.f32.mrf.mxu0
  %v2029 = vadd.f32 0.0, %v2028
  %v2030 = vpop.f32.mrf.mxu0
  %2031 = vmatprep.mubr.f32.mxu0 0.0
  %2032 = vmatmul.mubr.f32.gmra.mxu0 %v1934
  %v2033 = vpop.f32.mrf.mxu0
  %v2034 = vadd.f32 0.0, %v2033
  %v2035 = vpop.f32.mrf.mxu0
  %2036 = vmatprep.mubr.f32.mxu0 0.0
  %2037 = vmatmul.mubr.f32.gmra.mxu0 %v1937
  %v2038 = vpop.f32.mrf.mxu0
  %v2039 = vadd.f32 0.0, %v2038
  %v2040 = vpop.f32.mrf.mxu0
  %2041 = vmatprep.mubr.f32.mxu0 0.0
  %2042 = vmatmul.mubr.f32.gmra.mxu0 %v1940
  %v2043 = vpop.f32.mrf.mxu0
  %v2044 = vadd.f32 0.0, %v2043
  %v2045 = vpop.f32.mrf.mxu0
  %2046 = vdwg.mxu0
  %s2047 = scalar_lea.vmem %s4, 256
  %v2048 = vld [vmem:[%s2047] sm:$0xff]
  %v2049 = vld [vmem:[%s2047 + $0x8] sm:$0xff]
  %v2050 = vld [vmem:[%s2047 + $0x10] sm:$0xff]
  %v2051 = vld [vmem:[%s2047 + $0x18] sm:$0xff]
  %v2052 = vld [vmem:[%s2047 + $0x20] sm:$0xff]
  %v2053 = vld [vmem:[%s2047 + $0x28] sm:$0xff]
  %v2054 = vld [vmem:[%s2047 + $0x30] sm:$0xff]
  %v2055 = vld [vmem:[%s2047 + $0x38] sm:$0xff]
  %v2056 = vld [vmem:[%s2047 + $0x40] sm:$0xff]
  %v2057 = vld [vmem:[%s2047 + $0x48] sm:$0xff]
  %v2058 = vld [vmem:[%s2047 + $0x50] sm:$0xff]
  %v2059 = vld [vmem:[%s2047 + $0x58] sm:$0xff]
  %v2060 = vld [vmem:[%s2047 + $0x60] sm:$0xff]
  %v2061 = vld [vmem:[%s2047 + $0x68] sm:$0xff]
  %v2062 = vld [vmem:[%s2047 + $0x70] sm:$0xff]
  %v2063 = vld [vmem:[%s2047 + $0x78] sm:$0xff]
  %v2065 = vsel %vm159, %v2009, 0
  %v2068 = vsel %vm159, %v2014, 0
  %v2071 = vsel %vm159, %v2019, 0
  %v2074 = vsel %vm159, %v2024, 0
  %v2077 = vsel %vm159, %v2029, 0
  %v2080 = vsel %vm159, %v2034, 0
  %v2083 = vsel %vm159, %v2039, 0
  %v2086 = vsel %vm159, %v2044, 0
  %2088 = vmatprep.subr.mxu0 0.0
  %2089 = vmatpush1.msra.mxu0 0.0
  %2090 = vmatprep.subr.mxu0 0.0
  %2091 = vmatpush1.msra.mxu0 0.0
  %2092 = vmatprep.subr.mxu0 0.0
  %2093 = vmatpush1.msra.mxu0 0.0
  %2094 = vmatprep.subr.mxu0 0.0
  %2095 = vmatpush1.msra.mxu0 0.0
  %2096 = vmatprep.subr.mxu0 0.0
  %2097 = vmatpush1.msra.mxu0 0.0
  %2098 = vmatprep.subr.mxu0 0.0
  %2099 = vmatpush1.msra.mxu0 0.0
  %2100 = vmatprep.subr.mxu0 0.0
  %2101 = vmatpush1.msra.mxu0 0.0
  %2102 = vmatprep.subr.mxu0 0.0
  %2103 = vmatpush1.msra.mxu0 0.0
  %2104 = vmatprep.subr.mxu0 %v2063
  %2105 = vmatpush1.msra.mxu0 %v2062
  %2106 = vmatprep.subr.mxu0 %v2061
  %2107 = vmatpush1.msra.mxu0 %v2060
  %2108 = vmatprep.subr.mxu0 %v2059
  %2109 = vmatpush1.msra.mxu0 %v2058
  %2110 = vmatprep.subr.mxu0 %v2057
  %2111 = vmatpush1.msra.mxu0 %v2056
  %2112 = vmatprep.subr.mxu0 %v2055
  %2113 = vmatpush1.msra.mxu0 %v2054
  %2114 = vmatprep.subr.mxu0 %v2053
  %2115 = vmatpush1.msra.mxu0 %v2052
  %2116 = vmatprep.subr.mxu0 %v2051
  %2117 = vmatpush1.msra.mxu0 %v2050
  %2118 = vmatprep.subr.mxu0 %v2049
  %2119 = vmatpush1.msra.mxu0 %v2048
  %2120 = vmatprep.subr.mxu0 0.0
  %2121 = vmatpush2.msra.mxu0 0.0
  %2122 = vmatprep.subr.mxu0 0.0
  %2123 = vmatpush2.msra.mxu0 0.0
  %2124 = vmatprep.subr.mxu0 0.0
  %2125 = vmatpush2.msra.mxu0 0.0
  %2126 = vmatprep.subr.mxu0 0.0
  %2127 = vmatpush2.msra.mxu0 0.0
  %2128 = vmatprep.subr.mxu0 0.0
  %2129 = vmatpush2.msra.mxu0 0.0
  %2130 = vmatprep.subr.mxu0 0.0
  %2131 = vmatpush2.msra.mxu0 0.0
  %2132 = vmatprep.subr.mxu0 0.0
  %2133 = vmatpush2.msra.mxu0 0.0
  %2134 = vmatprep.subr.mxu0 0.0
  %2135 = vmatpush2.msra.mxu0 0.0
  %2136 = vmatprep.subr.mxu0 0.0
  %2137 = vmatpush2.msra.mxu0 0.0
  %2138 = vmatprep.subr.mxu0 0.0
  %2139 = vmatpush2.msra.mxu0 0.0
  %2140 = vmatprep.subr.mxu0 0.0
  %2141 = vmatpush2.msra.mxu0 0.0
  %2142 = vmatprep.subr.mxu0 0.0
  %2143 = vmatpush2.msra.mxu0 0.0
  %2144 = vmatprep.subr.mxu0 0.0
  %2145 = vmatpush2.msra.mxu0 0.0
  %2146 = vmatprep.subr.mxu0 0.0
  %2147 = vmatpush2.msra.mxu0 0.0
  %2148 = vmatprep.subr.mxu0 0.0
  %2149 = vmatpush2.msra.mxu0 0.0
  %2150 = vmatprep.subr.mxu0 0.0
  %2151 = vmatpush2.msra.mxu0 0.0
  %2152 = vmatprep.mubr.f32.mxu0 0.0
  %2153 = vmatmul.mubr.f32.gmra.mxu0 %v2065
  %v2154 = vpop.f32.mrf.mxu0
  %v2155 = vadd.f32 0.0, %v2154
  %v2156 = vpop.f32.mrf.mxu0
  %v2157 = vadd.f32 0.0, %v2156
  %2158 = vmatprep.mubr.f32.mxu0 0.0
  %2159 = vmatmul.mubr.f32.gmra.mxu0 %v2068
  %v2160 = vpop.f32.mrf.mxu0
  %v2161 = vadd.f32 0.0, %v2160
  %v2162 = vpop.f32.mrf.mxu0
  %v2163 = vadd.f32 0.0, %v2162
  %2164 = vmatprep.mubr.f32.mxu0 0.0
  %2165 = vmatmul.mubr.f32.gmra.mxu0 %v2071
  %v2166 = vpop.f32.mrf.mxu0
  %v2167 = vadd.f32 0.0, %v2166
  %v2168 = vpop.f32.mrf.mxu0
  %v2169 = vadd.f32 0.0, %v2168
  %2170 = vmatprep.mubr.f32.mxu0 0.0
  %2171 = vmatmul.mubr.f32.gmra.mxu0 %v2074
  %v2172 = vpop.f32.mrf.mxu0
  %v2173 = vadd.f32 0.0, %v2172
  %v2174 = vpop.f32.mrf.mxu0
  %v2175 = vadd.f32 0.0, %v2174
  %2176 = vmatprep.mubr.f32.mxu0 0.0
  %2177 = vmatmul.mubr.f32.gmra.mxu0 %v2077
  %v2178 = vpop.f32.mrf.mxu0
  %v2179 = vadd.f32 0.0, %v2178
  %v2180 = vpop.f32.mrf.mxu0
  %v2181 = vadd.f32 0.0, %v2180
  %2182 = vmatprep.mubr.f32.mxu0 0.0
  %2183 = vmatmul.mubr.f32.gmra.mxu0 %v2080
  %v2184 = vpop.f32.mrf.mxu0
  %v2185 = vadd.f32 0.0, %v2184
  %v2186 = vpop.f32.mrf.mxu0
  %v2187 = vadd.f32 0.0, %v2186
  %2188 = vmatprep.mubr.f32.mxu0 0.0
  %2189 = vmatmul.mubr.f32.gmra.mxu0 %v2083
  %v2190 = vpop.f32.mrf.mxu0
  %v2191 = vadd.f32 0.0, %v2190
  %v2192 = vpop.f32.mrf.mxu0
  %v2193 = vadd.f32 0.0, %v2192
  %2194 = vmatprep.mubr.f32.mxu0 0.0
  %2195 = vmatmul.mubr.f32.gmra.mxu0 %v2086
  %v2196 = vpop.f32.mrf.mxu0
  %v2197 = vadd.f32 0.0, %v2196
  %v2198 = vpop.f32.mrf.mxu0
  %v2199 = vadd.f32 0.0, %v2198
  %2200 = vdwg.mxu0
  %v2201 = vadd.f32 %v1893, %v2155
  %v2202 = vadd.f32 %v1894, %v2157
  %v2203 = vadd.f32 %v1895, %v2161
  %v2204 = vadd.f32 %v1896, %v2163
  %v2205 = vadd.f32 %v1897, %v2167
  %v2206 = vadd.f32 %v1898, %v2169
  %v2207 = vadd.f32 %v1899, %v2173
  %v2208 = vadd.f32 %v1900, %v2175
  %v2209 = vadd.f32 %v1901, %v2179
  %v2210 = vadd.f32 %v1902, %v2181
  %v2211 = vadd.f32 %v1903, %v2185
  %v2212 = vadd.f32 %v1904, %v2187
  %v2213 = vadd.f32 %v1905, %v2191
  %v2214 = vadd.f32 %v1906, %v2193
  %v2215 = vadd.f32 %v1907, %v2197
  %v2216 = vadd.f32 %v1908, %v2199
  %v2217 = vld [vmem:[%s11] sm:$0x1]
  %v2218 = vld [vmem:[%s12] sm:$0x1]
  %v2219 = vadd.s32 %v694, 64
  %v2220 = vadd.s32 %v694, 72
  %v2221 = vadd.s32 %v694, 80
  %v2222 = vadd.s32 %v694, 88
  %v2223 = vadd.s32 %v694, 96
  %v2224 = vadd.s32 %v694, 104
  %v2225 = vadd.s32 %v694, 112
  %v2226 = vadd.s32 %v694, 120
  %v2227 = vadd.s32 %v694, 128
  %v2228 = vadd.s32 %v694, 136
  %v2229 = vadd.s32 %v694, 144
  %v2230 = vadd.s32 %v694, 152
  %v2231 = vadd.s32 %v694, 160
  %v2232 = vadd.s32 %v694, 168
  %v2233 = vadd.s32 %v694, 176
  %v2234 = vadd.s32 %v694, 184
  %v2235 = vadd.s32 %v694, 192
  %v2236 = vadd.s32 %v694, 200
  %v2237 = vadd.s32 %v694, 208
  %v2238 = vadd.s32 %v694, 216
  %v2239 = vadd.s32 %v694, 224
  %v2240 = vadd.s32 %v694, 232
  %v2241 = vadd.s32 %v694, 240
  %v2242 = vadd.s32 %v694, 248
  %vm2243 = vcmp.lt.s32.totalorder %v694, 0
  %v2244 = vsub.s32 0, %v694
  %v2245 = vsel %vm2243, %v2244, %v694
  %v2246 = vshrl.u32 %v2245, 3
  %v2247 = vand.u32 %v2245, 7
  %v2248 = vsub.s32 0, %v2247
  %v2249 = vsel %vm2243, %v2248, %v2247
  %vm2250 = vcmp.lt.s32.totalorder %v695, 0
  %v2251 = vsub.s32 0, %v695
  %v2252 = vsel %vm2250, %v2251, %v695
  %v2253 = vshrl.u32 %v2252, 3
  %v2254 = vand.u32 %v2252, 7
  %v2255 = vsub.s32 0, %v2254
  %v2256 = vsel %vm2250, %v2255, %v2254
  %vm2257 = vcmp.lt.s32.totalorder %v696, 0
  %v2258 = vsub.s32 0, %v696
  %v2259 = vsel %vm2257, %v2258, %v696
  %v2260 = vshrl.u32 %v2259, 3
  %v2261 = vand.u32 %v2259, 7
  %v2262 = vsub.s32 0, %v2261
  %v2263 = vsel %vm2257, %v2262, %v2261
  %vm2264 = vcmp.lt.s32.totalorder %v697, 0
  %v2265 = vsub.s32 0, %v697
  %v2266 = vsel %vm2264, %v2265, %v697
  %v2267 = vshrl.u32 %v2266, 3
  %v2268 = vand.u32 %v2266, 7
  %v2269 = vsub.s32 0, %v2268
  %v2270 = vsel %vm2264, %v2269, %v2268
  %vm2271 = vcmp.lt.s32.totalorder %v698, 0
  %v2272 = vsub.s32 0, %v698
  %v2273 = vsel %vm2271, %v2272, %v698
  %v2274 = vshrl.u32 %v2273, 3
  %v2275 = vand.u32 %v2273, 7
  %v2276 = vsub.s32 0, %v2275
  %v2277 = vsel %vm2271, %v2276, %v2275
  %vm2278 = vcmp.lt.s32.totalorder %v699, 0
  %v2279 = vsub.s32 0, %v699
  %v2280 = vsel %vm2278, %v2279, %v699
  %v2281 = vshrl.u32 %v2280, 3
  %v2282 = vand.u32 %v2280, 7
  %v2283 = vsub.s32 0, %v2282
  %v2284 = vsel %vm2278, %v2283, %v2282
  %vm2285 = vcmp.lt.s32.totalorder %v700, 0
  %v2286 = vsub.s32 0, %v700
  %v2287 = vsel %vm2285, %v2286, %v700
  %v2288 = vshrl.u32 %v2287, 3
  %v2289 = vand.u32 %v2287, 7
  %v2290 = vsub.s32 0, %v2289
  %v2291 = vsel %vm2285, %v2290, %v2289
  %vm2292 = vcmp.lt.s32.totalorder %v701, 0
  %v2293 = vsub.s32 0, %v701
  %v2294 = vsel %vm2292, %v2293, %v701
  %v2295 = vshrl.u32 %v2294, 3
  %v2296 = vand.u32 %v2294, 7
  %v2297 = vsub.s32 0, %v2296
  %v2298 = vsel %vm2292, %v2297, %v2296
  %vm2299 = vcmp.lt.s32.totalorder %v2219, 0
  %v2300 = vsub.s32 0, %v2219
  %v2301 = vsel %vm2299, %v2300, %v2219
  %v2302 = vshrl.u32 %v2301, 3
  %v2303 = vand.u32 %v2301, 7
  %v2304 = vsub.s32 0, %v2303
  %v2305 = vsel %vm2299, %v2304, %v2303
  %vm2306 = vcmp.lt.s32.totalorder %v2220, 0
  %v2307 = vsub.s32 0, %v2220
  %v2308 = vsel %vm2306, %v2307, %v2220
  %v2309 = vshrl.u32 %v2308, 3
  %v2310 = vand.u32 %v2308, 7
  %v2311 = vsub.s32 0, %v2310
  %v2312 = vsel %vm2306, %v2311, %v2310
  %vm2313 = vcmp.lt.s32.totalorder %v2221, 0
  %v2314 = vsub.s32 0, %v2221
  %v2315 = vsel %vm2313, %v2314, %v2221
  %v2316 = vshrl.u32 %v2315, 3
  %v2317 = vand.u32 %v2315, 7
  %v2318 = vsub.s32 0, %v2317
  %v2319 = vsel %vm2313, %v2318, %v2317
  %vm2320 = vcmp.lt.s32.totalorder %v2222, 0
  %v2321 = vsub.s32 0, %v2222
  %v2322 = vsel %vm2320, %v2321, %v2222
  %v2323 = vshrl.u32 %v2322, 3
  %v2324 = vand.u32 %v2322, 7
  %v2325 = vsub.s32 0, %v2324
  %v2326 = vsel %vm2320, %v2325, %v2324
  %vm2327 = vcmp.lt.s32.totalorder %v2223, 0
  %v2328 = vsub.s32 0, %v2223
  %v2329 = vsel %vm2327, %v2328, %v2223
  %v2330 = vshrl.u32 %v2329, 3
  %v2331 = vand.u32 %v2329, 7
  %v2332 = vsub.s32 0, %v2331
  %v2333 = vsel %vm2327, %v2332, %v2331
  %vm2334 = vcmp.lt.s32.totalorder %v2224, 0
  %v2335 = vsub.s32 0, %v2224
  %v2336 = vsel %vm2334, %v2335, %v2224
  %v2337 = vshrl.u32 %v2336, 3
  %v2338 = vand.u32 %v2336, 7
  %v2339 = vsub.s32 0, %v2338
  %v2340 = vsel %vm2334, %v2339, %v2338
  %vm2341 = vcmp.lt.s32.totalorder %v2225, 0
  %v2342 = vsub.s32 0, %v2225
  %v2343 = vsel %vm2341, %v2342, %v2225
  %v2344 = vshrl.u32 %v2343, 3
  %v2345 = vand.u32 %v2343, 7
  %v2346 = vsub.s32 0, %v2345
  %v2347 = vsel %vm2341, %v2346, %v2345
  %vm2348 = vcmp.lt.s32.totalorder %v2226, 0
  %v2349 = vsub.s32 0, %v2226
  %v2350 = vsel %vm2348, %v2349, %v2226
  %v2351 = vshrl.u32 %v2350, 3
  %v2352 = vand.u32 %v2350, 7
  %v2353 = vsub.s32 0, %v2352
  %v2354 = vsel %vm2348, %v2353, %v2352
  %vm2355 = vcmp.lt.s32.totalorder %v2227, 0
  %v2356 = vsub.s32 0, %v2227
  %v2357 = vsel %vm2355, %v2356, %v2227
  %v2358 = vshrl.u32 %v2357, 3
  %v2359 = vand.u32 %v2357, 7
  %v2360 = vsub.s32 0, %v2359
  %v2361 = vsel %vm2355, %v2360, %v2359
  %vm2362 = vcmp.lt.s32.totalorder %v2228, 0
  %v2363 = vsub.s32 0, %v2228
  %v2364 = vsel %vm2362, %v2363, %v2228
  %v2365 = vshrl.u32 %v2364, 3
  %v2366 = vand.u32 %v2364, 7
  %v2367 = vsub.s32 0, %v2366
  %v2368 = vsel %vm2362, %v2367, %v2366
  %vm2369 = vcmp.lt.s32.totalorder %v2229, 0
  %v2370 = vsub.s32 0, %v2229
  %v2371 = vsel %vm2369, %v2370, %v2229
  %v2372 = vshrl.u32 %v2371, 3
  %v2373 = vand.u32 %v2371, 7
  %v2374 = vsub.s32 0, %v2373
  %v2375 = vsel %vm2369, %v2374, %v2373
  %vm2376 = vcmp.lt.s32.totalorder %v2230, 0
  %v2377 = vsub.s32 0, %v2230
  %v2378 = vsel %vm2376, %v2377, %v2230
  %v2379 = vshrl.u32 %v2378, 3
  %v2380 = vand.u32 %v2378, 7
  %v2381 = vsub.s32 0, %v2380
  %v2382 = vsel %vm2376, %v2381, %v2380
  %vm2383 = vcmp.lt.s32.totalorder %v2231, 0
  %v2384 = vsub.s32 0, %v2231
  %v2385 = vsel %vm2383, %v2384, %v2231
  %v2386 = vshrl.u32 %v2385, 3
  %v2387 = vand.u32 %v2385, 7
  %v2388 = vsub.s32 0, %v2387
  %v2389 = vsel %vm2383, %v2388, %v2387
  %vm2390 = vcmp.lt.s32.totalorder %v2232, 0
  %v2391 = vsub.s32 0, %v2232
  %v2392 = vsel %vm2390, %v2391, %v2232
  %v2393 = vshrl.u32 %v2392, 3
  %v2394 = vand.u32 %v2392, 7
  %v2395 = vsub.s32 0, %v2394
  %v2396 = vsel %vm2390, %v2395, %v2394
  %vm2397 = vcmp.lt.s32.totalorder %v2233, 0
  %v2398 = vsub.s32 0, %v2233
  %v2399 = vsel %vm2397, %v2398, %v2233
  %v2400 = vshrl.u32 %v2399, 3
  %v2401 = vand.u32 %v2399, 7
  %v2402 = vsub.s32 0, %v2401
  %v2403 = vsel %vm2397, %v2402, %v2401
  %vm2404 = vcmp.lt.s32.totalorder %v2234, 0
  %v2405 = vsub.s32 0, %v2234
  %v2406 = vsel %vm2404, %v2405, %v2234
  %v2407 = vshrl.u32 %v2406, 3
  %v2408 = vand.u32 %v2406, 7
  %v2409 = vsub.s32 0, %v2408
  %v2410 = vsel %vm2404, %v2409, %v2408
  %vm2411 = vcmp.lt.s32.totalorder %v2235, 0
  %v2412 = vsub.s32 0, %v2235
  %v2413 = vsel %vm2411, %v2412, %v2235
  %v2414 = vshrl.u32 %v2413, 3
  %v2415 = vand.u32 %v2413, 7
  %v2416 = vsub.s32 0, %v2415
  %v2417 = vsel %vm2411, %v2416, %v2415
  %vm2418 = vcmp.lt.s32.totalorder %v2236, 0
  %v2419 = vsub.s32 0, %v2236
  %v2420 = vsel %vm2418, %v2419, %v2236
  %v2421 = vshrl.u32 %v2420, 3
  %v2422 = vand.u32 %v2420, 7
  %v2423 = vsub.s32 0, %v2422
  %v2424 = vsel %vm2418, %v2423, %v2422
  %vm2425 = vcmp.lt.s32.totalorder %v2237, 0
  %v2426 = vsub.s32 0, %v2237
  %v2427 = vsel %vm2425, %v2426, %v2237
  %v2428 = vshrl.u32 %v2427, 3
  %v2429 = vand.u32 %v2427, 7
  %v2430 = vsub.s32 0, %v2429
  %v2431 = vsel %vm2425, %v2430, %v2429
  %vm2432 = vcmp.lt.s32.totalorder %v2238, 0
  %v2433 = vsub.s32 0, %v2238
  %v2434 = vsel %vm2432, %v2433, %v2238
  %v2435 = vshrl.u32 %v2434, 3
  %v2436 = vand.u32 %v2434, 7
  %v2437 = vsub.s32 0, %v2436
  %v2438 = vsel %vm2432, %v2437, %v2436
  %vm2439 = vcmp.lt.s32.totalorder %v2239, 0
  %v2440 = vsub.s32 0, %v2239
  %v2441 = vsel %vm2439, %v2440, %v2239
  %v2442 = vshrl.u32 %v2441, 3
  %v2443 = vand.u32 %v2441, 7
  %v2444 = vsub.s32 0, %v2443
  %v2445 = vsel %vm2439, %v2444, %v2443
  %vm2446 = vcmp.lt.s32.totalorder %v2240, 0
  %v2447 = vsub.s32 0, %v2240
  %v2448 = vsel %vm2446, %v2447, %v2240
  %v2449 = vshrl.u32 %v2448, 3
  %v2450 = vand.u32 %v2448, 7
  %v2451 = vsub.s32 0, %v2450
  %v2452 = vsel %vm2446, %v2451, %v2450
  %vm2453 = vcmp.lt.s32.totalorder %v2241, 0
  %v2454 = vsub.s32 0, %v2241
  %v2455 = vsel %vm2453, %v2454, %v2241
  %v2456 = vshrl.u32 %v2455, 3
  %v2457 = vand.u32 %v2455, 7
  %v2458 = vsub.s32 0, %v2457
  %v2459 = vsel %vm2453, %v2458, %v2457
  %vm2460 = vcmp.lt.s32.totalorder %v2242, 0
  %v2461 = vsub.s32 0, %v2242
  %v2462 = vsel %vm2460, %v2461, %v2242
  %v2463 = vshrl.u32 %v2462, 3
  %v2464 = vand.u32 %v2462, 7
  %v2465 = vsub.s32 0, %v2464
  %v2466 = vsel %vm2460, %v2465, %v2464
  %vm2467 = vcmp.ne.s32.totalorder %v2249, 0
  %vm2468 = vcmp.ne.s32.totalorder %v2256, 0
  %vm2469 = vcmp.ne.s32.totalorder %v2263, 0
  %vm2470 = vcmp.ne.s32.totalorder %v2270, 0
  %vm2471 = vcmp.ne.s32.totalorder %v2277, 0
  %vm2472 = vcmp.ne.s32.totalorder %v2284, 0
  %vm2473 = vcmp.ne.s32.totalorder %v2291, 0
  %vm2474 = vcmp.ne.s32.totalorder %v2298, 0
  %vm2475 = vcmp.ne.s32.totalorder %v2305, 0
  %vm2476 = vcmp.ne.s32.totalorder %v2312, 0
  %vm2477 = vcmp.ne.s32.totalorder %v2319, 0
  %vm2478 = vcmp.ne.s32.totalorder %v2326, 0
  %vm2479 = vcmp.ne.s32.totalorder %v2333, 0
  %vm2480 = vcmp.ne.s32.totalorder %v2340, 0
  %vm2481 = vcmp.ne.s32.totalorder %v2347, 0
  %vm2482 = vcmp.ne.s32.totalorder %v2354, 0
  %vm2483 = vcmp.ne.s32.totalorder %v2361, 0
  %vm2484 = vcmp.ne.s32.totalorder %v2368, 0
  %vm2485 = vcmp.ne.s32.totalorder %v2375, 0
  %vm2486 = vcmp.ne.s32.totalorder %v2382, 0
  %vm2487 = vcmp.ne.s32.totalorder %v2389, 0
  %vm2488 = vcmp.ne.s32.totalorder %v2396, 0
  %vm2489 = vcmp.ne.s32.totalorder %v2403, 0
  %vm2490 = vcmp.ne.s32.totalorder %v2410, 0
  %vm2491 = vcmp.ne.s32.totalorder %v2417, 0
  %vm2492 = vcmp.ne.s32.totalorder %v2424, 0
  %vm2493 = vcmp.ne.s32.totalorder %v2431, 0
  %vm2494 = vcmp.ne.s32.totalorder %v2438, 0
  %vm2495 = vcmp.ne.s32.totalorder %v2445, 0
  %vm2496 = vcmp.ne.s32.totalorder %v2452, 0
  %vm2497 = vcmp.ne.s32.totalorder %v2459, 0
  %vm2498 = vcmp.ne.s32.totalorder %v2466, 0
  %vm2499 = vcmp.lt.s32.totalorder %v2249, 0
  %vm2500 = vcmp.lt.s32.totalorder %v2256, 0
  %vm2501 = vcmp.lt.s32.totalorder %v2263, 0
  %vm2502 = vcmp.lt.s32.totalorder %v2270, 0
  %vm2503 = vcmp.lt.s32.totalorder %v2277, 0
  %vm2504 = vcmp.lt.s32.totalorder %v2284, 0
  %vm2505 = vcmp.lt.s32.totalorder %v2291, 0
  %vm2506 = vcmp.lt.s32.totalorder %v2298, 0
  %vm2507 = vcmp.lt.s32.totalorder %v2305, 0
  %vm2508 = vcmp.lt.s32.totalorder %v2312, 0
  %vm2509 = vcmp.lt.s32.totalorder %v2319, 0
  %vm2510 = vcmp.lt.s32.totalorder %v2326, 0
  %vm2511 = vcmp.lt.s32.totalorder %v2333, 0
  %vm2512 = vcmp.lt.s32.totalorder %v2340, 0
  %vm2513 = vcmp.lt.s32.totalorder %v2347, 0
  %vm2514 = vcmp.lt.s32.totalorder %v2354, 0
  %vm2515 = vcmp.lt.s32.totalorder %v2361, 0
  %vm2516 = vcmp.lt.s32.totalorder %v2368, 0
  %vm2517 = vcmp.lt.s32.totalorder %v2375, 0
  %vm2518 = vcmp.lt.s32.totalorder %v2382, 0
  %vm2519 = vcmp.lt.s32.totalorder %v2389, 0
  %vm2520 = vcmp.lt.s32.totalorder %v2396, 0
  %vm2521 = vcmp.lt.s32.totalorder %v2403, 0
  %vm2522 = vcmp.lt.s32.totalorder %v2410, 0
  %vm2523 = vcmp.lt.s32.totalorder %v2417, 0
  %vm2524 = vcmp.lt.s32.totalorder %v2424, 0
  %vm2525 = vcmp.lt.s32.totalorder %v2431, 0
  %vm2526 = vcmp.lt.s32.totalorder %v2438, 0
  %vm2527 = vcmp.lt.s32.totalorder %v2445, 0
  %vm2528 = vcmp.lt.s32.totalorder %v2452, 0
  %vm2529 = vcmp.lt.s32.totalorder %v2459, 0
  %vm2530 = vcmp.lt.s32.totalorder %v2466, 0
  %vm2531 = vmand %vm2499, %vm2467
  %vm2532 = vmand %vm2500, %vm2468
  %vm2533 = vmand %vm2501, %vm2469
  %vm2534 = vmand %vm2502, %vm2470
  %vm2535 = vmand %vm2503, %vm2471
  %vm2536 = vmand %vm2504, %vm2472
  %vm2537 = vmand %vm2505, %vm2473
  %vm2538 = vmand %vm2506, %vm2474
  %vm2539 = vmand %vm2507, %vm2475
  %vm2540 = vmand %vm2508, %vm2476
  %vm2541 = vmand %vm2509, %vm2477
  %vm2542 = vmand %vm2510, %vm2478
  %vm2543 = vmand %vm2511, %vm2479
  %vm2544 = vmand %vm2512, %vm2480
  %vm2545 = vmand %vm2513, %vm2481
  %vm2546 = vmand %vm2514, %vm2482
  %vm2547 = vmand %vm2515, %vm2483
  %vm2548 = vmand %vm2516, %vm2484
  %vm2549 = vmand %vm2517, %vm2485
  %vm2550 = vmand %vm2518, %vm2486
  %vm2551 = vmand %vm2519, %vm2487
  %vm2552 = vmand %vm2520, %vm2488
  %vm2553 = vmand %vm2521, %vm2489
  %vm2554 = vmand %vm2522, %vm2490
  %vm2555 = vmand %vm2523, %vm2491
  %vm2556 = vmand %vm2524, %vm2492
  %vm2557 = vmand %vm2525, %vm2493
  %vm2558 = vmand %vm2526, %vm2494
  %vm2559 = vmand %vm2527, %vm2495
  %vm2560 = vmand %vm2528, %vm2496
  %vm2561 = vmand %vm2529, %vm2497
  %vm2562 = vmand %vm2530, %vm2498
  %v2563 = vadd.s32 %v2249, 8
  %v2564 = vadd.s32 %v2256, 8
  %v2565 = vadd.s32 %v2263, 8
  %v2566 = vadd.s32 %v2270, 8
  %v2567 = vadd.s32 %v2277, 8
  %v2568 = vadd.s32 %v2284, 8
  %v2569 = vadd.s32 %v2291, 8
  %v2570 = vadd.s32 %v2298, 8
  %v2571 = vadd.s32 %v2305, 8
  %v2572 = vadd.s32 %v2312, 8
  %v2573 = vadd.s32 %v2319, 8
  %v2574 = vadd.s32 %v2326, 8
  %v2575 = vadd.s32 %v2333, 8
  %v2576 = vadd.s32 %v2340, 8
  %v2577 = vadd.s32 %v2347, 8
  %v2578 = vadd.s32 %v2354, 8
  %v2579 = vadd.s32 %v2361, 8
  %v2580 = vadd.s32 %v2368, 8
  %v2581 = vadd.s32 %v2375, 8
  %v2582 = vadd.s32 %v2382, 8
  %v2583 = vadd.s32 %v2389, 8
  %v2584 = vadd.s32 %v2396, 8
  %v2585 = vadd.s32 %v2403, 8
  %v2586 = vadd.s32 %v2410, 8
  %v2587 = vadd.s32 %v2417, 8
  %v2588 = vadd.s32 %v2424, 8
  %v2589 = vadd.s32 %v2431, 8
  %v2590 = vadd.s32 %v2438, 8
  %v2591 = vadd.s32 %v2445, 8
  %v2592 = vadd.s32 %v2452, 8
  %v2593 = vadd.s32 %v2459, 8
  %v2594 = vadd.s32 %v2466, 8
  %v2595 = vsel %vm2531, %v2563, %v2249
  %v2596 = vsel %vm2532, %v2564, %v2256
  %v2597 = vsel %vm2533, %v2565, %v2263
  %v2598 = vsel %vm2534, %v2566, %v2270
  %v2599 = vsel %vm2535, %v2567, %v2277
  %v2600 = vsel %vm2536, %v2568, %v2284
  %v2601 = vsel %vm2537, %v2569, %v2291
  %v2602 = vsel %vm2538, %v2570, %v2298
  %v2603 = vsel %vm2539, %v2571, %v2305
  %v2604 = vsel %vm2540, %v2572, %v2312
  %v2605 = vsel %vm2541, %v2573, %v2319
  %v2606 = vsel %vm2542, %v2574, %v2326
  %v2607 = vsel %vm2543, %v2575, %v2333
  %v2608 = vsel %vm2544, %v2576, %v2340
  %v2609 = vsel %vm2545, %v2577, %v2347
  %v2610 = vsel %vm2546, %v2578, %v2354
  %v2611 = vsel %vm2547, %v2579, %v2361
  %v2612 = vsel %vm2548, %v2580, %v2368
  %v2613 = vsel %vm2549, %v2581, %v2375
  %v2614 = vsel %vm2550, %v2582, %v2382
  %v2615 = vsel %vm2551, %v2583, %v2389
  %v2616 = vsel %vm2552, %v2584, %v2396
  %v2617 = vsel %vm2553, %v2585, %v2403
  %v2618 = vsel %vm2554, %v2586, %v2410
  %v2619 = vsel %vm2555, %v2587, %v2417
  %v2620 = vsel %vm2556, %v2588, %v2424
  %v2621 = vsel %vm2557, %v2589, %v2431
  %v2622 = vsel %vm2558, %v2590, %v2438
  %v2623 = vsel %vm2559, %v2591, %v2445
  %v2624 = vsel %vm2560, %v2592, %v2452
  %v2625 = vsel %vm2561, %v2593, %v2459
  %v2626 = vsel %vm2562, %v2594, %v2466
  %vm2627 = vcmp.eq.s32.totalorder %v2595, %v703
  %vm2628 = vcmp.eq.s32.totalorder %v2596, %v703
  %vm2629 = vcmp.eq.s32.totalorder %v2597, %v703
  %vm2630 = vcmp.eq.s32.totalorder %v2598, %v703
  %vm2631 = vcmp.eq.s32.totalorder %v2599, %v703
  %vm2632 = vcmp.eq.s32.totalorder %v2600, %v703
  %vm2633 = vcmp.eq.s32.totalorder %v2601, %v703
  %vm2634 = vcmp.eq.s32.totalorder %v2602, %v703
  %vm2635 = vcmp.eq.s32.totalorder %v2603, %v703
  %vm2636 = vcmp.eq.s32.totalorder %v2604, %v703
  %vm2637 = vcmp.eq.s32.totalorder %v2605, %v703
  %vm2638 = vcmp.eq.s32.totalorder %v2606, %v703
  %vm2639 = vcmp.eq.s32.totalorder %v2607, %v703
  %vm2640 = vcmp.eq.s32.totalorder %v2608, %v703
  %vm2641 = vcmp.eq.s32.totalorder %v2609, %v703
  %vm2642 = vcmp.eq.s32.totalorder %v2610, %v703
  %vm2643 = vcmp.eq.s32.totalorder %v2611, %v703
  %vm2644 = vcmp.eq.s32.totalorder %v2612, %v703
  %vm2645 = vcmp.eq.s32.totalorder %v2613, %v703
  %vm2646 = vcmp.eq.s32.totalorder %v2614, %v703
  %vm2647 = vcmp.eq.s32.totalorder %v2615, %v703
  %vm2648 = vcmp.eq.s32.totalorder %v2616, %v703
  %vm2649 = vcmp.eq.s32.totalorder %v2617, %v703
  %vm2650 = vcmp.eq.s32.totalorder %v2618, %v703
  %vm2651 = vcmp.eq.s32.totalorder %v2619, %v703
  %vm2652 = vcmp.eq.s32.totalorder %v2620, %v703
  %vm2653 = vcmp.eq.s32.totalorder %v2621, %v703
  %vm2654 = vcmp.eq.s32.totalorder %v2622, %v703
  %vm2655 = vcmp.eq.s32.totalorder %v2623, %v703
  %vm2656 = vcmp.eq.s32.totalorder %v2624, %v703
  %vm2657 = vcmp.eq.s32.totalorder %v2625, %v703
  %vm2658 = vcmp.eq.s32.totalorder %v2626, %v703
  %v2659 = vsel %vm2627, 1, 0
  %v2660 = vsel %vm2628, 1, 0
  %v2661 = vsel %vm2629, 1, 0
  %v2662 = vsel %vm2630, 1, 0
  %v2663 = vsel %vm2631, 1, 0
  %v2664 = vsel %vm2632, 1, 0
  %v2665 = vsel %vm2633, 1, 0
  %v2666 = vsel %vm2634, 1, 0
  %v2667 = vsel %vm2635, 1, 0
  %v2668 = vsel %vm2636, 1, 0
  %v2669 = vsel %vm2637, 1, 0
  %v2670 = vsel %vm2638, 1, 0
  %v2671 = vsel %vm2639, 1, 0
  %v2672 = vsel %vm2640, 1, 0
  %v2673 = vsel %vm2641, 1, 0
  %v2674 = vsel %vm2642, 1, 0
  %v2675 = vsel %vm2643, 1, 0
  %v2676 = vsel %vm2644, 1, 0
  %v2677 = vsel %vm2645, 1, 0
  %v2678 = vsel %vm2646, 1, 0
  %v2679 = vsel %vm2647, 1, 0
  %v2680 = vsel %vm2648, 1, 0
  %v2681 = vsel %vm2649, 1, 0
  %v2682 = vsel %vm2650, 1, 0
  %v2683 = vsel %vm2651, 1, 0
  %v2684 = vsel %vm2652, 1, 0
  %v2685 = vsel %vm2653, 1, 0
  %v2686 = vsel %vm2654, 1, 0
  %v2687 = vsel %vm2655, 1, 0
  %v2688 = vsel %vm2656, 1, 0
  %v2689 = vsel %vm2657, 1, 0
  %v2690 = vsel %vm2658, 1, 0
  %v2691 = vcvt.s32.f32 %v2659
  %v2692 = vcvt.s32.f32 %v2660
  %v2693 = vcvt.s32.f32 %v2661
  %v2694 = vcvt.s32.f32 %v2662
  %v2695 = vcvt.s32.f32 %v2663
  %v2696 = vcvt.s32.f32 %v2664
  %v2697 = vcvt.s32.f32 %v2665
  %v2698 = vcvt.s32.f32 %v2666
  %v2699 = vcvt.s32.f32 %v2667
  %v2700 = vcvt.s32.f32 %v2668
  %v2701 = vcvt.s32.f32 %v2669
  %v2702 = vcvt.s32.f32 %v2670
  %v2703 = vcvt.s32.f32 %v2671
  %v2704 = vcvt.s32.f32 %v2672
  %v2705 = vcvt.s32.f32 %v2673
  %v2706 = vcvt.s32.f32 %v2674
  %v2707 = vcvt.s32.f32 %v2675
  %v2708 = vcvt.s32.f32 %v2676
  %v2709 = vcvt.s32.f32 %v2677
  %v2710 = vcvt.s32.f32 %v2678
  %v2711 = vcvt.s32.f32 %v2679
  %v2712 = vcvt.s32.f32 %v2680
  %v2713 = vcvt.s32.f32 %v2681
  %v2714 = vcvt.s32.f32 %v2682
  %v2715 = vcvt.s32.f32 %v2683
  %v2716 = vcvt.s32.f32 %v2684
  %v2717 = vcvt.s32.f32 %v2685
  %v2718 = vcvt.s32.f32 %v2686
  %v2719 = vcvt.s32.f32 %v2687
  %v2720 = vcvt.s32.f32 %v2688
  %v2721 = vcvt.s32.f32 %v2689
  %v2722 = vcvt.s32.f32 %v2690
  %v2723 = vadd.s32 %v703, 128
  %vm2724 = vcmp.lt.s32.totalorder %v703, 0
  %v2725 = vsub.s32 0, %v703
  %v2726 = vsel %vm2724, %v2725, %v703
  %v2727 = vshrl.u32 %v2726, 3
  %v2728 = vand.u32 %v2726, 7
  %v2729 = vsub.s32 0, %v2728
  %v2730 = vsel %vm2724, %v2729, %v2728
  %vm2731 = vcmp.lt.s32.totalorder %v2723, 0
  %v2732 = vsub.s32 0, %v2723
  %v2733 = vsel %vm2731, %v2732, %v2723
  %v2734 = vshrl.u32 %v2733, 3
  %v2735 = vand.u32 %v2733, 7
  %v2736 = vsub.s32 0, %v2735
  %v2737 = vsel %vm2731, %v2736, %v2735
  %vm2738 = vcmp.ne.s32.totalorder %v2730, 0
  %vm2739 = vcmp.ne.s32.totalorder %v2737, 0
  %vm2740 = vcmp.lt.s32.totalorder %v2730, 0
  %vm2741 = vcmp.lt.s32.totalorder %v2737, 0
  %vm2742 = vmand %vm2740, %vm2738
  %vm2743 = vmand %vm2741, %vm2739
  %v2744 = vadd.s32 %v2730, 8
  %v2745 = vadd.s32 %v2737, 8
  %v2746 = vsel %vm2742, %v2744, %v2730
  %v2747 = vsel %vm2743, %v2745, %v2737
  %vm2748 = vcmp.eq.s32.totalorder %v2746, %v694
  %vm2749 = vcmp.eq.s32.totalorder %v2747, %v694
  %v2750 = vsel %vm2748, 1, 0
  %v2751 = vsel %vm2749, 1, 0
  %v2752 = vcvt.s32.f32 %v2750
  %v2753 = vcvt.s32.f32 %v2751
  %v2754 = vadd.f32 %v2201, %v2203
  %v2755 = vadd.f32 %v2754, %v2205
  %v2756 = vadd.f32 %v2755, %v2207
  %v2757 = vadd.f32 %v2756, %v2209
  %v2758 = vadd.f32 %v2757, %v2211
  %v2759 = vadd.f32 %v2758, %v2213
  %v2760 = vadd.f32 %v2759, %v2215
  %v2761 = vrot.slane %v2760, 4
  %v2762 = vadd.f32 %v2760, %v2761
  %v2763 = vrot.slane %v2762, 2
  %v2764 = vadd.f32 %v2762, %v2763
  %v2765 = vrot.slane %v2764, 1
  %v2766 = vadd.f32 %v2764, %v2765
  %v2767 = vadd.f32 %v2202, %v2204
  %v2768 = vadd.f32 %v2767, %v2206
  %v2769 = vadd.f32 %v2768, %v2208
  %v2770 = vadd.f32 %v2769, %v2210
  %v2771 = vadd.f32 %v2770, %v2212
  %v2772 = vadd.f32 %v2771, %v2214
  %v2773 = vadd.f32 %v2772, %v2216
  %v2774 = vrot.slane %v2773, 4
  %v2775 = vadd.f32 %v2773, %v2774
  %v2776 = vrot.slane %v2775, 2
  %v2777 = vadd.f32 %v2775, %v2776
  %v2778 = vrot.slane %v2777, 1
  %v2779 = vadd.f32 %v2777, %v2778
  %2780 = vmatprep.subr.mxu0 0.0
  %2781 = vmatpush1.msra.mxu0 %v2706
  %2782 = vmatprep.subr.mxu0 0.0
  %2783 = vmatpush1.msra.mxu0 %v2705
  %2784 = vmatprep.subr.mxu0 0.0
  %2785 = vmatpush1.msra.mxu0 %v2704
  %2786 = vmatprep.subr.mxu0 0.0
  %2787 = vmatpush1.msra.mxu0 %v2703
  %2788 = vmatprep.subr.mxu0 0.0
  %2789 = vmatpush1.msra.mxu0 %v2702
  %2790 = vmatprep.subr.mxu0 0.0
  %2791 = vmatpush1.msra.mxu0 %v2701
  %2792 = vmatprep.subr.mxu0 0.0
  %2793 = vmatpush1.msra.mxu0 %v2700
  %2794 = vmatprep.subr.mxu0 0.0
  %2795 = vmatpush1.msra.mxu0 %v2699
  %2796 = vmatprep.subr.mxu0 0.0
  %2797 = vmatpush1.msra.mxu0 %v2698
  %2798 = vmatprep.subr.mxu0 0.0
  %2799 = vmatpush1.msra.mxu0 %v2697
  %2800 = vmatprep.subr.mxu0 0.0
  %2801 = vmatpush1.msra.mxu0 %v2696
  %2802 = vmatprep.subr.mxu0 0.0
  %2803 = vmatpush1.msra.mxu0 %v2695
  %2804 = vmatprep.subr.mxu0 0.0
  %2805 = vmatpush1.msra.mxu0 %v2694
  %2806 = vmatprep.subr.mxu0 0.0
  %2807 = vmatpush1.msra.mxu0 %v2693
  %2808 = vmatprep.subr.mxu0 0.0
  %2809 = vmatpush1.msra.mxu0 %v2692
  %2810 = vmatprep.subr.mxu0 0.0
  %2811 = vmatpush1.msra.mxu0 %v2691
  %2812 = vmatprep.subr.mxu0 0.0
  %2813 = vmatpush2.msra.mxu0 %v2722
  %2814 = vmatprep.subr.mxu0 0.0
  %2815 = vmatpush2.msra.mxu0 %v2721
  %2816 = vmatprep.subr.mxu0 0.0
  %2817 = vmatpush2.msra.mxu0 %v2720
  %2818 = vmatprep.subr.mxu0 0.0
  %2819 = vmatpush2.msra.mxu0 %v2719
  %2820 = vmatprep.subr.mxu0 0.0
  %2821 = vmatpush2.msra.mxu0 %v2718
  %2822 = vmatprep.subr.mxu0 0.0
  %2823 = vmatpush2.msra.mxu0 %v2717
  %2824 = vmatprep.subr.mxu0 0.0
  %2825 = vmatpush2.msra.mxu0 %v2716
  %2826 = vmatprep.subr.mxu0 0.0
  %2827 = vmatpush2.msra.mxu0 %v2715
  %2828 = vmatprep.subr.mxu0 0.0
  %2829 = vmatpush2.msra.mxu0 %v2714
  %2830 = vmatprep.subr.mxu0 0.0
  %2831 = vmatpush2.msra.mxu0 %v2713
  %2832 = vmatprep.subr.mxu0 0.0
  %2833 = vmatpush2.msra.mxu0 %v2712
  %2834 = vmatprep.subr.mxu0 0.0
  %2835 = vmatpush2.msra.mxu0 %v2711
  %2836 = vmatprep.subr.mxu0 0.0
  %2837 = vmatpush2.msra.mxu0 %v2710
  %2838 = vmatprep.subr.mxu0 0.0
  %2839 = vmatpush2.msra.mxu0 %v2709
  %2840 = vmatprep.subr.mxu0 0.0
  %2841 = vmatpush2.msra.mxu0 %v2708
  %2842 = vmatprep.subr.mxu0 0.0
  %2843 = vmatpush2.msra.mxu0 %v2707
  %2844 = vmatprep.mubr.f32.mxu0 %v2779
  %2845 = vmatmul.mubr.f32.gmra.mxu0 %v2766
  %v2846 = vpop.f32.mrf.mxu0
  %v2847 = vadd.f32 0.0, %v2846
  %v2848 = vpop.f32.mrf.mxu0
  %2849 = vdwg.mxu0
  %v2850 = vrcp.pop 2048.0
  %v2851 = vmul.f32 %v2847, %v2850
  %vm2852 = vcmask 64512
  %v2854 = vsel %vm2852, %v2851, 0
  %2856 = vmatprep.subr.mxu0 0.0
  %2857 = vmatpush1.msra.mxu0 0.0
  %2858 = vmatprep.subr.mxu0 0.0
  %2859 = vmatpush1.msra.mxu0 0.0
  %2860 = vmatprep.subr.mxu0 0.0
  %2861 = vmatpush1.msra.mxu0 0.0
  %2862 = vmatprep.subr.mxu0 0.0
  %2863 = vmatpush1.msra.mxu0 0.0
  %2864 = vmatprep.subr.mxu0 0.0
  %2865 = vmatpush1.msra.mxu0 0.0
  %2866 = vmatprep.subr.mxu0 0.0
  %2867 = vmatpush1.msra.mxu0 0.0
  %2868 = vmatprep.subr.mxu0 0.0
  %2869 = vmatpush1.msra.mxu0 0.0
  %2870 = vmatprep.subr.mxu0 0.0
  %2871 = vmatpush1.msra.mxu0 0.0
  %2872 = vmatprep.subr.mxu0 0.0
  %2873 = vmatpush1.msra.mxu0 0.0
  %2874 = vmatprep.subr.mxu0 0.0
  %2875 = vmatpush1.msra.mxu0 0.0
  %2876 = vmatprep.subr.mxu0 0.0
  %2877 = vmatpush1.msra.mxu0 0.0
  %2878 = vmatprep.subr.mxu0 0.0
  %2879 = vmatpush1.msra.mxu0 0.0
  %2880 = vmatprep.subr.mxu0 0.0
  %2881 = vmatpush1.msra.mxu0 0.0
  %2882 = vmatprep.subr.mxu0 0.0
  %2883 = vmatpush1.msra.mxu0 0.0
  %2884 = vmatprep.subr.mxu0 0.0
  %2885 = vmatpush1.msra.mxu0 0.0
  %2886 = vmatprep.subr.mxu0 %v2753
  %2887 = vmatpush1.msra.mxu0 %v2752
  %2888 = vmatprep.subr.mxu0 0.0
  %2889 = vmatpush2.msra.mxu0 0.0
  %2890 = vmatprep.subr.mxu0 0.0
  %2891 = vmatpush2.msra.mxu0 0.0
  %2892 = vmatprep.subr.mxu0 0.0
  %2893 = vmatpush2.msra.mxu0 0.0
  %2894 = vmatprep.subr.mxu0 0.0
  %2895 = vmatpush2.msra.mxu0 0.0
  %2896 = vmatprep.subr.mxu0 0.0
  %2897 = vmatpush2.msra.mxu0 0.0
  %2898 = vmatprep.subr.mxu0 0.0
  %2899 = vmatpush2.msra.mxu0 0.0
  %2900 = vmatprep.subr.mxu0 0.0
  %2901 = vmatpush2.msra.mxu0 0.0
  %2902 = vmatprep.subr.mxu0 0.0
  %2903 = vmatpush2.msra.mxu0 0.0
  %2904 = vmatprep.subr.mxu0 0.0
  %2905 = vmatpush2.msra.mxu0 0.0
  %2906 = vmatprep.subr.mxu0 0.0
  %2907 = vmatpush2.msra.mxu0 0.0
  %2908 = vmatprep.subr.mxu0 0.0
  %2909 = vmatpush2.msra.mxu0 0.0
  %2910 = vmatprep.subr.mxu0 0.0
  %2911 = vmatpush2.msra.mxu0 0.0
  %2912 = vmatprep.subr.mxu0 0.0
  %2913 = vmatpush2.msra.mxu0 0.0
  %2914 = vmatprep.subr.mxu0 0.0
  %2915 = vmatpush2.msra.mxu0 0.0
  %2916 = vmatprep.subr.mxu0 0.0
  %2917 = vmatpush2.msra.mxu0 0.0
  %2918 = vmatprep.subr.mxu0 0.0
  %2919 = vmatpush2.msra.mxu0 0.0
  %2920 = vmatprep.mubr.f32.mxu0 0.0
  %2921 = vmatmul.mubr.f32.gmra.mxu0 %v2854
  %v2922 = vpop.f32.mrf.mxu0
  %v2923 = vadd.f32 0.0, %v2922
  %v2924 = vpop.f32.mrf.mxu0
  %v2925 = vadd.f32 0.0, %v2924
  %2926 = vdwg.mxu0
  %v2927 = vlaneseq
  %v2928 = vshrl.u32 %v2927, 7
  %v2929 = vsub.s32 0, %v2928
  %v2930 = vrot.slane %v2923, %v2929
  %v2931 = vlaneseq
  %v2932 = vshrl.u32 %v2931, 7
  %v2933 = vsub.s32 0, %v2932
  %v2934 = vrot.slane %v2925, %v2933
  %v2935 = vsub.f32 %v2201, %v2930
  %v2936 = vsub.f32 %v2202, %v2934
  %v2937 = vsub.f32 %v2203, %v2930
  %v2938 = vsub.f32 %v2204, %v2934
  %v2939 = vsub.f32 %v2205, %v2930
  %v2940 = vsub.f32 %v2206, %v2934
  %v2941 = vsub.f32 %v2207, %v2930
  %v2942 = vsub.f32 %v2208, %v2934
  %v2943 = vsub.f32 %v2209, %v2930
  %v2944 = vsub.f32 %v2210, %v2934
  %v2945 = vsub.f32 %v2211, %v2930
  %v2946 = vsub.f32 %v2212, %v2934
  %v2947 = vsub.f32 %v2213, %v2930
  %v2948 = vsub.f32 %v2214, %v2934
  %v2949 = vsub.f32 %v2215, %v2930
  %v2950 = vsub.f32 %v2216, %v2934
  %v2951 = vmul.f32 %v2935, %v2935
  %v2952 = vmul.f32 %v2936, %v2936
  %v2953 = vmul.f32 %v2937, %v2937
  %v2954 = vmul.f32 %v2938, %v2938
  %v2955 = vmul.f32 %v2939, %v2939
  %v2956 = vmul.f32 %v2940, %v2940
  %v2957 = vmul.f32 %v2941, %v2941
  %v2958 = vmul.f32 %v2942, %v2942
  %v2959 = vmul.f32 %v2943, %v2943
  %v2960 = vmul.f32 %v2944, %v2944
  %v2961 = vmul.f32 %v2945, %v2945
  %v2962 = vmul.f32 %v2946, %v2946
  %v2963 = vmul.f32 %v2947, %v2947
  %v2964 = vmul.f32 %v2948, %v2948
  %v2965 = vmul.f32 %v2949, %v2949
  %v2966 = vmul.f32 %v2950, %v2950
  %v2967 = vadd.f32 %v2951, %v2953
  %v2968 = vadd.f32 %v2967, %v2955
  %v2969 = vadd.f32 %v2968, %v2957
  %v2970 = vadd.f32 %v2969, %v2959
  %v2971 = vadd.f32 %v2970, %v2961
  %v2972 = vadd.f32 %v2971, %v2963
  %v2973 = vadd.f32 %v2972, %v2965
  %v2974 = vrot.slane %v2973, 4
  %v2975 = vadd.f32 %v2973, %v2974
  %v2976 = vrot.slane %v2975, 2
  %v2977 = vadd.f32 %v2975, %v2976
  %v2978 = vrot.slane %v2977, 1
  %v2979 = vadd.f32 %v2977, %v2978
  %v2980 = vadd.f32 %v2952, %v2954
  %v2981 = vadd.f32 %v2980, %v2956
  %v2982 = vadd.f32 %v2981, %v2958
  %v2983 = vadd.f32 %v2982, %v2960
  %v2984 = vadd.f32 %v2983, %v2962
  %v2985 = vadd.f32 %v2984, %v2964
  %v2986 = vadd.f32 %v2985, %v2966
  %v2987 = vrot.slane %v2986, 4
  %v2988 = vadd.f32 %v2986, %v2987
  %v2989 = vrot.slane %v2988, 2
  %v2990 = vadd.f32 %v2988, %v2989
  %v2991 = vrot.slane %v2990, 1
  %v2992 = vadd.f32 %v2990, %v2991
  %2993 = vmatprep.subr.mxu0 0.0
  %2994 = vmatpush1.msra.mxu0 %v2706
  %2995 = vmatprep.subr.mxu0 0.0
  %2996 = vmatpush1.msra.mxu0 %v2705
  %2997 = vmatprep.subr.mxu0 0.0
  %2998 = vmatpush1.msra.mxu0 %v2704
  %2999 = vmatprep.subr.mxu0 0.0
  %3000 = vmatpush1.msra.mxu0 %v2703
  %3001 = vmatprep.subr.mxu0 0.0
  %3002 = vmatpush1.msra.mxu0 %v2702
  %3003 = vmatprep.subr.mxu0 0.0
  %3004 = vmatpush1.msra.mxu0 %v2701
  %3005 = vmatprep.subr.mxu0 0.0
  %3006 = vmatpush1.msra.mxu0 %v2700
  %3007 = vmatprep.subr.mxu0 0.0
  %3008 = vmatpush1.msra.mxu0 %v2699
  %3009 = vmatprep.subr.mxu0 0.0
  %3010 = vmatpush1.msra.mxu0 %v2698
  %3011 = vmatprep.subr.mxu0 0.0
  %3012 = vmatpush1.msra.mxu0 %v2697
  %3013 = vmatprep.subr.mxu0 0.0
  %3014 = vmatpush1.msra.mxu0 %v2696
  %3015 = vmatprep.subr.mxu0 0.0
  %3016 = vmatpush1.msra.mxu0 %v2695
  %3017 = vmatprep.subr.mxu0 0.0
  %3018 = vmatpush1.msra.mxu0 %v2694
  %3019 = vmatprep.subr.mxu0 0.0
  %3020 = vmatpush1.msra.mxu0 %v2693
  %3021 = vmatprep.subr.mxu0 0.0
  %3022 = vmatpush1.msra.mxu0 %v2692
  %3023 = vmatprep.subr.mxu0 0.0
  %3024 = vmatpush1.msra.mxu0 %v2691
  %3025 = vmatprep.subr.mxu0 0.0
  %3026 = vmatpush2.msra.mxu0 %v2722
  %3027 = vmatprep.subr.mxu0 0.0
  %3028 = vmatpush2.msra.mxu0 %v2721
  %3029 = vmatprep.subr.mxu0 0.0
  %3030 = vmatpush2.msra.mxu0 %v2720
  %3031 = vmatprep.subr.mxu0 0.0
  %3032 = vmatpush2.msra.mxu0 %v2719
  %3033 = vmatprep.subr.mxu0 0.0
  %3034 = vmatpush2.msra.mxu0 %v2718
  %3035 = vmatprep.subr.mxu0 0.0
  %3036 = vmatpush2.msra.mxu0 %v2717
  %3037 = vmatprep.subr.mxu0 0.0
  %3038 = vmatpush2.msra.mxu0 %v2716
  %3039 = vmatprep.subr.mxu0 0.0
  %3040 = vmatpush2.msra.mxu0 %v2715
  %3041 = vmatprep.subr.mxu0 0.0
  %3042 = vmatpush2.msra.mxu0 %v2714
  %3043 = vmatprep.subr.mxu0 0.0
  %3044 = vmatpush2.msra.mxu0 %v2713
  %3045 = vmatprep.subr.mxu0 0.0
  %3046 = vmatpush2.msra.mxu0 %v2712
  %3047 = vmatprep.subr.mxu0 0.0
  %3048 = vmatpush2.msra.mxu0 %v2711
  %3049 = vmatprep.subr.mxu0 0.0
  %3050 = vmatpush2.msra.mxu0 %v2710
  %3051 = vmatprep.subr.mxu0 0.0
  %3052 = vmatpush2.msra.mxu0 %v2709
  %3053 = vmatprep.subr.mxu0 0.0
  %3054 = vmatpush2.msra.mxu0 %v2708
  %3055 = vmatprep.subr.mxu0 0.0
  %3056 = vmatpush2.msra.mxu0 %v2707
  %3057 = vmatprep.mubr.f32.mxu0 %v2992
  %3058 = vmatmul.mubr.f32.gmra.mxu0 %v2979
  %v3059 = vpop.f32.mrf.mxu0
  %v3060 = vadd.f32 0.0, %v3059
  %v3061 = vpop.f32.mrf.mxu0
  %3062 = vdwg.mxu0
  %v3063 = vmul.f32 %v3060, %v2850
  %v3064 = vadd.f32 %v3063, 1e-05
  %v3065 = vrsqrt.pop %v3064
  %v3066 = vmul.f32 %v2217, %v3065
  %v3067 = vmul.f32 %v2851, %v3066
  %v3068 = vsub.f32 %v2218, %v3067
  %v3070 = vsel %vm2852, %v3066, 0
  %3072 = vmatprep.subr.mxu0 0.0
  %3073 = vmatpush1.msra.mxu0 0.0
  %3074 = vmatprep.subr.mxu0 0.0
  %3075 = vmatpush1.msra.mxu0 0.0
  %3076 = vmatprep.subr.mxu0 0.0
  %3077 = vmatpush1.msra.mxu0 0.0
  %3078 = vmatprep.subr.mxu0 0.0
  %3079 = vmatpush1.msra.mxu0 0.0
  %3080 = vmatprep.subr.mxu0 0.0
  %3081 = vmatpush1.msra.mxu0 0.0
  %3082 = vmatprep.subr.mxu0 0.0
  %3083 = vmatpush1.msra.mxu0 0.0
  %3084 = vmatprep.subr.mxu0 0.0
  %3085 = vmatpush1.msra.mxu0 0.0
  %3086 = vmatprep.subr.mxu0 0.0
  %3087 = vmatpush1.msra.mxu0 0.0
  %3088 = vmatprep.subr.mxu0 0.0
  %3089 = vmatpush1.msra.mxu0 0.0
  %3090 = vmatprep.subr.mxu0 0.0
  %3091 = vmatpush1.msra.mxu0 0.0
  %3092 = vmatprep.subr.mxu0 0.0
  %3093 = vmatpush1.msra.mxu0 0.0
  %3094 = vmatprep.subr.mxu0 0.0
  %3095 = vmatpush1.msra.mxu0 0.0
  %3096 = vmatprep.subr.mxu0 0.0
  %3097 = vmatpush1.msra.mxu0 0.0
  %3098 = vmatprep.subr.mxu0 0.0
  %3099 = vmatpush1.msra.mxu0 0.0
  %3100 = vmatprep.subr.mxu0 0.0
  %3101 = vmatpush1.msra.mxu0 0.0
  %3102 = vmatprep.subr.mxu0 %v2753
  %3103 = vmatpush1.msra.mxu0 %v2752
  %3104 = vmatprep.subr.mxu0 0.0
  %3105 = vmatpush2.msra.mxu0 0.0
  %3106 = vmatprep.subr.mxu0 0.0
  %3107 = vmatpush2.msra.mxu0 0.0
  %3108 = vmatprep.subr.mxu0 0.0
  %3109 = vmatpush2.msra.mxu0 0.0
  %3110 = vmatprep.subr.mxu0 0.0
  %3111 = vmatpush2.msra.mxu0 0.0
  %3112 = vmatprep.subr.mxu0 0.0
  %3113 = vmatpush2.msra.mxu0 0.0
  %3114 = vmatprep.subr.mxu0 0.0
  %3115 = vmatpush2.msra.mxu0 0.0
  %3116 = vmatprep.subr.mxu0 0.0
  %3117 = vmatpush2.msra.mxu0 0.0
  %3118 = vmatprep.subr.mxu0 0.0
  %3119 = vmatpush2.msra.mxu0 0.0
  %3120 = vmatprep.subr.mxu0 0.0
  %3121 = vmatpush2.msra.mxu0 0.0
  %3122 = vmatprep.subr.mxu0 0.0
  %3123 = vmatpush2.msra.mxu0 0.0
  %3124 = vmatprep.subr.mxu0 0.0
  %3125 = vmatpush2.msra.mxu0 0.0
  %3126 = vmatprep.subr.mxu0 0.0
  %3127 = vmatpush2.msra.mxu0 0.0
  %3128 = vmatprep.subr.mxu0 0.0
  %3129 = vmatpush2.msra.mxu0 0.0
  %3130 = vmatprep.subr.mxu0 0.0
  %3131 = vmatpush2.msra.mxu0 0.0
  %3132 = vmatprep.subr.mxu0 0.0
  %3133 = vmatpush2.msra.mxu0 0.0
  %3134 = vmatprep.subr.mxu0 0.0
  %3135 = vmatpush2.msra.mxu0 0.0
  %3136 = vmatprep.mubr.f32.mxu0 0.0
  %3137 = vmatmul.mubr.f32.gmra.mxu0 %v3070
  %v3138 = vpop.f32.mrf.mxu0
  %v3139 = vadd.f32 0.0, %v3138
  %v3140 = vpop.f32.mrf.mxu0
  %v3141 = vadd.f32 0.0, %v3140
  %3142 = vdwg.mxu0
  %v3144 = vsel %vm2852, %v3068, 0
  %3146 = vmatprep.subr.mxu0 0.0
  %3147 = vmatpush1.msra.mxu0 0.0
  %3148 = vmatprep.subr.mxu0 0.0
  %3149 = vmatpush1.msra.mxu0 0.0
  %3150 = vmatprep.subr.mxu0 0.0
  %3151 = vmatpush1.msra.mxu0 0.0
  %3152 = vmatprep.subr.mxu0 0.0
  %3153 = vmatpush1.msra.mxu0 0.0
  %3154 = vmatprep.subr.mxu0 0.0
  %3155 = vmatpush1.msra.mxu0 0.0
  %3156 = vmatprep.subr.mxu0 0.0
  %3157 = vmatpush1.msra.mxu0 0.0
  %3158 = vmatprep.subr.mxu0 0.0
  %3159 = vmatpush1.msra.mxu0 0.0
  %3160 = vmatprep.subr.mxu0 0.0
  %3161 = vmatpush1.msra.mxu0 0.0
  %3162 = vmatprep.subr.mxu0 0.0
  %3163 = vmatpush1.msra.mxu0 0.0
  %3164 = vmatprep.subr.mxu0 0.0
  %3165 = vmatpush1.msra.mxu0 0.0
  %3166 = vmatprep.subr.mxu0 0.0
  %3167 = vmatpush1.msra.mxu0 0.0
  %3168 = vmatprep.subr.mxu0 0.0
  %3169 = vmatpush1.msra.mxu0 0.0
  %3170 = vmatprep.subr.mxu0 0.0
  %3171 = vmatpush1.msra.mxu0 0.0
  %3172 = vmatprep.subr.mxu0 0.0
  %3173 = vmatpush1.msra.mxu0 0.0
  %3174 = vmatprep.subr.mxu0 0.0
  %3175 = vmatpush1.msra.mxu0 0.0
  %3176 = vmatprep.subr.mxu0 %v2753
  %3177 = vmatpush1.msra.mxu0 %v2752
  %3178 = vmatprep.subr.mxu0 0.0
  %3179 = vmatpush2.msra.mxu0 0.0
  %3180 = vmatprep.subr.mxu0 0.0
  %3181 = vmatpush2.msra.mxu0 0.0
  %3182 = vmatprep.subr.mxu0 0.0
  %3183 = vmatpush2.msra.mxu0 0.0
  %3184 = vmatprep.subr.mxu0 0.0
  %3185 = vmatpush2.msra.mxu0 0.0
  %3186 = vmatprep.subr.mxu0 0.0
  %3187 = vmatpush2.msra.mxu0 0.0
  %3188 = vmatprep.subr.mxu0 0.0
  %3189 = vmatpush2.msra.mxu0 0.0
  %3190 = vmatprep.subr.mxu0 0.0
  %3191 = vmatpush2.msra.mxu0 0.0
  %3192 = vmatprep.subr.mxu0 0.0
  %3193 = vmatpush2.msra.mxu0 0.0
  %3194 = vmatprep.subr.mxu0 0.0
  %3195 = vmatpush2.msra.mxu0 0.0
  %3196 = vmatprep.subr.mxu0 0.0
  %3197 = vmatpush2.msra.mxu0 0.0
  %3198 = vmatprep.subr.mxu0 0.0
  %3199 = vmatpush2.msra.mxu0 0.0
  %3200 = vmatprep.subr.mxu0 0.0
  %3201 = vmatpush2.msra.mxu0 0.0
  %3202 = vmatprep.subr.mxu0 0.0
  %3203 = vmatpush2.msra.mxu0 0.0
  %3204 = vmatprep.subr.mxu0 0.0
  %3205 = vmatpush2.msra.mxu0 0.0
  %3206 = vmatprep.subr.mxu0 0.0
  %3207 = vmatpush2.msra.mxu0 0.0
  %3208 = vmatprep.subr.mxu0 0.0
  %3209 = vmatpush2.msra.mxu0 0.0
  %3210 = vmatprep.mubr.f32.mxu0 0.0
  %3211 = vmatmul.mubr.f32.gmra.mxu0 %v3144
  %v3212 = vpop.f32.mrf.mxu0
  %v3213 = vadd.f32 0.0, %v3212
  %v3214 = vpop.f32.mrf.mxu0
  %v3215 = vadd.f32 0.0, %v3214
  %3216 = vdwg.mxu0
  %v3217 = vlaneseq
  %v3218 = vshrl.u32 %v3217, 7
  %v3219 = vsub.s32 0, %v3218
  %v3220 = vrot.slane %v3139, %v3219
  %v3221 = vlaneseq
  %v3222 = vshrl.u32 %v3221, 7
  %v3223 = vsub.s32 0, %v3222
  %v3224 = vrot.slane %v3141, %v3223
  %v3225 = vmul.f32 %v2201, %v3220
  %v3226 = vmul.f32 %v2202, %v3224
  %v3227 = vmul.f32 %v2203, %v3220
  %v3228 = vmul.f32 %v2204, %v3224
  %v3229 = vmul.f32 %v2205, %v3220
  %v3230 = vmul.f32 %v2206, %v3224
  %v3231 = vmul.f32 %v2207, %v3220
  %v3232 = vmul.f32 %v2208, %v3224
  %v3233 = vmul.f32 %v2209, %v3220
  %v3234 = vmul.f32 %v2210, %v3224
  %v3235 = vmul.f32 %v2211, %v3220
  %v3236 = vmul.f32 %v2212, %v3224
  %v3237 = vmul.f32 %v2213, %v3220
  %v3238 = vmul.f32 %v2214, %v3224
  %v3239 = vmul.f32 %v2215, %v3220
  %v3240 = vmul.f32 %v2216, %v3224
  %v3241 = vlaneseq
  %v3242 = vshrl.u32 %v3241, 7
  %v3243 = vsub.s32 0, %v3242
  %v3244 = vrot.slane %v3213, %v3243
  %v3245 = vlaneseq
  %v3246 = vshrl.u32 %v3245, 7
  %v3247 = vsub.s32 0, %v3246
  %v3248 = vrot.slane %v3215, %v3247
  %v3249 = vadd.f32 %v3225, %v3244
  %v3250 = vadd.f32 %v3226, %v3248
  %v3251 = vadd.f32 %v3227, %v3244
  %v3252 = vadd.f32 %v3228, %v3248
  %v3253 = vadd.f32 %v3229, %v3244
  %v3254 = vadd.f32 %v3230, %v3248
  %v3255 = vadd.f32 %v3231, %v3244
  %v3256 = vadd.f32 %v3232, %v3248
  %v3257 = vadd.f32 %v3233, %v3244
  %v3258 = vadd.f32 %v3234, %v3248
  %v3259 = vadd.f32 %v3235, %v3244
  %v3260 = vadd.f32 %v3236, %v3248
  %v3261 = vadd.f32 %v3237, %v3244
  %v3262 = vadd.f32 %v3238, %v3248
  %v3263 = vadd.f32 %v3239, %v3244
  %v3264 = vadd.f32 %v3240, %v3248
  %v3265 = vld [vmem:[%s8] sm:$0x3]
  %3266 = vmatprep.subr.mxu0 0.0
  %3267 = vmatpush1.msra.mxu0 0.0
  %3268 = vmatprep.subr.mxu0 0.0
  %3269 = vmatpush1.msra.mxu0 0.0
  %3270 = vmatprep.subr.mxu0 0.0
  %3271 = vmatpush1.msra.mxu0 0.0
  %3272 = vmatprep.subr.mxu0 0.0
  %3273 = vmatpush1.msra.mxu0 0.0
  %3274 = vmatprep.subr.mxu0 0.0
  %3275 = vmatpush1.msra.mxu0 0.0
  %3276 = vmatprep.subr.mxu0 0.0
  %3277 = vmatpush1.msra.mxu0 0.0
  %3278 = vmatprep.subr.mxu0 0.0
  %3279 = vmatpush1.msra.mxu0 0.0
  %3280 = vmatprep.subr.mxu0 0.0
  %3281 = vmatpush1.msra.mxu0 0.0
  %3282 = vmatprep.subr.mxu0 0.0
  %3283 = vmatpush1.msra.mxu0 0.0
  %3284 = vmatprep.subr.mxu0 0.0
  %3285 = vmatpush1.msra.mxu0 0.0
  %3286 = vmatprep.subr.mxu0 0.0
  %3287 = vmatpush1.msra.mxu0 0.0
  %3288 = vmatprep.subr.mxu0 0.0
  %3289 = vmatpush1.msra.mxu0 0.0
  %3290 = vmatprep.subr.mxu0 0.0
  %3291 = vmatpush1.msra.mxu0 %v47
  %3292 = vmatprep.subr.mxu0 0.0
  %3293 = vmatpush1.msra.mxu0 %v46
  %3294 = vmatprep.subr.mxu0 0.0
  %3295 = vmatpush1.msra.mxu0 %v45
  %3296 = vmatprep.subr.mxu0 0.0
  %3297 = vmatpush1.msra.mxu0 %v44
  %3298 = vmatprep.subr.mxu0 0.0
  %3299 = vmatpush2.msra.mxu0 0.0
  %3300 = vmatprep.subr.mxu0 0.0
  %3301 = vmatpush2.msra.mxu0 0.0
  %3302 = vmatprep.subr.mxu0 0.0
  %3303 = vmatpush2.msra.mxu0 0.0
  %3304 = vmatprep.subr.mxu0 0.0
  %3305 = vmatpush2.msra.mxu0 0.0
  %3306 = vmatprep.subr.mxu0 0.0
  %3307 = vmatpush2.msra.mxu0 0.0
  %3308 = vmatprep.subr.mxu0 0.0
  %3309 = vmatpush2.msra.mxu0 0.0
  %3310 = vmatprep.subr.mxu0 0.0
  %3311 = vmatpush2.msra.mxu0 0.0
  %3312 = vmatprep.subr.mxu0 0.0
  %3313 = vmatpush2.msra.mxu0 0.0
  %3314 = vmatprep.subr.mxu0 0.0
  %3315 = vmatpush2.msra.mxu0 0.0
  %3316 = vmatprep.subr.mxu0 0.0
  %3317 = vmatpush2.msra.mxu0 0.0
  %3318 = vmatprep.subr.mxu0 0.0
  %3319 = vmatpush2.msra.mxu0 0.0
  %3320 = vmatprep.subr.mxu0 0.0
  %3321 = vmatpush2.msra.mxu0 0.0
  %3322 = vmatprep.subr.mxu0 0.0
  %3323 = vmatpush2.msra.mxu0 0.0
  %3324 = vmatprep.subr.mxu0 0.0
  %3325 = vmatpush2.msra.mxu0 0.0
  %3326 = vmatprep.subr.mxu0 0.0
  %3327 = vmatpush2.msra.mxu0 0.0
  %3328 = vmatprep.subr.mxu0 0.0
  %3329 = vmatpush2.msra.mxu0 0.0
  %3330 = vmatprep.mubr.f32.mxu0 0.0
  %3331 = vmatmul.mubr.f32.gmra.mxu0 %v1293
  %v3332 = vpop.f32.mrf.mxu0
  %v3333 = vadd.f32 0.0, %v3332
  %v3334 = vpop.f32.mrf.mxu0
  %3335 = vmatprep.mubr.f32.mxu0 0.0
  %3336 = vmatmul.mubr.f32.gmra.mxu0 %v1296
  %v3337 = vpop.f32.mrf.mxu0
  %v3338 = vadd.f32 0.0, %v3337
  %v3339 = vpop.f32.mrf.mxu0
  %3340 = vmatprep.mubr.f32.mxu0 0.0
  %3341 = vmatmul.mubr.f32.gmra.mxu0 %v1299
  %v3342 = vpop.f32.mrf.mxu0
  %v3343 = vadd.f32 0.0, %v3342
  %v3344 = vpop.f32.mrf.mxu0
  %3345 = vmatprep.mubr.f32.mxu0 0.0
  %3346 = vmatmul.mubr.f32.gmra.mxu0 %v1302
  %v3347 = vpop.f32.mrf.mxu0
  %v3348 = vadd.f32 0.0, %v3347
  %v3349 = vpop.f32.mrf.mxu0
  %3350 = vmatprep.mubr.f32.mxu0 0.0
  %3351 = vmatmul.mubr.f32.gmra.mxu0 %v1305
  %v3352 = vpop.f32.mrf.mxu0
  %v3353 = vadd.f32 0.0, %v3352
  %v3354 = vpop.f32.mrf.mxu0
  %3355 = vmatprep.mubr.f32.mxu0 0.0
  %3356 = vmatmul.mubr.f32.gmra.mxu0 %v1308
  %v3357 = vpop.f32.mrf.mxu0
  %v3358 = vadd.f32 0.0, %v3357
  %v3359 = vpop.f32.mrf.mxu0
  %3360 = vmatprep.mubr.f32.mxu0 0.0
  %3361 = vmatmul.mubr.f32.gmra.mxu0 %v1311
  %v3362 = vpop.f32.mrf.mxu0
  %v3363 = vadd.f32 0.0, %v3362
  %v3364 = vpop.f32.mrf.mxu0
  %3365 = vmatprep.mubr.f32.mxu0 0.0
  %3366 = vmatmul.mubr.f32.gmra.mxu0 %v1314
  %v3367 = vpop.f32.mrf.mxu0
  %v3368 = vadd.f32 0.0, %v3367
  %v3369 = vpop.f32.mrf.mxu0
  %3370 = vdwg.mxu0
  %v3371 = vld [vmem:[%s5] sm:$0xff]
  %v3372 = vld [vmem:[%s5 + $0x8] sm:$0xff]
  %v3373 = vld [vmem:[%s5 + $0x10] sm:$0xff]
  %v3374 = vld [vmem:[%s5 + $0x18] sm:$0xff]
  %v3375 = vld [vmem:[%s5 + $0x20] sm:$0xff]
  %v3376 = vld [vmem:[%s5 + $0x28] sm:$0xff]
  %v3377 = vld [vmem:[%s5 + $0x30] sm:$0xff]
  %v3378 = vld [vmem:[%s5 + $0x38] sm:$0xff]
  %v3379 = vld [vmem:[%s5 + $0x40] sm:$0xff]
  %v3380 = vld [vmem:[%s5 + $0x48] sm:$0xff]
  %v3381 = vld [vmem:[%s5 + $0x50] sm:$0xff]
  %v3382 = vld [vmem:[%s5 + $0x58] sm:$0xff]
  %v3383 = vld [vmem:[%s5 + $0x60] sm:$0xff]
  %v3384 = vld [vmem:[%s5 + $0x68] sm:$0xff]
  %v3385 = vld [vmem:[%s5 + $0x70] sm:$0xff]
  %v3386 = vld [vmem:[%s5 + $0x78] sm:$0xff]
  %v3388 = vsel %vm159, %v3333, 0
  %v3391 = vsel %vm159, %v3338, 0
  %v3394 = vsel %vm159, %v3343, 0
  %v3397 = vsel %vm159, %v3348, 0
  %v3400 = vsel %vm159, %v3353, 0
  %v3403 = vsel %vm159, %v3358, 0
  %v3406 = vsel %vm159, %v3363, 0
  %v3409 = vsel %vm159, %v3368, 0
  %3411 = vmatprep.subr.mxu0 0.0
  %3412 = vmatpush1.msra.mxu0 0.0
  %3413 = vmatprep.subr.mxu0 0.0
  %3414 = vmatpush1.msra.mxu0 0.0
  %3415 = vmatprep.subr.mxu0 0.0
  %3416 = vmatpush1.msra.mxu0 0.0
  %3417 = vmatprep.subr.mxu0 0.0
  %3418 = vmatpush1.msra.mxu0 0.0
  %3419 = vmatprep.subr.mxu0 0.0
  %3420 = vmatpush1.msra.mxu0 0.0
  %3421 = vmatprep.subr.mxu0 0.0
  %3422 = vmatpush1.msra.mxu0 0.0
  %3423 = vmatprep.subr.mxu0 0.0
  %3424 = vmatpush1.msra.mxu0 0.0
  %3425 = vmatprep.subr.mxu0 0.0
  %3426 = vmatpush1.msra.mxu0 0.0
  %3427 = vmatprep.subr.mxu0 %v3386
  %3428 = vmatpush1.msra.mxu0 %v3385
  %3429 = vmatprep.subr.mxu0 %v3384
  %3430 = vmatpush1.msra.mxu0 %v3383
  %3431 = vmatprep.subr.mxu0 %v3382
  %3432 = vmatpush1.msra.mxu0 %v3381
  %3433 = vmatprep.subr.mxu0 %v3380
  %3434 = vmatpush1.msra.mxu0 %v3379
  %3435 = vmatprep.subr.mxu0 %v3378
  %3436 = vmatpush1.msra.mxu0 %v3377
  %3437 = vmatprep.subr.mxu0 %v3376
  %3438 = vmatpush1.msra.mxu0 %v3375
  %3439 = vmatprep.subr.mxu0 %v3374
  %3440 = vmatpush1.msra.mxu0 %v3373
  %3441 = vmatprep.subr.mxu0 %v3372
  %3442 = vmatpush1.msra.mxu0 %v3371
  %3443 = vmatprep.subr.mxu0 0.0
  %3444 = vmatpush2.msra.mxu0 0.0
  %3445 = vmatprep.subr.mxu0 0.0
  %3446 = vmatpush2.msra.mxu0 0.0
  %3447 = vmatprep.subr.mxu0 0.0
  %3448 = vmatpush2.msra.mxu0 0.0
  %3449 = vmatprep.subr.mxu0 0.0
  %3450 = vmatpush2.msra.mxu0 0.0
  %3451 = vmatprep.subr.mxu0 0.0
  %3452 = vmatpush2.msra.mxu0 0.0
  %3453 = vmatprep.subr.mxu0 0.0
  %3454 = vmatpush2.msra.mxu0 0.0
  %3455 = vmatprep.subr.mxu0 0.0
  %3456 = vmatpush2.msra.mxu0 0.0
  %3457 = vmatprep.subr.mxu0 0.0
  %3458 = vmatpush2.msra.mxu0 0.0
  %3459 = vmatprep.subr.mxu0 0.0
  %3460 = vmatpush2.msra.mxu0 0.0
  %3461 = vmatprep.subr.mxu0 0.0
  %3462 = vmatpush2.msra.mxu0 0.0
  %3463 = vmatprep.subr.mxu0 0.0
  %3464 = vmatpush2.msra.mxu0 0.0
  %3465 = vmatprep.subr.mxu0 0.0
  %3466 = vmatpush2.msra.mxu0 0.0
  %3467 = vmatprep.subr.mxu0 0.0
  %3468 = vmatpush2.msra.mxu0 0.0
  %3469 = vmatprep.subr.mxu0 0.0
  %3470 = vmatpush2.msra.mxu0 0.0
  %3471 = vmatprep.subr.mxu0 0.0
  %3472 = vmatpush2.msra.mxu0 0.0
  %3473 = vmatprep.subr.mxu0 0.0
  %3474 = vmatpush2.msra.mxu0 0.0
  %3475 = vmatprep.mubr.f32.mxu0 0.0
  %3476 = vmatmul.mubr.f32.gmra.mxu0 %v3388
  %v3477 = vpop.f32.mrf.mxu0
  %v3478 = vadd.f32 0.0, %v3477
  %v3479 = vpop.f32.mrf.mxu0
  %v3480 = vadd.f32 0.0, %v3479
  %3481 = vmatprep.mubr.f32.mxu0 0.0
  %3482 = vmatmul.mubr.f32.gmra.mxu0 %v3391
  %v3483 = vpop.f32.mrf.mxu0
  %v3484 = vadd.f32 0.0, %v3483
  %v3485 = vpop.f32.mrf.mxu0
  %v3486 = vadd.f32 0.0, %v3485
  %3487 = vmatprep.mubr.f32.mxu0 0.0
  %3488 = vmatmul.mubr.f32.gmra.mxu0 %v3394
  %v3489 = vpop.f32.mrf.mxu0
  %v3490 = vadd.f32 0.0, %v3489
  %v3491 = vpop.f32.mrf.mxu0
  %v3492 = vadd.f32 0.0, %v3491
  %3493 = vmatprep.mubr.f32.mxu0 0.0
  %3494 = vmatmul.mubr.f32.gmra.mxu0 %v3397
  %v3495 = vpop.f32.mrf.mxu0
  %v3496 = vadd.f32 0.0, %v3495
  %v3497 = vpop.f32.mrf.mxu0
  %v3498 = vadd.f32 0.0, %v3497
  %3499 = vmatprep.mubr.f32.mxu0 0.0
  %3500 = vmatmul.mubr.f32.gmra.mxu0 %v3400
  %v3501 = vpop.f32.mrf.mxu0
  %v3502 = vadd.f32 0.0, %v3501
  %v3503 = vpop.f32.mrf.mxu0
  %v3504 = vadd.f32 0.0, %v3503
  %3505 = vmatprep.mubr.f32.mxu0 0.0
  %3506 = vmatmul.mubr.f32.gmra.mxu0 %v3403
  %v3507 = vpop.f32.mrf.mxu0
  %v3508 = vadd.f32 0.0, %v3507
  %v3509 = vpop.f32.mrf.mxu0
  %v3510 = vadd.f32 0.0, %v3509
  %3511 = vmatprep.mubr.f32.mxu0 0.0
  %3512 = vmatmul.mubr.f32.gmra.mxu0 %v3406
  %v3513 = vpop.f32.mrf.mxu0
  %v3514 = vadd.f32 0.0, %v3513
  %v3515 = vpop.f32.mrf.mxu0
  %v3516 = vadd.f32 0.0, %v3515
  %3517 = vmatprep.mubr.f32.mxu0 0.0
  %3518 = vmatmul.mubr.f32.gmra.mxu0 %v3409
  %v3519 = vpop.f32.mrf.mxu0
  %v3520 = vadd.f32 0.0, %v3519
  %v3521 = vpop.f32.mrf.mxu0
  %v3522 = vadd.f32 0.0, %v3521
  %3523 = vdwg.mxu0
  %v3525 = vlaneseq
  %v3526 = vshrl.u32 %v3525, 7
  %v3527 = vsub.s32 0, %v3526
  %v3528 = vrot.slane %v3265, %v3527
  %v3529 = vlaneseq
  %v3530 = vshrl.u32 %v3529, 7
  %v3531 = vsub.s32 1, %v3530
  %v3532 = vrot.slane %v3265, %v3531
  %v3535 = vadd.f32 %v3528, %v3478
  %v3536 = vadd.f32 %v3532, %v3480
  %v3537 = vadd.f32 %v3528, %v3484
  %v3538 = vadd.f32 %v3532, %v3486
  %v3539 = vadd.f32 %v3528, %v3490
  %v3540 = vadd.f32 %v3532, %v3492
  %v3541 = vadd.f32 %v3528, %v3496
  %v3542 = vadd.f32 %v3532, %v3498
  %v3543 = vadd.f32 %v3528, %v3502
  %v3544 = vadd.f32 %v3532, %v3504
  %v3545 = vadd.f32 %v3528, %v3508
  %v3546 = vadd.f32 %v3532, %v3510
  %v3547 = vadd.f32 %v3528, %v3514
  %v3548 = vadd.f32 %v3532, %v3516
  %v3549 = vadd.f32 %v3528, %v3520
  %v3550 = vadd.f32 %v3532, %v3522
  %3551 = vmatprep.subr.mxu0 0.0
  %3552 = vmatpush1.msra.mxu0 0.0
  %3553 = vmatprep.subr.mxu0 0.0
  %3554 = vmatpush1.msra.mxu0 0.0
  %3555 = vmatprep.subr.mxu0 0.0
  %3556 = vmatpush1.msra.mxu0 0.0
  %3557 = vmatprep.subr.mxu0 0.0
  %3558 = vmatpush1.msra.mxu0 0.0
  %3559 = vmatprep.subr.mxu0 0.0
  %3560 = vmatpush1.msra.mxu0 0.0
  %3561 = vmatprep.subr.mxu0 0.0
  %3562 = vmatpush1.msra.mxu0 0.0
  %3563 = vmatprep.subr.mxu0 0.0
  %3564 = vmatpush1.msra.mxu0 0.0
  %3565 = vmatprep.subr.mxu0 0.0
  %3566 = vmatpush1.msra.mxu0 0.0
  %3567 = vmatprep.subr.mxu0 0.0
  %3568 = vmatpush1.msra.mxu0 0.0
  %3569 = vmatprep.subr.mxu0 0.0
  %3570 = vmatpush1.msra.mxu0 0.0
  %3571 = vmatprep.subr.mxu0 0.0
  %3572 = vmatpush1.msra.mxu0 0.0
  %3573 = vmatprep.subr.mxu0 0.0
  %3574 = vmatpush1.msra.mxu0 0.0
  %3575 = vmatprep.subr.mxu0 0.0
  %3576 = vmatpush1.msra.mxu0 %v47
  %3577 = vmatprep.subr.mxu0 0.0
  %3578 = vmatpush1.msra.mxu0 %v46
  %3579 = vmatprep.subr.mxu0 0.0
  %3580 = vmatpush1.msra.mxu0 %v45
  %3581 = vmatprep.subr.mxu0 0.0
  %3582 = vmatpush1.msra.mxu0 %v44
  %3583 = vmatprep.subr.mxu0 0.0
  %3584 = vmatpush2.msra.mxu0 0.0
  %3585 = vmatprep.subr.mxu0 0.0
  %3586 = vmatpush2.msra.mxu0 0.0
  %3587 = vmatprep.subr.mxu0 0.0
  %3588 = vmatpush2.msra.mxu0 0.0
  %3589 = vmatprep.subr.mxu0 0.0
  %3590 = vmatpush2.msra.mxu0 0.0
  %3591 = vmatprep.subr.mxu0 0.0
  %3592 = vmatpush2.msra.mxu0 0.0
  %3593 = vmatprep.subr.mxu0 0.0
  %3594 = vmatpush2.msra.mxu0 0.0
  %3595 = vmatprep.subr.mxu0 0.0
  %3596 = vmatpush2.msra.mxu0 0.0
  %3597 = vmatprep.subr.mxu0 0.0
  %3598 = vmatpush2.msra.mxu0 0.0
  %3599 = vmatprep.subr.mxu0 0.0
  %3600 = vmatpush2.msra.mxu0 0.0
  %3601 = vmatprep.subr.mxu0 0.0
  %3602 = vmatpush2.msra.mxu0 0.0
  %3603 = vmatprep.subr.mxu0 0.0
  %3604 = vmatpush2.msra.mxu0 0.0
  %3605 = vmatprep.subr.mxu0 0.0
  %3606 = vmatpush2.msra.mxu0 0.0
  %3607 = vmatprep.subr.mxu0 0.0
  %3608 = vmatpush2.msra.mxu0 0.0
  %3609 = vmatprep.subr.mxu0 0.0
  %3610 = vmatpush2.msra.mxu0 0.0
  %3611 = vmatprep.subr.mxu0 0.0
  %3612 = vmatpush2.msra.mxu0 0.0
  %3613 = vmatprep.subr.mxu0 0.0
  %3614 = vmatpush2.msra.mxu0 0.0
  %3615 = vmatprep.mubr.f32.mxu0 0.0
  %3616 = vmatmul.mubr.f32.gmra.mxu0 %v1611
  %v3617 = vpop.f32.mrf.mxu0
  %v3618 = vadd.f32 0.0, %v3617
  %v3619 = vpop.f32.mrf.mxu0
  %3620 = vmatprep.mubr.f32.mxu0 0.0
  %3621 = vmatmul.mubr.f32.gmra.mxu0 %v1614
  %v3622 = vpop.f32.mrf.mxu0
  %v3623 = vadd.f32 0.0, %v3622
  %v3624 = vpop.f32.mrf.mxu0
  %3625 = vmatprep.mubr.f32.mxu0 0.0
  %3626 = vmatmul.mubr.f32.gmra.mxu0 %v1617
  %v3627 = vpop.f32.mrf.mxu0
  %v3628 = vadd.f32 0.0, %v3627
  %v3629 = vpop.f32.mrf.mxu0
  %3630 = vmatprep.mubr.f32.mxu0 0.0
  %3631 = vmatmul.mubr.f32.gmra.mxu0 %v1620
  %v3632 = vpop.f32.mrf.mxu0
  %v3633 = vadd.f32 0.0, %v3632
  %v3634 = vpop.f32.mrf.mxu0
  %3635 = vmatprep.mubr.f32.mxu0 0.0
  %3636 = vmatmul.mubr.f32.gmra.mxu0 %v1623
  %v3637 = vpop.f32.mrf.mxu0
  %v3638 = vadd.f32 0.0, %v3637
  %v3639 = vpop.f32.mrf.mxu0
  %3640 = vmatprep.mubr.f32.mxu0 0.0
  %3641 = vmatmul.mubr.f32.gmra.mxu0 %v1626
  %v3642 = vpop.f32.mrf.mxu0
  %v3643 = vadd.f32 0.0, %v3642
  %v3644 = vpop.f32.mrf.mxu0
  %3645 = vmatprep.mubr.f32.mxu0 0.0
  %3646 = vmatmul.mubr.f32.gmra.mxu0 %v1629
  %v3647 = vpop.f32.mrf.mxu0
  %v3648 = vadd.f32 0.0, %v3647
  %v3649 = vpop.f32.mrf.mxu0
  %3650 = vmatprep.mubr.f32.mxu0 0.0
  %3651 = vmatmul.mubr.f32.gmra.mxu0 %v1632
  %v3652 = vpop.f32.mrf.mxu0
  %v3653 = vadd.f32 0.0, %v3652
  %v3654 = vpop.f32.mrf.mxu0
  %3655 = vdwg.mxu0
  %s3656 = scalar_lea.vmem %s5, 128
  %v3657 = vld [vmem:[%s3656] sm:$0xff]
  %v3658 = vld [vmem:[%s3656 + $0x8] sm:$0xff]
  %v3659 = vld [vmem:[%s3656 + $0x10] sm:$0xff]
  %v3660 = vld [vmem:[%s3656 + $0x18] sm:$0xff]
  %v3661 = vld [vmem:[%s3656 + $0x20] sm:$0xff]
  %v3662 = vld [vmem:[%s3656 + $0x28] sm:$0xff]
  %v3663 = vld [vmem:[%s3656 + $0x30] sm:$0xff]
  %v3664 = vld [vmem:[%s3656 + $0x38] sm:$0xff]
  %v3665 = vld [vmem:[%s3656 + $0x40] sm:$0xff]
  %v3666 = vld [vmem:[%s3656 + $0x48] sm:$0xff]
  %v3667 = vld [vmem:[%s3656 + $0x50] sm:$0xff]
  %v3668 = vld [vmem:[%s3656 + $0x58] sm:$0xff]
  %v3669 = vld [vmem:[%s3656 + $0x60] sm:$0xff]
  %v3670 = vld [vmem:[%s3656 + $0x68] sm:$0xff]
  %v3671 = vld [vmem:[%s3656 + $0x70] sm:$0xff]
  %v3672 = vld [vmem:[%s3656 + $0x78] sm:$0xff]
  %v3674 = vsel %vm159, %v3618, 0
  %v3677 = vsel %vm159, %v3623, 0
  %v3680 = vsel %vm159, %v3628, 0
  %v3683 = vsel %vm159, %v3633, 0
  %v3686 = vsel %vm159, %v3638, 0
  %v3689 = vsel %vm159, %v3643, 0
  %v3692 = vsel %vm159, %v3648, 0
  %v3695 = vsel %vm159, %v3653, 0
  %3697 = vmatprep.subr.mxu0 0.0
  %3698 = vmatpush1.msra.mxu0 0.0
  %3699 = vmatprep.subr.mxu0 0.0
  %3700 = vmatpush1.msra.mxu0 0.0
  %3701 = vmatprep.subr.mxu0 0.0
  %3702 = vmatpush1.msra.mxu0 0.0
  %3703 = vmatprep.subr.mxu0 0.0
  %3704 = vmatpush1.msra.mxu0 0.0
  %3705 = vmatprep.subr.mxu0 0.0
  %3706 = vmatpush1.msra.mxu0 0.0
  %3707 = vmatprep.subr.mxu0 0.0
  %3708 = vmatpush1.msra.mxu0 0.0
  %3709 = vmatprep.subr.mxu0 0.0
  %3710 = vmatpush1.msra.mxu0 0.0
  %3711 = vmatprep.subr.mxu0 0.0
  %3712 = vmatpush1.msra.mxu0 0.0
  %3713 = vmatprep.subr.mxu0 %v3672
  %3714 = vmatpush1.msra.mxu0 %v3671
  %3715 = vmatprep.subr.mxu0 %v3670
  %3716 = vmatpush1.msra.mxu0 %v3669
  %3717 = vmatprep.subr.mxu0 %v3668
  %3718 = vmatpush1.msra.mxu0 %v3667
  %3719 = vmatprep.subr.mxu0 %v3666
  %3720 = vmatpush1.msra.mxu0 %v3665
  %3721 = vmatprep.subr.mxu0 %v3664
  %3722 = vmatpush1.msra.mxu0 %v3663
  %3723 = vmatprep.subr.mxu0 %v3662
  %3724 = vmatpush1.msra.mxu0 %v3661
  %3725 = vmatprep.subr.mxu0 %v3660
  %3726 = vmatpush1.msra.mxu0 %v3659
  %3727 = vmatprep.subr.mxu0 %v3658
  %3728 = vmatpush1.msra.mxu0 %v3657
  %3729 = vmatprep.subr.mxu0 0.0
  %3730 = vmatpush2.msra.mxu0 0.0
  %3731 = vmatprep.subr.mxu0 0.0
  %3732 = vmatpush2.msra.mxu0 0.0
  %3733 = vmatprep.subr.mxu0 0.0
  %3734 = vmatpush2.msra.mxu0 0.0
  %3735 = vmatprep.subr.mxu0 0.0
  %3736 = vmatpush2.msra.mxu0 0.0
  %3737 = vmatprep.subr.mxu0 0.0
  %3738 = vmatpush2.msra.mxu0 0.0
  %3739 = vmatprep.subr.mxu0 0.0
  %3740 = vmatpush2.msra.mxu0 0.0
  %3741 = vmatprep.subr.mxu0 0.0
  %3742 = vmatpush2.msra.mxu0 0.0
  %3743 = vmatprep.subr.mxu0 0.0
  %3744 = vmatpush2.msra.mxu0 0.0
  %3745 = vmatprep.subr.mxu0 0.0
  %3746 = vmatpush2.msra.mxu0 0.0
  %3747 = vmatprep.subr.mxu0 0.0
  %3748 = vmatpush2.msra.mxu0 0.0
  %3749 = vmatprep.subr.mxu0 0.0
  %3750 = vmatpush2.msra.mxu0 0.0
  %3751 = vmatprep.subr.mxu0 0.0
  %3752 = vmatpush2.msra.mxu0 0.0
  %3753 = vmatprep.subr.mxu0 0.0
  %3754 = vmatpush2.msra.mxu0 0.0
  %3755 = vmatprep.subr.mxu0 0.0
  %3756 = vmatpush2.msra.mxu0 0.0
  %3757 = vmatprep.subr.mxu0 0.0
  %3758 = vmatpush2.msra.mxu0 0.0
  %3759 = vmatprep.subr.mxu0 0.0
  %3760 = vmatpush2.msra.mxu0 0.0
  %3761 = vmatprep.mubr.f32.mxu0 0.0
  %3762 = vmatmul.mubr.f32.gmra.mxu0 %v3674
  %v3763 = vpop.f32.mrf.mxu0
  %v3764 = vadd.f32 0.0, %v3763
  %v3765 = vpop.f32.mrf.mxu0
  %v3766 = vadd.f32 0.0, %v3765
  %3767 = vmatprep.mubr.f32.mxu0 0.0
  %3768 = vmatmul.mubr.f32.gmra.mxu0 %v3677
  %v3769 = vpop.f32.mrf.mxu0
  %v3770 = vadd.f32 0.0, %v3769
  %v3771 = vpop.f32.mrf.mxu0
  %v3772 = vadd.f32 0.0, %v3771
  %3773 = vmatprep.mubr.f32.mxu0 0.0
  %3774 = vmatmul.mubr.f32.gmra.mxu0 %v3680
  %v3775 = vpop.f32.mrf.mxu0
  %v3776 = vadd.f32 0.0, %v3775
  %v3777 = vpop.f32.mrf.mxu0
  %v3778 = vadd.f32 0.0, %v3777
  %3779 = vmatprep.mubr.f32.mxu0 0.0
  %3780 = vmatmul.mubr.f32.gmra.mxu0 %v3683
  %v3781 = vpop.f32.mrf.mxu0
  %v3782 = vadd.f32 0.0, %v3781
  %v3783 = vpop.f32.mrf.mxu0
  %v3784 = vadd.f32 0.0, %v3783
  %3785 = vmatprep.mubr.f32.mxu0 0.0
  %3786 = vmatmul.mubr.f32.gmra.mxu0 %v3686
  %v3787 = vpop.f32.mrf.mxu0
  %v3788 = vadd.f32 0.0, %v3787
  %v3789 = vpop.f32.mrf.mxu0
  %v3790 = vadd.f32 0.0, %v3789
  %3791 = vmatprep.mubr.f32.mxu0 0.0
  %3792 = vmatmul.mubr.f32.gmra.mxu0 %v3689
  %v3793 = vpop.f32.mrf.mxu0
  %v3794 = vadd.f32 0.0, %v3793
  %v3795 = vpop.f32.mrf.mxu0
  %v3796 = vadd.f32 0.0, %v3795
  %3797 = vmatprep.mubr.f32.mxu0 0.0
  %3798 = vmatmul.mubr.f32.gmra.mxu0 %v3692
  %v3799 = vpop.f32.mrf.mxu0
  %v3800 = vadd.f32 0.0, %v3799
  %v3801 = vpop.f32.mrf.mxu0
  %v3802 = vadd.f32 0.0, %v3801
  %3803 = vmatprep.mubr.f32.mxu0 0.0
  %3804 = vmatmul.mubr.f32.gmra.mxu0 %v3695
  %v3805 = vpop.f32.mrf.mxu0
  %v3806 = vadd.f32 0.0, %v3805
  %v3807 = vpop.f32.mrf.mxu0
  %v3808 = vadd.f32 0.0, %v3807
  %3809 = vdwg.mxu0
  %v3810 = vadd.f32 %v3535, %v3764
  %v3811 = vadd.f32 %v3536, %v3766
  %v3812 = vadd.f32 %v3537, %v3770
  %v3813 = vadd.f32 %v3538, %v3772
  %v3814 = vadd.f32 %v3539, %v3776
  %v3815 = vadd.f32 %v3540, %v3778
  %v3816 = vadd.f32 %v3541, %v3782
  %v3817 = vadd.f32 %v3542, %v3784
  %v3818 = vadd.f32 %v3543, %v3788
  %v3819 = vadd.f32 %v3544, %v3790
  %v3820 = vadd.f32 %v3545, %v3794
  %v3821 = vadd.f32 %v3546, %v3796
  %v3822 = vadd.f32 %v3547, %v3800
  %v3823 = vadd.f32 %v3548, %v3802
  %v3824 = vadd.f32 %v3549, %v3806
  %v3825 = vadd.f32 %v3550, %v3808
  %3826 = vmatprep.subr.mxu0 0.0
  %3827 = vmatpush1.msra.mxu0 0.0
  %3828 = vmatprep.subr.mxu0 0.0
  %3829 = vmatpush1.msra.mxu0 0.0
  %3830 = vmatprep.subr.mxu0 0.0
  %3831 = vmatpush1.msra.mxu0 0.0
  %3832 = vmatprep.subr.mxu0 0.0
  %3833 = vmatpush1.msra.mxu0 0.0
  %3834 = vmatprep.subr.mxu0 0.0
  %3835 = vmatpush1.msra.mxu0 0.0
  %3836 = vmatprep.subr.mxu0 0.0
  %3837 = vmatpush1.msra.mxu0 0.0
  %3838 = vmatprep.subr.mxu0 0.0
  %3839 = vmatpush1.msra.mxu0 0.0
  %3840 = vmatprep.subr.mxu0 0.0
  %3841 = vmatpush1.msra.mxu0 0.0
  %3842 = vmatprep.subr.mxu0 0.0
  %3843 = vmatpush1.msra.mxu0 0.0
  %3844 = vmatprep.subr.mxu0 0.0
  %3845 = vmatpush1.msra.mxu0 0.0
  %3846 = vmatprep.subr.mxu0 0.0
  %3847 = vmatpush1.msra.mxu0 0.0
  %3848 = vmatprep.subr.mxu0 0.0
  %3849 = vmatpush1.msra.mxu0 0.0
  %3850 = vmatprep.subr.mxu0 0.0
  %3851 = vmatpush1.msra.mxu0 %v47
  %3852 = vmatprep.subr.mxu0 0.0
  %3853 = vmatpush1.msra.mxu0 %v46
  %3854 = vmatprep.subr.mxu0 0.0
  %3855 = vmatpush1.msra.mxu0 %v45
  %3856 = vmatprep.subr.mxu0 0.0
  %3857 = vmatpush1.msra.mxu0 %v44
  %3858 = vmatprep.subr.mxu0 0.0
  %3859 = vmatpush2.msra.mxu0 0.0
  %3860 = vmatprep.subr.mxu0 0.0
  %3861 = vmatpush2.msra.mxu0 0.0
  %3862 = vmatprep.subr.mxu0 0.0
  %3863 = vmatpush2.msra.mxu0 0.0
  %3864 = vmatprep.subr.mxu0 0.0
  %3865 = vmatpush2.msra.mxu0 0.0
  %3866 = vmatprep.subr.mxu0 0.0
  %3867 = vmatpush2.msra.mxu0 0.0
  %3868 = vmatprep.subr.mxu0 0.0
  %3869 = vmatpush2.msra.mxu0 0.0
  %3870 = vmatprep.subr.mxu0 0.0
  %3871 = vmatpush2.msra.mxu0 0.0
  %3872 = vmatprep.subr.mxu0 0.0
  %3873 = vmatpush2.msra.mxu0 0.0
  %3874 = vmatprep.subr.mxu0 0.0
  %3875 = vmatpush2.msra.mxu0 0.0
  %3876 = vmatprep.subr.mxu0 0.0
  %3877 = vmatpush2.msra.mxu0 0.0
  %3878 = vmatprep.subr.mxu0 0.0
  %3879 = vmatpush2.msra.mxu0 0.0
  %3880 = vmatprep.subr.mxu0 0.0
  %3881 = vmatpush2.msra.mxu0 0.0
  %3882 = vmatprep.subr.mxu0 0.0
  %3883 = vmatpush2.msra.mxu0 0.0
  %3884 = vmatprep.subr.mxu0 0.0
  %3885 = vmatpush2.msra.mxu0 0.0
  %3886 = vmatprep.subr.mxu0 0.0
  %3887 = vmatpush2.msra.mxu0 0.0
  %3888 = vmatprep.subr.mxu0 0.0
  %3889 = vmatpush2.msra.mxu0 0.0
  %3890 = vmatprep.mubr.f32.mxu0 0.0
  %3891 = vmatmul.mubr.f32.gmra.mxu0 %v1919
  %v3892 = vpop.f32.mrf.mxu0
  %v3893 = vadd.f32 0.0, %v3892
  %v3894 = vpop.f32.mrf.mxu0
  %3895 = vmatprep.mubr.f32.mxu0 0.0
  %3896 = vmatmul.mubr.f32.gmra.mxu0 %v1922
  %v3897 = vpop.f32.mrf.mxu0
  %v3898 = vadd.f32 0.0, %v3897
  %v3899 = vpop.f32.mrf.mxu0
  %3900 = vmatprep.mubr.f32.mxu0 0.0
  %3901 = vmatmul.mubr.f32.gmra.mxu0 %v1925
  %v3902 = vpop.f32.mrf.mxu0
  %v3903 = vadd.f32 0.0, %v3902
  %v3904 = vpop.f32.mrf.mxu0
  %3905 = vmatprep.mubr.f32.mxu0 0.0
  %3906 = vmatmul.mubr.f32.gmra.mxu0 %v1928
  %v3907 = vpop.f32.mrf.mxu0
  %v3908 = vadd.f32 0.0, %v3907
  %v3909 = vpop.f32.mrf.mxu0
  %3910 = vmatprep.mubr.f32.mxu0 0.0
  %3911 = vmatmul.mubr.f32.gmra.mxu0 %v1931
  %v3912 = vpop.f32.mrf.mxu0
  %v3913 = vadd.f32 0.0, %v3912
  %v3914 = vpop.f32.mrf.mxu0
  %3915 = vmatprep.mubr.f32.mxu0 0.0
  %3916 = vmatmul.mubr.f32.gmra.mxu0 %v1934
  %v3917 = vpop.f32.mrf.mxu0
  %v3918 = vadd.f32 0.0, %v3917
  %v3919 = vpop.f32.mrf.mxu0
  %3920 = vmatprep.mubr.f32.mxu0 0.0
  %3921 = vmatmul.mubr.f32.gmra.mxu0 %v1937
  %v3922 = vpop.f32.mrf.mxu0
  %v3923 = vadd.f32 0.0, %v3922
  %v3924 = vpop.f32.mrf.mxu0
  %3925 = vmatprep.mubr.f32.mxu0 0.0
  %3926 = vmatmul.mubr.f32.gmra.mxu0 %v1940
  %v3927 = vpop.f32.mrf.mxu0
  %v3928 = vadd.f32 0.0, %v3927
  %v3929 = vpop.f32.mrf.mxu0
  %3930 = vdwg.mxu0
  %s3931 = scalar_lea.vmem %s5, 256
  %v3932 = vld [vmem:[%s3931] sm:$0xff]
  %v3933 = vld [vmem:[%s3931 + $0x8] sm:$0xff]
  %v3934 = vld [vmem:[%s3931 + $0x10] sm:$0xff]
  %v3935 = vld [vmem:[%s3931 + $0x18] sm:$0xff]
  %v3936 = vld [vmem:[%s3931 + $0x20] sm:$0xff]
  %v3937 = vld [vmem:[%s3931 + $0x28] sm:$0xff]
  %v3938 = vld [vmem:[%s3931 + $0x30] sm:$0xff]
  %v3939 = vld [vmem:[%s3931 + $0x38] sm:$0xff]
  %v3940 = vld [vmem:[%s3931 + $0x40] sm:$0xff]
  %v3941 = vld [vmem:[%s3931 + $0x48] sm:$0xff]
  %v3942 = vld [vmem:[%s3931 + $0x50] sm:$0xff]
  %v3943 = vld [vmem:[%s3931 + $0x58] sm:$0xff]
  %v3944 = vld [vmem:[%s3931 + $0x60] sm:$0xff]
  %v3945 = vld [vmem:[%s3931 + $0x68] sm:$0xff]
  %v3946 = vld [vmem:[%s3931 + $0x70] sm:$0xff]
  %v3947 = vld [vmem:[%s3931 + $0x78] sm:$0xff]
  %v3949 = vsel %vm159, %v3893, 0
  %v3952 = vsel %vm159, %v3898, 0
  %v3955 = vsel %vm159, %v3903, 0
  %v3958 = vsel %vm159, %v3908, 0
  %v3961 = vsel %vm159, %v3913, 0
  %v3964 = vsel %vm159, %v3918, 0
  %v3967 = vsel %vm159, %v3923, 0
  %v3970 = vsel %vm159, %v3928, 0
  %3972 = vmatprep.subr.mxu0 0.0
  %3973 = vmatpush1.msra.mxu0 0.0
  %3974 = vmatprep.subr.mxu0 0.0
  %3975 = vmatpush1.msra.mxu0 0.0
  %3976 = vmatprep.subr.mxu0 0.0
  %3977 = vmatpush1.msra.mxu0 0.0
  %3978 = vmatprep.subr.mxu0 0.0
  %3979 = vmatpush1.msra.mxu0 0.0
  %3980 = vmatprep.subr.mxu0 0.0
  %3981 = vmatpush1.msra.mxu0 0.0
  %3982 = vmatprep.subr.mxu0 0.0
  %3983 = vmatpush1.msra.mxu0 0.0
  %3984 = vmatprep.subr.mxu0 0.0
  %3985 = vmatpush1.msra.mxu0 0.0
  %3986 = vmatprep.subr.mxu0 0.0
  %3987 = vmatpush1.msra.mxu0 0.0
  %3988 = vmatprep.subr.mxu0 %v3947
  %3989 = vmatpush1.msra.mxu0 %v3946
  %3990 = vmatprep.subr.mxu0 %v3945
  %3991 = vmatpush1.msra.mxu0 %v3944
  %3992 = vmatprep.subr.mxu0 %v3943
  %3993 = vmatpush1.msra.mxu0 %v3942
  %3994 = vmatprep.subr.mxu0 %v3941
  %3995 = vmatpush1.msra.mxu0 %v3940
  %3996 = vmatprep.subr.mxu0 %v3939
  %3997 = vmatpush1.msra.mxu0 %v3938
  %3998 = vmatprep.subr.mxu0 %v3937
  %3999 = vmatpush1.msra.mxu0 %v3936
  %4000 = vmatprep.subr.mxu0 %v3935
  %4001 = vmatpush1.msra.mxu0 %v3934
  %4002 = vmatprep.subr.mxu0 %v3933
  %4003 = vmatpush1.msra.mxu0 %v3932
  %4004 = vmatprep.subr.mxu0 0.0
  %4005 = vmatpush2.msra.mxu0 0.0
  %4006 = vmatprep.subr.mxu0 0.0
  %4007 = vmatpush2.msra.mxu0 0.0
  %4008 = vmatprep.subr.mxu0 0.0
  %4009 = vmatpush2.msra.mxu0 0.0
  %4010 = vmatprep.subr.mxu0 0.0
  %4011 = vmatpush2.msra.mxu0 0.0
  %4012 = vmatprep.subr.mxu0 0.0
  %4013 = vmatpush2.msra.mxu0 0.0
  %4014 = vmatprep.subr.mxu0 0.0
  %4015 = vmatpush2.msra.mxu0 0.0
  %4016 = vmatprep.subr.mxu0 0.0
  %4017 = vmatpush2.msra.mxu0 0.0
  %4018 = vmatprep.subr.mxu0 0.0
  %4019 = vmatpush2.msra.mxu0 0.0
  %4020 = vmatprep.subr.mxu0 0.0
  %4021 = vmatpush2.msra.mxu0 0.0
  %4022 = vmatprep.subr.mxu0 0.0
  %4023 = vmatpush2.msra.mxu0 0.0
  %4024 = vmatprep.subr.mxu0 0.0
  %4025 = vmatpush2.msra.mxu0 0.0
  %4026 = vmatprep.subr.mxu0 0.0
  %4027 = vmatpush2.msra.mxu0 0.0
  %4028 = vmatprep.subr.mxu0 0.0
  %4029 = vmatpush2.msra.mxu0 0.0
  %4030 = vmatprep.subr.mxu0 0.0
  %4031 = vmatpush2.msra.mxu0 0.0
  %4032 = vmatprep.subr.mxu0 0.0
  %4033 = vmatpush2.msra.mxu0 0.0
  %4034 = vmatprep.subr.mxu0 0.0
  %4035 = vmatpush2.msra.mxu0 0.0
  %4036 = vmatprep.mubr.f32.mxu0 0.0
  %4037 = vmatmul.mubr.f32.gmra.mxu0 %v3949
  %v4038 = vpop.f32.mrf.mxu0
  %v4039 = vadd.f32 0.0, %v4038
  %v4040 = vpop.f32.mrf.mxu0
  %v4041 = vadd.f32 0.0, %v4040
  %4042 = vmatprep.mubr.f32.mxu0 0.0
  %4043 = vmatmul.mubr.f32.gmra.mxu0 %v3952
  %v4044 = vpop.f32.mrf.mxu0
  %v4045 = vadd.f32 0.0, %v4044
  %v4046 = vpop.f32.mrf.mxu0
  %v4047 = vadd.f32 0.0, %v4046
  %4048 = vmatprep.mubr.f32.mxu0 0.0
  %4049 = vmatmul.mubr.f32.gmra.mxu0 %v3955
  %v4050 = vpop.f32.mrf.mxu0
  %v4051 = vadd.f32 0.0, %v4050
  %v4052 = vpop.f32.mrf.mxu0
  %v4053 = vadd.f32 0.0, %v4052
  %4054 = vmatprep.mubr.f32.mxu0 0.0
  %4055 = vmatmul.mubr.f32.gmra.mxu0 %v3958
  %v4056 = vpop.f32.mrf.mxu0
  %v4057 = vadd.f32 0.0, %v4056
  %v4058 = vpop.f32.mrf.mxu0
  %v4059 = vadd.f32 0.0, %v4058
  %4060 = vmatprep.mubr.f32.mxu0 0.0
  %4061 = vmatmul.mubr.f32.gmra.mxu0 %v3961
  %v4062 = vpop.f32.mrf.mxu0
  %v4063 = vadd.f32 0.0, %v4062
  %v4064 = vpop.f32.mrf.mxu0
  %v4065 = vadd.f32 0.0, %v4064
  %4066 = vmatprep.mubr.f32.mxu0 0.0
  %4067 = vmatmul.mubr.f32.gmra.mxu0 %v3964
  %v4068 = vpop.f32.mrf.mxu0
  %v4069 = vadd.f32 0.0, %v4068
  %v4070 = vpop.f32.mrf.mxu0
  %v4071 = vadd.f32 0.0, %v4070
  %4072 = vmatprep.mubr.f32.mxu0 0.0
  %4073 = vmatmul.mubr.f32.gmra.mxu0 %v3967
  %v4074 = vpop.f32.mrf.mxu0
  %v4075 = vadd.f32 0.0, %v4074
  %v4076 = vpop.f32.mrf.mxu0
  %v4077 = vadd.f32 0.0, %v4076
  %4078 = vmatprep.mubr.f32.mxu0 0.0
  %4079 = vmatmul.mubr.f32.gmra.mxu0 %v3970
  %v4080 = vpop.f32.mrf.mxu0
  %v4081 = vadd.f32 0.0, %v4080
  %v4082 = vpop.f32.mrf.mxu0
  %v4083 = vadd.f32 0.0, %v4082
  %4084 = vdwg.mxu0
  %v4085 = vadd.f32 %v3810, %v4039
  %v4086 = vadd.f32 %v3811, %v4041
  %v4087 = vadd.f32 %v3812, %v4045
  %v4088 = vadd.f32 %v3813, %v4047
  %v4089 = vadd.f32 %v3814, %v4051
  %v4090 = vadd.f32 %v3815, %v4053
  %v4091 = vadd.f32 %v3816, %v4057
  %v4092 = vadd.f32 %v3817, %v4059
  %v4093 = vadd.f32 %v3818, %v4063
  %v4094 = vadd.f32 %v3819, %v4065
  %v4095 = vadd.f32 %v3820, %v4069
  %v4096 = vadd.f32 %v3821, %v4071
  %v4097 = vadd.f32 %v3822, %v4075
  %v4098 = vadd.f32 %v3823, %v4077
  %v4099 = vadd.f32 %v3824, %v4081
  %v4100 = vadd.f32 %v3825, %v4083
  %v4101 = vadd.f32 %v3249, %v4085
  %v4102 = vadd.f32 %v3250, %v4086
  %v4103 = vadd.f32 %v3251, %v4087
  %v4104 = vadd.f32 %v3252, %v4088
  %v4105 = vadd.f32 %v3253, %v4089
  %v4106 = vadd.f32 %v3254, %v4090
  %v4107 = vadd.f32 %v3255, %v4091
  %v4108 = vadd.f32 %v3256, %v4092
  %v4109 = vadd.f32 %v3257, %v4093
  %v4110 = vadd.f32 %v3258, %v4094
  %v4111 = vadd.f32 %v3259, %v4095
  %v4112 = vadd.f32 %v3260, %v4096
  %v4113 = vadd.f32 %v3261, %v4097
  %v4114 = vadd.f32 %v3262, %v4098
  %v4115 = vadd.f32 %v3263, %v4099
  %v4116 = vadd.f32 %v3264, %v4100
  %vm4117 = vcmp.ge.f32.partialorder %v4101, 0.0
  %vm4118 = vcmp.ge.f32.partialorder %v4102, 0.0
  %vm4119 = vcmp.ge.f32.partialorder %v4103, 0.0
  %vm4120 = vcmp.ge.f32.partialorder %v4104, 0.0
  %vm4121 = vcmp.ge.f32.partialorder %v4105, 0.0
  %vm4122 = vcmp.ge.f32.partialorder %v4106, 0.0
  %vm4123 = vcmp.ge.f32.partialorder %v4107, 0.0
  %vm4124 = vcmp.ge.f32.partialorder %v4108, 0.0
  %vm4125 = vcmp.ge.f32.partialorder %v4109, 0.0
  %vm4126 = vcmp.ge.f32.partialorder %v4110, 0.0
  %vm4127 = vcmp.ge.f32.partialorder %v4111, 0.0
  %vm4128 = vcmp.ge.f32.partialorder %v4112, 0.0
  %vm4129 = vcmp.ge.f32.partialorder %v4113, 0.0
  %vm4130 = vcmp.ge.f32.partialorder %v4114, 0.0
  %vm4131 = vcmp.ge.f32.partialorder %v4115, 0.0
  %vm4132 = vcmp.ge.f32.partialorder %v4116, 0.0
  %v4133 = vmul.f32 %v4101, 0.22916667
  %v4134 = vmul.f32 %v4102, 0.22916667
  %v4135 = vmul.f32 %v4103, 0.22916667
  %v4136 = vmul.f32 %v4104, 0.22916667
  %v4137 = vmul.f32 %v4105, 0.22916667
  %v4138 = vmul.f32 %v4106, 0.22916667
  %v4139 = vmul.f32 %v4107, 0.22916667
  %v4140 = vmul.f32 %v4108, 0.22916667
  %v4141 = vmul.f32 %v4109, 0.22916667
  %v4142 = vmul.f32 %v4110, 0.22916667
  %v4143 = vmul.f32 %v4111, 0.22916667
  %v4144 = vmul.f32 %v4112, 0.22916667
  %v4145 = vmul.f32 %v4113, 0.22916667
  %v4146 = vmul.f32 %v4114, 0.22916667
  %v4147 = vmul.f32 %v4115, 0.22916667
  %v4148 = vmul.f32 %v4116, 0.22916667
  %v4149 = vsel %vm4117, %v4101, %v4133
  %v4150 = vsel %vm4118, %v4102, %v4134
  %v4151 = vsel %vm4119, %v4103, %v4135
  %v4152 = vsel %vm4120, %v4104, %v4136
  %v4153 = vsel %vm4121, %v4105, %v4137
  %v4154 = vsel %vm4122, %v4106, %v4138
  %v4155 = vsel %vm4123, %v4107, %v4139
  %v4156 = vsel %vm4124, %v4108, %v4140
  %v4157 = vsel %vm4125, %v4109, %v4141
  %v4158 = vsel %vm4126, %v4110, %v4142
  %v4159 = vsel %vm4127, %v4111, %v4143
  %v4160 = vsel %vm4128, %v4112, %v4144
  %v4161 = vsel %vm4129, %v4113, %v4145
  %v4162 = vsel %vm4130, %v4114, %v4146
  %v4163 = vsel %vm4131, %v4115, %v4147
  %v4164 = vsel %vm4132, %v4116, %v4148
  %4165 = vst [vmem:[%s13] sm:$0xff] %v4149
  %4166 = vst [vmem:[%s13 + $0x8] sm:$0xff] %v4150
  %4167 = vst [vmem:[%s13 + $0x10] sm:$0xff] %v4151
  %4168 = vst [vmem:[%s13 + $0x18] sm:$0xff] %v4152
  %4169 = vst [vmem:[%s13 + $0x20] sm:$0xff] %v4153
  %4170 = vst [vmem:[%s13 + $0x28] sm:$0xff] %v4154
  %4171 = vst [vmem:[%s13 + $0x30] sm:$0xff] %v4155
  %4172 = vst [vmem:[%s13 + $0x38] sm:$0xff] %v4156
  %4173 = vst [vmem:[%s13 + $0x40] sm:$0xff] %v4157
  %4174 = vst [vmem:[%s13 + $0x48] sm:$0xff] %v4158
  %4175 = vst [vmem:[%s13 + $0x50] sm:$0xff] %v4159
  %4176 = vst [vmem:[%s13 + $0x58] sm:$0xff] %v4160
  %4177 = vst [vmem:[%s13 + $0x60] sm:$0xff] %v4161
  %4178 = vst [vmem:[%s13 + $0x68] sm:$0xff] %v4162
  %4179 = vst [vmem:[%s13 + $0x70] sm:$0xff] %v4163
  %4180 = vst [vmem:[%s13 + $0x78] sm:$0xff] %v4164
  // Predicated region
  $region54: #{_lambda_.1} parent=0 // pred_check
    _
  $region55: #{_lambda_.1} parent=0 // pred_check_branch
    %4182 = sbr.rel (0) target = $region57
  $region56: #{_lambda_.1} parent=0 // pred_region
    _
  $region57: #{_lambda_.1} parent=0 // pred_fallthru
    _
  // Predicated region
  $region58: #{_lambda_.1} parent=0 // pred_check
    _
  $region59: #{_lambda_.1} parent=0 // pred_check_branch
    %4184 = sbr.rel (0) target = $region61
  $region60: #{_lambda_.1} parent=0 // pred_region
    _
  $region61: #{_lambda_.1} parent=0 // pred_fallthru
    _

</llo_original>
